<compile_context>
chip_gen: v5e
topology: v5e:2x2
jax: 0.10.0
libtpu: 0.0.40
codegen_flags: <defaults>
</compile_context>

<pallas_src>
import functools
import math

import jax
import jax.numpy as jnp
from jax.experimental import pallas as pl
from jax.experimental.pallas import tpu as pltpu

# ----------------------- model hyper-parameters (defaults of CNP) -------------
DIM_X = 1
DIM_Y = 1
DIM_HID = 128          # dim_hid
ENC_PRE_DEPTH = 4      # -> 4 linear layers (ReLU after first 3)
ENC_POST_DEPTH = 2     # -> 2 linear layers (ReLU after first)
DEC_DEPTH = 3          # -> fc + 1 hidden linear + output linear


# ------------------------------- Pallas kernel --------------------------------
def _cnp_kernel(cxy_ref, xT_ref, yT_ref, poolT_ref, erepT_ref,
                eW0T_ref, eb0_ref, eWhT_ref, ebh_ref,
                dWfceT_ref, dWfcxT_ref, dbfc_ref,
                dW1T_ref, db1_ref, dW2T_ref, db2_ref,
                ll_ref, *, fuse_hidden, dim_y, dx_is_one, approx_recip):
    f32 = jnp.float32
    cdt = eW0T_ref.dtype                      # MXU operand dtype (bf16 or f32)
    H = eW0T_ref.shape[0] // 2                # dim_hid
    nh = ebh_ref.shape[0]                     # number of HxH encoder layers (5)
    n_pre = nh - (ENC_POST_DEPTH)             # hidden pre layers (3)

    def hidden_layer(l, aT, relu):
        """One fused encoder layer in transposed orientation: W^T @ a + b."""
        a = aT.astype(cdt)
        if fuse_hidden:                       # [2H, 2H] block-diag (v6e/v7x)
            r = jnp.dot(eWhT_ref[l], a, preferred_element_type=f32)
        else:                                 # two separate HxH (v5e/v5p)
            r1 = jnp.dot(eWhT_ref[l, 0], a[:H], preferred_element_type=f32)
            r2 = jnp.dot(eWhT_ref[l, 1], a[H:], preferred_element_type=f32)
            r = jnp.concatenate([r1, r2], axis=0)
        r = r + ebh_ref[l]                    # bias is [2H, 1], broadcasts on lanes
        return jnp.maximum(r, 0.0) if relu else r

    # ---- fused encoders (enc1 | enc2 stacked on the sublane/feature axis) ----
    # activations are [2H, Bb*Nc]; points live on the lane axis
    h = jnp.dot(eW0T_ref[...], cxy_ref[0], preferred_element_type=f32) + eb0_ref[...]
    h = jnp.maximum(h, 0.0)
    for l in range(n_pre - 1):                # remaining pre layers with ReLU
        h = hidden_layer(l, h, relu=True)
    h = hidden_layer(n_pre - 1, h, relu=False)

    # mean-pool per batch element over its context set (MXU matmul) -> [2H, Bb]
    m = jnp.dot(h.astype(cdt), poolT_ref[...], preferred_element_type=f32)

    # fused post MLP (ReLU after all but the last layer)
    for l in range(n_pre, nh - 1):
        m = hidden_layer(l, m, relu=True)
    enc = hidden_layer(nh - 1, m, relu=False)                    # [2H, Bb]

    # ---- decoder (transposed), fc layer algebraically split ------------------
    enc_part = jnp.dot(dWfceT_ref[...], enc.astype(cdt),
                       preferred_element_type=f32)               # [H, Bb]
    enc_bn = jnp.dot(enc_part.astype(cdt), erepT_ref[...],
                     preferred_element_type=f32)                 # [H, Bb*N]
    x = xT_ref[0]                                                # [dx, Bb*N]
    if dx_is_one:
        # K=1 matmul -> VPU broadcast multiply (outer product)
        x_part = dWfcxT_ref[...].astype(f32) * x.astype(f32)     # [H,1]*[1,M]
    else:
        x_part = jnp.dot(dWfcxT_ref[...], x, preferred_element_type=f32)
    hid = jnp.maximum(enc_bn + x_part + dbfc_ref[...], 0.0)
    hid = jnp.maximum(jnp.dot(dW1T_ref[...], hid.astype(cdt),
                              preferred_element_type=f32) + db1_ref[...], 0.0)
    out = (jnp.dot(dW2T_ref[...], hid.astype(cdt),
                   preferred_element_type=f32) + db2_ref[...])   # [2*dy, Bb*N]

    # ---- Normal(mu, sigma).log_prob(y).sum(-1); already lane-dense ------------
    mu = out[:dim_y]                                             # [dy, Bb*N]
    sigma = 0.1 + 0.9 * jax.nn.softplus(out[dim_y:])             # f32
    inv_sigma = pl.reciprocal(sigma, approx=approx_recip)        # EUP when approx
    z = (yT_ref[0] - mu) * inv_sigma
    lp = -0.5 * jnp.log(2.0 * jnp.pi) - jnp.log(sigma) - 0.5 * z * z
    ll_ref[0] = jnp.sum(lp, axis=0, keepdims=True)               # [1, Bb*N]


# ------------------------------- host helpers ----------------------------------
def _cdiv(a, b):
    return -(-a // b)


def _round_up(a, m):
    return _cdiv(a, m) * m


def _choose_block(B, Nc, N, batch_block):
    """Pick the per-step batch block Bb (and the padded batch size)."""
    lane_req = 128 // math.gcd(N, 128)        # Bb multiple of this => Bb*N % 128 == 0
    if batch_block is not None:
        Bb = int(batch_block)
    else:
        # fill the MXU: a few hundred points per grid step, lane-dense output
        target = max(_cdiv(512, N), _cdiv(256, Nc), lane_req, 1)
        Bb = _round_up(target, lane_req)
        Bb = min(Bb, 256)                     # keep pool/erep matrices small
        Bb = min(Bb, _round_up(B, lane_req))  # don't pad far beyond the batch
        # prefer >= 2 grid steps when the batch allows it (v7x megacore)
        if _round_up(B, Bb) // Bb == 1 and Bb > lane_req:
            half = _round_up(Bb // 2, lane_req)
            if half < Bb and _round_up(B, half) // half >= 2:
                Bb = half
    B_pad = _round_up(B, Bb)
    return Bb, B_pad


def _default_fuse_hidden():
    """Fuse the twin encoders into 2Hx2H block-diag weights only on 256-wide MXUs."""
    try:
        kind = jax.devices()[0].device_kind.lower()
    except Exception:
        return True
    return "v5" not in kind


# ------------------------------- host wrapper ----------------------------------
def cnp_log_likelihood(xc, yc, x, y, params, *, batch_block=None,
                       compute_dtype=jnp.bfloat16, fuse_hidden=None):
    """Returns ll[B, N] = Normal(mu, sigma).log_prob(y).sum(-1), computed in Pallas."""
    f32 = jnp.float32
    B, Nc, dx = xc.shape
    _, N, dy = y.shape
    dxy = dx + yc.shape[-1]
    H = DIM_HID
    cdt = compute_dtype
    if fuse_hidden is None:
        fuse_hidden = _default_fuse_hidden()

    Bb, B_pad = _choose_block(B, Nc, N, batch_block)
    nb = B_pad // Bb

    # ---- pad the batch instead of shrinking the block (padding is sliced off) -
    if B_pad != B:
        def bpad(a):
            return jnp.pad(a, [(0, B_pad - B)] + [(0, 0)] * (a.ndim - 1))
        xc, yc, x, y = bpad(xc), bpad(yc), bpad(x), bpad(y)

    # ---- layout plumbing: transposed orientation, points on the lane axis -----
    cxy_T = (jnp.concatenate([xc, yc], axis=-1).astype(cdt)
             .reshape(nb, Bb, Nc, dxy).transpose(0, 3, 1, 2)
             .reshape(nb, dxy, Bb * Nc))
    x_T = (x.astype(cdt).reshape(nb, Bb, N, dx)
           .transpose(0, 3, 1, 2).reshape(nb, dx, Bb * N))
    y_T = (y.astype(f32).reshape(nb, Bb, N, dy)
           .transpose(0, 3, 1, 2).reshape(nb, dy, Bb * N))

    # per-block constants: segment-mean matrix and one-hot row-expansion matrix
    # (built in the compute dtype so those matmuls are bf16 MXU passes)
    pool_T = ((jnp.arange(Bb * Nc)[:, None] // Nc == jnp.arange(Bb)[None, :])
              .astype(f32) / Nc).astype(cdt)                    # [Bb*Nc, Bb]
    erep_T = (jnp.arange(Bb)[:, None]
              == (jnp.arange(Bb * N)[None, :] // N)).astype(cdt)  # [Bb, Bb*N]

    # ---- fuse the two encoders (transposed weights) ---------------------------
    eW0, eb0, eWh, ebh = params["eW0"], params["eb0"], params["eWh"], params["ebh"]
    nh = eWh.shape[1]
    W0T = jnp.concatenate([eW0[0].T, eW0[1].T], axis=0).astype(cdt)      # [2H, dxy]
    b0 = jnp.concatenate([eb0[0], eb0[1]], axis=-1).astype(f32)[:, None]  # [2H, 1]
    if fuse_hidden:
        WhT = jnp.zeros((nh, 2 * H, 2 * H), f32)
        WhT = (WhT.at[:, :H, :H].set(jnp.swapaxes(eWh[0], -1, -2))
                  .at[:, H:, H:].set(jnp.swapaxes(eWh[1], -1, -2))).astype(cdt)
    else:
        WhT = jnp.swapaxes(jnp.stack([eWh[0], eWh[1]], axis=1),
                           -1, -2).astype(cdt)                            # [nh, 2, H, H]
    bh = jnp.concatenate([ebh[0], ebh[1]], axis=-1).astype(f32)[:, :, None]  # [nh, 2H, 1]

    # ---- split + transpose the decoder weights --------------------------------
    WfceT = params["dWfc"][:2 * H].T.astype(cdt)              # [H, 2H]
    WfcxT = params["dWfc"][2 * H:].T.astype(cdt)              # [H, dx]
    bfc = params["dbfc"].astype(f32)[:, None]                 # [H, 1]
    W1T = params["dW1"].T.astype(cdt)                         # [H, H]
    b1 = params["db1"].astype(f32)[:, None]
    W2T = params["dW2"].T.astype(cdt)                         # [2*dy, H]
    b2 = params["db2"].astype(f32)[:, None]                   # [2*dy, 1]

    def data_spec(arr):
        return pl.BlockSpec((1,) + arr.shape[1:], lambda b: (b, 0, 0))

    def const_spec(arr):
        nd = arr.ndim
        return pl.BlockSpec(arr.shape, lambda b, _nd=nd: (0,) * _nd)

    operands = (cxy_T, x_T, y_T, pool_T, erep_T, W0T, b0, WhT, bh,
                WfceT, WfcxT, bfc, W1T, b1, W2T, b2)
    in_specs = [data_spec(cxy_T), data_spec(x_T), data_spec(y_T)] + \
               [const_spec(a) for a in operands[3:]]

    kernel = functools.partial(_cnp_kernel,
                               fuse_hidden=fuse_hidden,
                               dim_y=dy,
                               dx_is_one=(dx == 1),
                               approx_recip=(cdt != jnp.float32))

    ll = pl.pallas_call(
        kernel,
        out_shape=jax.ShapeDtypeStruct((nb, 1, Bb * N), f32),
        grid_spec=pltpu.PrefetchScalarGridSpec(
            num_scalar_prefetch=0,
            grid=(nb,),
            in_specs=in_specs,
            out_specs=pl.BlockSpec((1, 1, Bb * N), lambda b: (b, 0, 0)),
        ),
        compiler_params=pltpu.CompilerParams(
            dimension_semantics=("parallel",)),
    )(*operands)
    return ll.reshape(B_pad, N)[:B]                            # [B, N]


def cnp_forward(batch, params, training=False, reduce_ll=True, **kwargs):
    """Mirrors CNP.forward (eval mode by default)."""
    ll = cnp_log_likelihood(batch["xc"], batch["yc"], batch["x"], batch["y"],
                            params, **kwargs)
    outs = {}
    if training:
        outs["loss"] = -ll.mean()
    else:
        num_ctx = batch["xc"].shape[-2]
        if reduce_ll:
            outs["ctx_loss"] = ll[..., :num_ctx].mean()
            outs["tar_loss"] = ll[..., num_ctx:].mean()
        else:
            outs["ctx_loss"] = ll[..., :num_ctx]
            outs["tar_loss"] = ll[..., num_ctx:]
    return outs, ll


# --------------------------- pure-JAX reference -------------------------------
def _ref_log_likelihood(xc, yc, x, y, p):
    def encoder(e):
        h = jnp.concatenate([xc, yc], -1)
        h = jax.nn.relu(h @ p["eW0"][e] + p["eb0"][e])
        for l in range(2):
            h = jax.nn.relu(h @ p["eWh"][e, l] + p["ebh"][e, l])
        h = h @ p["eWh"][e, 2] + p["ebh"][e, 2]
        m = h.mean(-2)
        m = jax.nn.relu(m @ p["eWh"][e, 3] + p["ebh"][e, 3])
        return m @ p["eWh"][e, 4] + p["ebh"][e, 4]

    enc = jnp.concatenate([encoder(0), encoder(1)], -1)             # [B, 2H]
    N = x.shape[-2]
    enc_n = jnp.broadcast_to(enc[:, None, :], (enc.shape[0], N, enc.shape[-1]))
    packed = jnp.concatenate([enc_n, x], -1)
    hid = jax.nn.relu(packed @ p["dWfc"] + p["dbfc"])
    hid = jax.nn.relu(hid @ p["dW1"] + p["db1"])
    out = hid @ p["dW2"] + p["db2"]
    mu, sraw = out[..., :DIM_Y], out[..., DIM_Y:]
    sigma = 0.1 + 0.9 * jax.nn.softplus(sraw)
    lp = -0.5 * jnp.log(2.0 * jnp.pi) - jnp.log(sigma) - 0.5 * jnp.square((y - mu) / sigma)
    return lp.sum(-1)


# ------------------------------ parameter init --------------------------------
def init_params(key):
    H, dxy, dx = DIM_HID, DIM_X + DIM_Y, DIM_X
    ks = jax.random.split(key, 14)
    scale = lambda fan_in: 1.0 / jnp.sqrt(jnp.float32(fan_in))
    return {
        "eW0": jax.random.normal(ks[0], (2, dxy, H), jnp.float32) * scale(dxy),
        "eb0": jax.random.normal(ks[1], (2, H), jnp.float32) * 0.01,
        "eWh": jax.random.normal(ks[2], (2, 5, H, H), jnp.float32) * scale(H),
        "ebh": jax.random.normal(ks[3], (2, 5, H), jnp.float32) * 0.01,
        "dWfc": jax.random.normal(ks[4], (2 * H + dx, H), jnp.float32) * scale(2 * H + dx),
        "dbfc": jax.random.normal(ks[5], (H,), jnp.float32) * 0.01,
        "dW1": jax.random.normal(ks[6], (H, H), jnp.float32) * scale(H),
        "db1": jax.random.normal(ks[7], (H,), jnp.float32) * 0.01,
        "dW2": jax.random.normal(ks[8], (H, 2 * DIM_Y), jnp.float32) * scale(H),
        "db2": jax.random.normal(ks[9], (2 * DIM_Y,), jnp.float32) * 0.01,
    }


if __name__ == "__main__":
    key = jax.random.PRNGKey(0)
    kp, kx, ky, kxt, kyt = jax.random.split(key, 5)

    B, Nc, Nt = 8, 4, 4
    N = Nc + Nt

    params = init_params(kp)

    xc = jax.random.normal(kx, (B, Nc, DIM_X), jnp.float32)
    yc = jax.random.normal(ky, (B, Nc, DIM_Y), jnp.float32)
    xt = jax.random.normal(kxt, (B, Nt, DIM_X), jnp.float32)
    yt = jax.random.normal(kyt, (B, Nt, DIM_Y), jnp.float32)
    # batch.x / batch.y contain context points followed by target points
    batch = {"xc": xc, "yc": yc,
             "x": jnp.concatenate([xc, xt], axis=1),
             "y": jnp.concatenate([yc, yt], axis=1)}

    ll_ref = _ref_log_likelihood(batch["xc"], batch["yc"], batch["x"], batch["y"], params)

    # f32 MXU operands + exact reciprocal: must match the pure-JAX reference tightly.
    ll_f32 = cnp_log_likelihood(batch["xc"], batch["yc"], batch["x"], batch["y"],
                                params, compute_dtype=jnp.float32)
    jax.block_until_ready(ll_f32)
    assert ll_f32.shape == ll_ref.shape, (ll_f32.shape, ll_ref.shape)
    assert jnp.allclose(ll_f32, ll_ref, rtol=2e-4, atol=2e-4), (ll_f32, ll_ref)

    # Default path: bf16 MXU operands with f32 accumulation (looser tolerance).
    outs, ll = cnp_forward(batch, params, training=False, reduce_ll=True)
    jax.block_until_ready(ll)
    jax.block_until_ready(outs["ctx_loss"])
    jax.block_until_ready(outs["tar_loss"])
    assert jnp.all(jnp.isfinite(ll))
    assert jnp.allclose(ll, ll_ref, rtol=3e-2, atol=5e-2), (ll, ll_ref)

    print("KERNEL_OK")
</pallas_src>

<mosaic_0001>
module attributes {stable_mosaic.version = 11 : i64} {
  func.func @_cnp_kernel(%arg0: i32, %arg1: memref<1x2x64xf32, #tpu.memory_space<vmem>>, %arg2: memref<1x1x128xf32, #tpu.memory_space<vmem>>, %arg3: memref<1x1x128xf32, #tpu.memory_space<vmem>>, %arg4: memref<64x16xf32, #tpu.memory_space<vmem>>, %arg5: memref<16x128xf32, #tpu.memory_space<vmem>>, %arg6: memref<256x2xf32, #tpu.memory_space<vmem>>, %arg7: memref<256x1xf32, #tpu.memory_space<vmem>>, %arg8: memref<5x256x256xf32, #tpu.memory_space<vmem>>, %arg9: memref<5x256x1xf32, #tpu.memory_space<vmem>>, %arg10: memref<128x256xf32, #tpu.memory_space<vmem>>, %arg11: memref<128x1xf32, #tpu.memory_space<vmem>>, %arg12: memref<128x1xf32, #tpu.memory_space<vmem>>, %arg13: memref<128x128xf32, #tpu.memory_space<vmem>>, %arg14: memref<128x1xf32, #tpu.memory_space<vmem>>, %arg15: memref<2x128xf32, #tpu.memory_space<vmem>>, %arg16: memref<2x1xf32, #tpu.memory_space<vmem>>, %arg17: memref<1x1x128xf32, #tpu.memory_space<vmem>>) attributes {dimension_semantics = [#tpu.dimension_semantics<parallel>], iteration_bounds = array<i64: 1>, scalar_prefetch = 0 : i64, scratch_operands = 0 : i64, tpu.core_type = #tpu.core_type<tc>, window_params = [{transform_indices = @transform_0, window_bounds = array<i64: 1, 2, 64>}, {transform_indices = @transform_1, window_bounds = array<i64: 1, 1, 128>}, {transform_indices = @transform_2, window_bounds = array<i64: 1, 1, 128>}, {pipeline_mode = #tpu.pipeline_mode<synchronous>, transform_indices = @transform_3, window_bounds = array<i64: 64, 16>}, {pipeline_mode = #tpu.pipeline_mode<synchronous>, transform_indices = @transform_4, window_bounds = array<i64: 16, 128>}, {pipeline_mode = #tpu.pipeline_mode<synchronous>, transform_indices = @transform_5, window_bounds = array<i64: 256, 2>}, {pipeline_mode = #tpu.pipeline_mode<synchronous>, transform_indices = @transform_6, window_bounds = array<i64: 256, 1>}, {pipeline_mode = #tpu.pipeline_mode<synchronous>, transform_indices = @transform_7, window_bounds = array<i64: 5, 256, 256>}, {pipeline_mode = #tpu.pipeline_mode<synchronous>, transform_indices = @transform_8, window_bounds = array<i64: 5, 256, 1>}, {pipeline_mode = #tpu.pipeline_mode<synchronous>, transform_indices = @transform_9, window_bounds = array<i64: 128, 256>}, {pipeline_mode = #tpu.pipeline_mode<synchronous>, transform_indices = @transform_10, window_bounds = array<i64: 128, 1>}, {pipeline_mode = #tpu.pipeline_mode<synchronous>, transform_indices = @transform_11, window_bounds = array<i64: 128, 1>}, {pipeline_mode = #tpu.pipeline_mode<synchronous>, transform_indices = @transform_12, window_bounds = array<i64: 128, 128>}, {pipeline_mode = #tpu.pipeline_mode<synchronous>, transform_indices = @transform_13, window_bounds = array<i64: 128, 1>}, {pipeline_mode = #tpu.pipeline_mode<synchronous>, transform_indices = @transform_14, window_bounds = array<i64: 2, 128>}, {pipeline_mode = #tpu.pipeline_mode<synchronous>, transform_indices = @transform_15, window_bounds = array<i64: 2, 1>}, {transform_indices = @transform_16, window_bounds = array<i64: 1, 1, 128>}]} {
    %c0 = arith.constant 0 : index
    %c0_0 = arith.constant 0 : index
    %0 = vector.load %arg6[%c0, %c0_0] : memref<256x2xf32, #tpu.memory_space<vmem>>, vector<256x2xf32>
    %c0_1 = arith.constant 0 : index
    %c0_2 = arith.constant 0 : index
    %c0_3 = arith.constant 0 : index
    %1 = vector.load %arg1[%c0_1, %c0_2, %c0_3] : memref<1x2x64xf32, #tpu.memory_space<vmem>>, vector<1x2x64xf32>
    %2 = vector.shape_cast %1 : vector<1x2x64xf32> to vector<2x64xf32>
    %cst = arith.constant dense<0.000000e+00> : vector<256x64xf32>
    %3 = tpu.matmul %0, %2, %cst {dimension_numbers = #tpu.dot_dimension_numbers<[1], [0], [0], [1], [0, 0, 1, 1], [], []>} : vector<256x2xf32>, vector<2x64xf32>, vector<256x64xf32> -> vector<256x64xf32>
    %c0_4 = arith.constant 0 : index
    %c0_5 = arith.constant 0 : index
    %4 = vector.load %arg7[%c0_4, %c0_5] : memref<256x1xf32, #tpu.memory_space<vmem>>, vector<256x1xf32>
    %5 = vector.broadcast %4 : vector<256x1xf32> to vector<256x64xf32>
    %6 = arith.addf %3, %5 : vector<256x64xf32>
    %cst_6 = arith.constant 0.000000e+00 : f32
    %7 = vector.broadcast %cst_6 : f32 to vector<256x64xf32>
    %8 = arith.maximumf %6, %7 : vector<256x64xf32>
    %c0_7 = arith.constant 0 : index
    %c0_8 = arith.constant 0 : index
    %c0_9 = arith.constant 0 : index
    %9 = vector.load %arg8[%c0_7, %c0_8, %c0_9] : memref<5x256x256xf32, #tpu.memory_space<vmem>>, vector<1x256x256xf32>
    %10 = vector.shape_cast %9 : vector<1x256x256xf32> to vector<256x256xf32>
    %cst_10 = arith.constant dense<0.000000e+00> : vector<256x64xf32>
    %11 = tpu.matmul %10, %8, %cst_10 {dimension_numbers = #tpu.dot_dimension_numbers<[1], [0], [0], [1], [0, 0, 1, 1], [], []>} : vector<256x256xf32>, vector<256x64xf32>, vector<256x64xf32> -> vector<256x64xf32>
    %c0_11 = arith.constant 0 : index
    %c0_12 = arith.constant 0 : index
    %c0_13 = arith.constant 0 : index
    %12 = vector.load %arg9[%c0_11, %c0_12, %c0_13] : memref<5x256x1xf32, #tpu.memory_space<vmem>>, vector<1x256x1xf32>
    %13 = vector.shape_cast %12 : vector<1x256x1xf32> to vector<256x1xf32>
    %14 = vector.broadcast %13 : vector<256x1xf32> to vector<256x64xf32>
    %15 = arith.addf %11, %14 : vector<256x64xf32>
    %cst_14 = arith.constant 0.000000e+00 : f32
    %16 = vector.broadcast %cst_14 : f32 to vector<256x64xf32>
    %17 = arith.maximumf %15, %16 : vector<256x64xf32>
    %c1 = arith.constant 1 : index
    %c0_15 = arith.constant 0 : index
    %c0_16 = arith.constant 0 : index
    %18 = vector.load %arg8[%c1, %c0_15, %c0_16] : memref<5x256x256xf32, #tpu.memory_space<vmem>>, vector<1x256x256xf32>
    %19 = vector.shape_cast %18 : vector<1x256x256xf32> to vector<256x256xf32>
    %cst_17 = arith.constant dense<0.000000e+00> : vector<256x64xf32>
    %20 = tpu.matmul %19, %17, %cst_17 {dimension_numbers = #tpu.dot_dimension_numbers<[1], [0], [0], [1], [0, 0, 1, 1], [], []>} : vector<256x256xf32>, vector<256x64xf32>, vector<256x64xf32> -> vector<256x64xf32>
    %c1_18 = arith.constant 1 : index
    %c0_19 = arith.constant 0 : index
    %c0_20 = arith.constant 0 : index
    %21 = vector.load %arg9[%c1_18, %c0_19, %c0_20] : memref<5x256x1xf32, #tpu.memory_space<vmem>>, vector<1x256x1xf32>
    %22 = vector.shape_cast %21 : vector<1x256x1xf32> to vector<256x1xf32>
    %23 = vector.broadcast %22 : vector<256x1xf32> to vector<256x64xf32>
    %24 = arith.addf %20, %23 : vector<256x64xf32>
    %cst_21 = arith.constant 0.000000e+00 : f32
    %25 = vector.broadcast %cst_21 : f32 to vector<256x64xf32>
    %26 = arith.maximumf %24, %25 : vector<256x64xf32>
    %c2 = arith.constant 2 : index
    %c0_22 = arith.constant 0 : index
    %c0_23 = arith.constant 0 : index
    %27 = vector.load %arg8[%c2, %c0_22, %c0_23] : memref<5x256x256xf32, #tpu.memory_space<vmem>>, vector<1x256x256xf32>
    %28 = vector.shape_cast %27 : vector<1x256x256xf32> to vector<256x256xf32>
    %cst_24 = arith.constant dense<0.000000e+00> : vector<256x64xf32>
    %29 = tpu.matmul %28, %26, %cst_24 {dimension_numbers = #tpu.dot_dimension_numbers<[1], [0], [0], [1], [0, 0, 1, 1], [], []>} : vector<256x256xf32>, vector<256x64xf32>, vector<256x64xf32> -> vector<256x64xf32>
    %c2_25 = arith.constant 2 : index
    %c0_26 = arith.constant 0 : index
    %c0_27 = arith.constant 0 : index
    %30 = vector.load %arg9[%c2_25, %c0_26, %c0_27] : memref<5x256x1xf32, #tpu.memory_space<vmem>>, vector<1x256x1xf32>
    %31 = vector.shape_cast %30 : vector<1x256x1xf32> to vector<256x1xf32>
    %32 = vector.broadcast %31 : vector<256x1xf32> to vector<256x64xf32>
    %33 = arith.addf %29, %32 : vector<256x64xf32>
    %c0_28 = arith.constant 0 : index
    %c0_29 = arith.constant 0 : index
    %34 = vector.load %arg4[%c0_28, %c0_29] : memref<64x16xf32, #tpu.memory_space<vmem>>, vector<64x16xf32>
    %cst_30 = arith.constant dense<0.000000e+00> : vector<256x16xf32>
    %35 = tpu.matmul %33, %34, %cst_30 {dimension_numbers = #tpu.dot_dimension_numbers<[1], [0], [0], [1], [0, 0, 1, 1], [], []>} : vector<256x64xf32>, vector<64x16xf32>, vector<256x16xf32> -> vector<256x16xf32>
    %c3 = arith.constant 3 : index
    %c0_31 = arith.constant 0 : index
    %c0_32 = arith.constant 0 : index
    %36 = vector.load %arg8[%c3, %c0_31, %c0_32] : memref<5x256x256xf32, #tpu.memory_space<vmem>>, vector<1x256x256xf32>
    %37 = vector.shape_cast %36 : vector<1x256x256xf32> to vector<256x256xf32>
    %cst_33 = arith.constant dense<0.000000e+00> : vector<256x16xf32>
    %38 = tpu.matmul %37, %35, %cst_33 {dimension_numbers = #tpu.dot_dimension_numbers<[1], [0], [0], [1], [0, 0, 1, 1], [], []>} : vector<256x256xf32>, vector<256x16xf32>, vector<256x16xf32> -> vector<256x16xf32>
    %c3_34 = arith.constant 3 : index
    %c0_35 = arith.constant 0 : index
    %c0_36 = arith.constant 0 : index
    %39 = vector.load %arg9[%c3_34, %c0_35, %c0_36] : memref<5x256x1xf32, #tpu.memory_space<vmem>>, vector<1x256x1xf32>
    %40 = vector.shape_cast %39 : vector<1x256x1xf32> to vector<256x1xf32>
    %41 = vector.broadcast %40 : vector<256x1xf32> to vector<256x16xf32>
    %42 = arith.addf %38, %41 : vector<256x16xf32>
    %cst_37 = arith.constant 0.000000e+00 : f32
    %43 = vector.broadcast %cst_37 : f32 to vector<256x16xf32>
    %44 = arith.maximumf %42, %43 : vector<256x16xf32>
    %c4 = arith.constant 4 : index
    %c0_38 = arith.constant 0 : index
    %c0_39 = arith.constant 0 : index
    %45 = vector.load %arg8[%c4, %c0_38, %c0_39] : memref<5x256x256xf32, #tpu.memory_space<vmem>>, vector<1x256x256xf32>
    %46 = vector.shape_cast %45 : vector<1x256x256xf32> to vector<256x256xf32>
    %cst_40 = arith.constant dense<0.000000e+00> : vector<256x16xf32>
    %47 = tpu.matmul %46, %44, %cst_40 {dimension_numbers = #tpu.dot_dimension_numbers<[1], [0], [0], [1], [0, 0, 1, 1], [], []>} : vector<256x256xf32>, vector<256x16xf32>, vector<256x16xf32> -> vector<256x16xf32>
    %c4_41 = arith.constant 4 : index
    %c0_42 = arith.constant 0 : index
    %c0_43 = arith.constant 0 : index
    %48 = vector.load %arg9[%c4_41, %c0_42, %c0_43] : memref<5x256x1xf32, #tpu.memory_space<vmem>>, vector<1x256x1xf32>
    %49 = vector.shape_cast %48 : vector<1x256x1xf32> to vector<256x1xf32>
    %50 = vector.broadcast %49 : vector<256x1xf32> to vector<256x16xf32>
    %51 = arith.addf %47, %50 : vector<256x16xf32>
    %c0_44 = arith.constant 0 : index
    %c0_45 = arith.constant 0 : index
    %52 = vector.load %arg10[%c0_44, %c0_45] : memref<128x256xf32, #tpu.memory_space<vmem>>, vector<128x256xf32>
    %cst_46 = arith.constant dense<0.000000e+00> : vector<128x16xf32>
    %53 = tpu.matmul %52, %51, %cst_46 {dimension_numbers = #tpu.dot_dimension_numbers<[1], [0], [0], [1], [0, 0, 1, 1], [], []>} : vector<128x256xf32>, vector<256x16xf32>, vector<128x16xf32> -> vector<128x16xf32>
    %c0_47 = arith.constant 0 : index
    %c0_48 = arith.constant 0 : index
    %54 = vector.load %arg5[%c0_47, %c0_48] : memref<16x128xf32, #tpu.memory_space<vmem>>, vector<16x128xf32>
    %cst_49 = arith.constant dense<0.000000e+00> : vector<128x128xf32>
    %55 = tpu.matmul %53, %54, %cst_49 {dimension_numbers = #tpu.dot_dimension_numbers<[1], [0], [0], [1], [0, 0, 1, 1], [], []>} : vector<128x16xf32>, vector<16x128xf32>, vector<128x128xf32> -> vector<128x128xf32>
    %c0_50 = arith.constant 0 : index
    %c0_51 = arith.constant 0 : index
    %c0_52 = arith.constant 0 : index
    %56 = vector.load %arg2[%c0_50, %c0_51, %c0_52] : memref<1x1x128xf32, #tpu.memory_space<vmem>>, vector<1x1x128xf32>
    %57 = vector.shape_cast %56 : vector<1x1x128xf32> to vector<1x128xf32>
    %c0_53 = arith.constant 0 : index
    %c0_54 = arith.constant 0 : index
    %58 = vector.load %arg11[%c0_53, %c0_54] : memref<128x1xf32, #tpu.memory_space<vmem>>, vector<128x1xf32>
    %59 = vector.broadcast %58 : vector<128x1xf32> to vector<128x128xf32>
    %60 = vector.broadcast %57 : vector<1x128xf32> to vector<128x128xf32>
    %61 = arith.mulf %59, %60 : vector<128x128xf32>
    %62 = arith.addf %55, %61 : vector<128x128xf32>
    %c0_55 = arith.constant 0 : index
    %c0_56 = arith.constant 0 : index
    %63 = vector.load %arg12[%c0_55, %c0_56] : memref<128x1xf32, #tpu.memory_space<vmem>>, vector<128x1xf32>
    %64 = vector.broadcast %63 : vector<128x1xf32> to vector<128x128xf32>
    %65 = arith.addf %62, %64 : vector<128x128xf32>
    %cst_57 = arith.constant 0.000000e+00 : f32
    %66 = vector.broadcast %cst_57 : f32 to vector<128x128xf32>
    %67 = arith.maximumf %65, %66 : vector<128x128xf32>
    %c0_58 = arith.constant 0 : index
    %c0_59 = arith.constant 0 : index
    %68 = vector.load %arg13[%c0_58, %c0_59] : memref<128x128xf32, #tpu.memory_space<vmem>>, vector<128x128xf32>
    %cst_60 = arith.constant dense<0.000000e+00> : vector<128x128xf32>
    %69 = tpu.matmul %68, %67, %cst_60 {dimension_numbers = #tpu.dot_dimension_numbers<[1], [0], [0], [1], [0, 0, 1, 1], [], []>} : vector<128x128xf32>, vector<128x128xf32>, vector<128x128xf32> -> vector<128x128xf32>
    %c0_61 = arith.constant 0 : index
    %c0_62 = arith.constant 0 : index
    %70 = vector.load %arg14[%c0_61, %c0_62] : memref<128x1xf32, #tpu.memory_space<vmem>>, vector<128x1xf32>
    %71 = vector.broadcast %70 : vector<128x1xf32> to vector<128x128xf32>
    %72 = arith.addf %69, %71 : vector<128x128xf32>
    %cst_63 = arith.constant 0.000000e+00 : f32
    %73 = vector.broadcast %cst_63 : f32 to vector<128x128xf32>
    %74 = arith.maximumf %72, %73 : vector<128x128xf32>
    %c0_64 = arith.constant 0 : index
    %c0_65 = arith.constant 0 : index
    %75 = vector.load %arg15[%c0_64, %c0_65] : memref<2x128xf32, #tpu.memory_space<vmem>>, vector<2x128xf32>
    %cst_66 = arith.constant dense<0.000000e+00> : vector<2x128xf32>
    %76 = tpu.matmul %75, %74, %cst_66 {dimension_numbers = #tpu.dot_dimension_numbers<[1], [0], [0], [1], [0, 0, 1, 1], [], []>} : vector<2x128xf32>, vector<128x128xf32>, vector<2x128xf32> -> vector<2x128xf32>
    %c0_67 = arith.constant 0 : index
    %c0_68 = arith.constant 0 : index
    %77 = vector.load %arg16[%c0_67, %c0_68] : memref<2x1xf32, #tpu.memory_space<vmem>>, vector<2x1xf32>
    %78 = vector.broadcast %77 : vector<2x1xf32> to vector<2x128xf32>
    %79 = arith.addf %76, %78 : vector<2x128xf32>
    %80 = vector.extract_strided_slice %79 {offsets = [0, 0], sizes = [1, 128], strides = [1, 1]} : vector<2x128xf32> to vector<1x128xf32>
    %81 = vector.extract_strided_slice %79 {offsets = [1, 0], sizes = [1, 128], strides = [1, 1]} : vector<2x128xf32> to vector<1x128xf32>
    %cst_69 = arith.constant 0.000000e+00 : f32
    %82 = vector.broadcast %cst_69 : f32 to vector<1x128xf32>
    %83 = arith.maximumf %81, %82 : vector<1x128xf32>
    %84 = vector.broadcast %cst_69 : f32 to vector<1x128xf32>
    %85 = arith.subf %81, %84 : vector<1x128xf32>
    %86 = arith.cmpf one, %85, %85 : vector<1x128xf32>
    %87 = vector.broadcast %cst_69 : f32 to vector<1x128xf32>
    %88 = arith.addf %81, %87 : vector<1x128xf32>
    %89 = math.absf %85 : vector<1x128xf32>
    %cst_70 = arith.constant 0.000000e+00 : f32
    %90 = vector.broadcast %cst_70 : f32 to vector<1x128xf32>
    %91 = arith.subf %90, %89 : vector<1x128xf32>
    %92 = math.exp %91 : vector<1x128xf32>
    %93 = math.log1p %92 : vector<1x128xf32>
    %94 = arith.addf %83, %93 : vector<1x128xf32>
    %95 = arith.select %86, %88, %94 : vector<1x128xi1>, vector<1x128xf32>
    %cst_71 = arith.constant 0.899999976 : f32
    %96 = vector.broadcast %cst_71 : f32 to vector<1x128xf32>
    %97 = arith.mulf %96, %95 : vector<1x128xf32>
    %cst_72 = arith.constant 1.000000e-01 : f32
    %98 = vector.broadcast %cst_72 : f32 to vector<1x128xf32>
    %99 = arith.addf %98, %97 : vector<1x128xf32>
    %100 = tpu.reciprocal %99 : vector<1x128xf32> -> vector<1x128xf32>
    %c0_73 = arith.constant 0 : index
    %c0_74 = arith.constant 0 : index
    %c0_75 = arith.constant 0 : index
    %101 = vector.load %arg3[%c0_73, %c0_74, %c0_75] : memref<1x1x128xf32, #tpu.memory_space<vmem>>, vector<1x1x128xf32>
    %102 = vector.shape_cast %101 : vector<1x1x128xf32> to vector<1x128xf32>
    %103 = arith.subf %102, %80 : vector<1x128xf32>
    %104 = arith.mulf %103, %100 : vector<1x128xf32>
    %cst_76 = arith.constant 6.28318548 : f32
    %105 = math.log %cst_76 : f32
    %cst_77 = arith.constant -5.000000e-01 : f32
    %106 = arith.mulf %cst_77, %105 : f32
    %107 = math.log %99 : vector<1x128xf32>
    %108 = vector.broadcast %106 : f32 to vector<1x128xf32>
    %109 = arith.subf %108, %107 : vector<1x128xf32>
    %cst_78 = arith.constant 5.000000e-01 : f32
    %110 = vector.broadcast %cst_78 : f32 to vector<1x128xf32>
    %111 = arith.mulf %110, %104 : vector<1x128xf32>
    %112 = arith.mulf %111, %104 : vector<1x128xf32>
    %113 = arith.subf %109, %112 : vector<1x128xf32>
    %cst_79 = arith.constant dense<0.000000e+00> : vector<128xf32>
    %114 = vector.multi_reduction <add>, %113, %cst_79 [0] : vector<1x128xf32> to vector<128xf32>
    %115 = vector.shape_cast %114 : vector<128xf32> to vector<1x128xf32>
    %c0_80 = arith.constant 0 : index
    %c0_81 = arith.constant 0 : index
    %c0_82 = arith.constant 0 : index
    %116 = vector.load %arg17[%c0_80, %c0_81, %c0_82] : memref<1x1x128xf32, #tpu.memory_space<vmem>>, vector<1x1x128xf32>
    %117 = vector.shape_cast %116 : vector<1x1x128xf32> to vector<1x128xf32>
    %118 = vector.shape_cast %115 : vector<1x128xf32> to vector<1x1x128xf32>
    tpu.vector_store %arg17[%c0_80, %c0_81, %c0_82], %118 {strides = array<i32>} : memref<1x1x128xf32, #tpu.memory_space<vmem>>, vector<1x1x128xf32>,
    return
  }
  func.func @transform_0(%arg0: i32) -> (i32, i32, i32) {
    %c0_i32 = arith.constant 0 : i32
    %c0_i32_0 = arith.constant 0 : i32
    %c0_i32_1 = arith.constant 0 : i32
    return %arg0, %c0_i32, %c0_i32_0 : i32, i32, i32
  }
  func.func @transform_1(%arg0: i32) -> (i32, i32, i32) {
    %c0_i32 = arith.constant 0 : i32
    %c0_i32_0 = arith.constant 0 : i32
    %c0_i32_1 = arith.constant 0 : i32
    return %arg0, %c0_i32, %c0_i32_0 : i32, i32, i32
  }
  func.func @transform_2(%arg0: i32) -> (i32, i32, i32) {
    %c0_i32 = arith.constant 0 : i32
    %c0_i32_0 = arith.constant 0 : i32
    %c0_i32_1 = arith.constant 0 : i32
    return %arg0, %c0_i32, %c0_i32_0 : i32, i32, i32
  }
  func.func @transform_3(%arg0: i32) -> (i32, i32) {
    %c0_i32 = arith.constant 0 : i32
    %c0_i32_0 = arith.constant 0 : i32
    %c0_i32_1 = arith.constant 0 : i32
    return %c0_i32, %c0_i32_0 : i32, i32
  }
  func.func @transform_4(%arg0: i32) -> (i32, i32) {
    %c0_i32 = arith.constant 0 : i32
    %c0_i32_0 = arith.constant 0 : i32
    %c0_i32_1 = arith.constant 0 : i32
    return %c0_i32, %c0_i32_0 : i32, i32
  }
  func.func @transform_5(%arg0: i32) -> (i32, i32) {
    %c0_i32 = arith.constant 0 : i32
    %c0_i32_0 = arith.constant 0 : i32
    %c0_i32_1 = arith.constant 0 : i32
    return %c0_i32, %c0_i32_0 : i32, i32
  }
  func.func @transform_6(%arg0: i32) -> (i32, i32) {
    %c0_i32 = arith.constant 0 : i32
    %c0_i32_0 = arith.constant 0 : i32
    %c0_i32_1 = arith.constant 0 : i32
    return %c0_i32, %c0_i32_0 : i32, i32
  }
  func.func @transform_7(%arg0: i32) -> (i32, i32, i32) {
    %c0_i32 = arith.constant 0 : i32
    %c0_i32_0 = arith.constant 0 : i32
    %c0_i32_1 = arith.constant 0 : i32
    %c0_i32_2 = arith.constant 0 : i32
    return %c0_i32, %c0_i32_0, %c0_i32_1 : i32, i32, i32
  }
  func.func @transform_8(%arg0: i32) -> (i32, i32, i32) {
    %c0_i32 = arith.constant 0 : i32
    %c0_i32_0 = arith.constant 0 : i32
    %c0_i32_1 = arith.constant 0 : i32
    %c0_i32_2 = arith.constant 0 : i32
    return %c0_i32, %c0_i32_0, %c0_i32_1 : i32, i32, i32
  }
  func.func @transform_9(%arg0: i32) -> (i32, i32) {
    %c0_i32 = arith.constant 0 : i32
    %c0_i32_0 = arith.constant 0 : i32
    %c0_i32_1 = arith.constant 0 : i32
    return %c0_i32, %c0_i32_0 : i32, i32
  }
  func.func @transform_10(%arg0: i32) -> (i32, i32) {
    %c0_i32 = arith.constant 0 : i32
    %c0_i32_0 = arith.constant 0 : i32
    %c0_i32_1 = arith.constant 0 : i32
    return %c0_i32, %c0_i32_0 : i32, i32
  }
  func.func @transform_11(%arg0: i32) -> (i32, i32) {
    %c0_i32 = arith.constant 0 : i32
    %c0_i32_0 = arith.constant 0 : i32
    %c0_i32_1 = arith.constant 0 : i32
    return %c0_i32, %c0_i32_0 : i32, i32
  }
  func.func @transform_12(%arg0: i32) -> (i32, i32) {
    %c0_i32 = arith.constant 0 : i32
    %c0_i32_0 = arith.constant 0 : i32
    %c0_i32_1 = arith.constant 0 : i32
    return %c0_i32, %c0_i32_0 : i32, i32
  }
  func.func @transform_13(%arg0: i32) -> (i32, i32) {
    %c0_i32 = arith.constant 0 : i32
    %c0_i32_0 = arith.constant 0 : i32
    %c0_i32_1 = arith.constant 0 : i32
    return %c0_i32, %c0_i32_0 : i32, i32
  }
  func.func @transform_14(%arg0: i32) -> (i32, i32) {
    %c0_i32 = arith.constant 0 : i32
    %c0_i32_0 = arith.constant 0 : i32
    %c0_i32_1 = arith.constant 0 : i32
    return %c0_i32, %c0_i32_0 : i32, i32
  }
  func.func @transform_15(%arg0: i32) -> (i32, i32) {
    %c0_i32 = arith.constant 0 : i32
    %c0_i32_0 = arith.constant 0 : i32
    %c0_i32_1 = arith.constant 0 : i32
    return %c0_i32, %c0_i32_0 : i32, i32
  }
  func.func @transform_16(%arg0: i32) -> (i32, i32, i32) {
    %c0_i32 = arith.constant 0 : i32
    %c0_i32_0 = arith.constant 0 : i32
    %c0_i32_1 = arith.constant 0 : i32
    return %arg0, %c0_i32, %c0_i32_0 : i32, i32, i32
  }
}

</mosaic_0001>

<llo_original>
// kernel: tpu_custom_call.1
$region0: #{tpu_custom_call.1}
  #allocation0 [shape = 'u32[]', space=smem, size = 0x4, offset = 0x4, fixed_abs, tag = 'smem constant byte address 0x4 - core index']
  #allocation1 [shape = 'u32[72,128]{1,0:T(1,128)}', space=vmem, size = 0x9000, scoped, tag = 'internal scratch']
  %s0 = inlined_call_operand.hbm [shape: f32[1,2,64], index: 0, kind: input, shape index: {}]
  %s1 = inlined_call_operand.hbm [shape: f32[1,1,128], index: 1, kind: input, shape index: {}]
  %s2 = inlined_call_operand.hbm [shape: f32[1,1,128], index: 2, kind: input, shape index: {}]
  %s3 = inlined_call_operand.vmem [shape: f32[64,16], index: 3, kind: input, shape index: {}]
  %s4 = inlined_call_operand.hbm [shape: f32[16,128], index: 4, kind: input, shape index: {}]
  %s5 = inlined_call_operand.vmem [shape: f32[256,2], index: 5, kind: input, shape index: {}]
  %s6 = inlined_call_operand.vmem [shape: f32[256,1], index: 6, kind: input, shape index: {}]
  %s7 = inlined_call_operand.hbm [shape: f32[5,256,256], index: 7, kind: input, shape index: {}]
  %s8 = inlined_call_operand.vmem [shape: f32[5,256,1], index: 8, kind: input, shape index: {}]
  %s9 = inlined_call_operand.hbm [shape: f32[128,256], index: 9, kind: input, shape index: {}]
  %s10 = inlined_call_operand.vmem [shape: f32[128,1], index: 10, kind: input, shape index: {}]
  %s11 = inlined_call_operand.vmem [shape: f32[128,1], index: 11, kind: input, shape index: {}]
  %s12 = inlined_call_operand.hbm [shape: f32[128,128], index: 12, kind: input, shape index: {}]
  %s13 = inlined_call_operand.vmem [shape: f32[128,1], index: 13, kind: input, shape index: {}]
  %s14 = inlined_call_operand.hbm [shape: f32[2,128], index: 14, kind: input, shape index: {}]
  %s15 = inlined_call_operand.vmem [shape: f32[2,1], index: 15, kind: input, shape index: {}]
  %s16 = inlined_call_operand.hbm [shape: f32[1,1,128], index: 16, kind: output, shape index: {}]
  %s17 = sld [smem:[#allocation0]]
  $region106: #{tpu_custom_call.1} parent=0
    _
  %s19 = ssub.s32 1, %s17
  %s20 = scalar_select 0, %s19, %s17
  $region1: #{tpu_custom_call.1} parent=0
    #allocation2 [shape = 'u8[1024]{0}', space=vmem, size = 0x400, scoped, tag = 'input window, operand 0, single buffered']
    #allocation3 [shape = 's32[1]{0}', space=sflag, size = 0x4, scoped, tag = 'scoped memory for tpu_custom_call.1']
    #allocation4 [shape = 's32[1]{0}', space=sflag, size = 0x4, scoped, tag = 'scoped memory for tpu_custom_call.1']
    #allocation5 [shape = 'u8[512]{0}', space=vmem, size = 0x400, scoped, tag = 'input window, operand 1, single buffered']
    #allocation6 [shape = 's32[1]{0}', space=sflag, size = 0x4, scoped, tag = 'scoped memory for tpu_custom_call.1']
    #allocation7 [shape = 'u8[512]{0}', space=vmem, size = 0x400, scoped, tag = 'input window, operand 2, single buffered']
    #allocation8 [shape = 'u8[8192]{0}', space=vmem, size = 0x2000, scoped, tag = 'input window, operand 4, single buffered']
    #allocation9 [shape = 's32[1]{0}', space=sflag, size = 0x4, scoped, tag = 'scoped memory for tpu_custom_call.1']
    #allocation10 [shape = 'u8[1310720]{0}', space=vmem, size = 0x140000, scoped, tag = 'input window, operand 7, single buffered']
    #allocation11 [shape = 'u8[131072]{0}', space=vmem, size = 0x20000, scoped, tag = 'input window, operand 9, single buffered']
    #allocation12 [shape = 's32[1]{0}', space=sflag, size = 0x4, scoped, tag = 'scoped memory for tpu_custom_call.1']
    #allocation13 [shape = 'u8[65536]{0}', space=vmem, size = 0x10000, scoped, tag = 'input window, operand 12, single buffered']
    #allocation14 [shape = 'u8[1024]{0}', space=vmem, size = 0x400, scoped, tag = 'input window, operand 14, single buffered']
    #allocation15 [shape = 's32[1]{0}', space=sflag, size = 0x4, scoped, tag = 'scoped memory for tpu_custom_call.1']
    #allocation16 [shape = 'u8[512]{0}', space=vmem, size = 0x400, scoped, tag = 'output window, operand 0, single buffered']
    %21 = vsyncpa [#allocation3], 0
    %22 = vsyncpa [#allocation6], 0
    %23 = vsyncpa [#allocation9], 0
    %24 = vsyncpa [#allocation12], 0
    %25 = vsyncpa [#allocation15], 0
    %26 = vsyncpa [#allocation4], 0
    // Predicated region
    $region2: #{tpu_custom_call.1} parent=1 // pred_check
      _
    $region3: #{tpu_custom_call.1} parent=1 // pred_check_branch
      %28 = sbr.rel (0) target = $region5
    $region4: #{tpu_custom_call.1} parent=1 // pred_region
      %30 = vsyncadd [#allocation3], 0
      %s32 = sshll.u32 %s0, 4
      %s33 = int_to_ptr.hbm [resolvable:$true] %s32
      %s34 = sshll.u32 [#allocation2], 4
      %s35 = int_to_ptr.vmem [resolvable:$true] %s34
      %37 = dma.hbm_to_vmem [thread:$0]  %s33, 32, %s35, [#allocation3]
    $region5: #{tpu_custom_call.1} parent=1 // pred_fallthru
      _
    // Predicated region
    $region6: #{tpu_custom_call.1} parent=1 // pred_check
      _
    $region7: #{tpu_custom_call.1} parent=1 // pred_check_branch
      %39 = sbr.rel (0) target = $region9
    $region8: #{tpu_custom_call.1} parent=1 // pred_region
      %41 = vsyncadd [#allocation6], 0
      %s43 = sshll.u32 %s1, 4
      %s44 = int_to_ptr.hbm [resolvable:$true] %s43
      %s45 = sshll.u32 [#allocation5], 4
      %s46 = int_to_ptr.vmem [resolvable:$true] %s45
      %48 = dma.hbm_to_vmem [thread:$0]  %s44, 16, %s46, [#allocation6]
    $region9: #{tpu_custom_call.1} parent=1 // pred_fallthru
      _
    // Predicated region
    $region10: #{tpu_custom_call.1} parent=1 // pred_check
      _
    $region11: #{tpu_custom_call.1} parent=1 // pred_check_branch
      %50 = sbr.rel (0) target = $region13
    $region12: #{tpu_custom_call.1} parent=1 // pred_region
      %52 = vsyncadd [#allocation6], 0
      %s54 = sshll.u32 %s2, 4
      %s55 = int_to_ptr.hbm [resolvable:$true] %s54
      %s56 = sshll.u32 [#allocation7], 4
      %s57 = int_to_ptr.vmem [resolvable:$true] %s56
      %59 = dma.hbm_to_vmem [thread:$0]  %s55, 16, %s57, [#allocation6]
    $region13: #{tpu_custom_call.1} parent=1 // pred_fallthru
      _
    // Predicated region
    $region14: #{tpu_custom_call.1} parent=1 // pred_check
      _
    $region15: #{tpu_custom_call.1} parent=1 // pred_check_branch
      %61 = sbr.rel (0) target = $region17
    $region16: #{tpu_custom_call.1} parent=1 // pred_region
      _
    $region17: #{tpu_custom_call.1} parent=1 // pred_fallthru
      _
    // Predicated region
    $region18: #{tpu_custom_call.1} parent=1 // pred_check
      _
    $region19: #{tpu_custom_call.1} parent=1 // pred_check_branch
      %63 = sbr.rel (0) target = $region21
    $region20: #{tpu_custom_call.1} parent=1 // pred_region
      %65 = vsyncadd [#allocation9], 0
      %s66 = sshll.u32 %s4, 4
      %s67 = int_to_ptr.hbm [resolvable:$true] %s66
      %s68 = sshll.u32 [#allocation8], 4
      %s69 = int_to_ptr.vmem [resolvable:$true] %s68
      %74 = dma.hbm_to_vmem [thread:$0]  %s67, 256, %s69, [#allocation9], 128, 128, 8
    $region21: #{tpu_custom_call.1} parent=1 // pred_fallthru
      _
    // Predicated region
    $region22: #{tpu_custom_call.1} parent=1 // pred_check
      _
    $region23: #{tpu_custom_call.1} parent=1 // pred_check_branch
      %76 = sbr.rel (0) target = $region25
    $region24: #{tpu_custom_call.1} parent=1 // pred_region
      _
    $region25: #{tpu_custom_call.1} parent=1 // pred_fallthru
      _
    // Predicated region
    $region26: #{tpu_custom_call.1} parent=1 // pred_check
      _
    $region27: #{tpu_custom_call.1} parent=1 // pred_check_branch
      %78 = sbr.rel (0) target = $region29
    $region28: #{tpu_custom_call.1} parent=1 // pred_region
      _
    $region29: #{tpu_custom_call.1} parent=1 // pred_fallthru
      _
    // Predicated region
    $region30: #{tpu_custom_call.1} parent=1 // pred_check
      _
    $region31: #{tpu_custom_call.1} parent=1 // pred_check_branch
      %80 = sbr.rel (0) target = $region33
    $region32: #{tpu_custom_call.1} parent=1 // pred_region
      %82 = vsyncadd [#allocation9], 0
      %s83 = sshll.u32 %s7, 4
      %s84 = int_to_ptr.hbm [resolvable:$true] %s83
      %s85 = sshll.u32 [#allocation10], 4
      %s86 = int_to_ptr.vmem [resolvable:$true] %s85
      %91 = dma.hbm_to_vmem [thread:$0]  %s84, 40960, %s86, [#allocation9], 256, 256, 16
    $region33: #{tpu_custom_call.1} parent=1 // pred_fallthru
      _
    // Predicated region
    $region34: #{tpu_custom_call.1} parent=1 // pred_check
      _
    $region35: #{tpu_custom_call.1} parent=1 // pred_check_branch
      %93 = sbr.rel (0) target = $region37
    $region36: #{tpu_custom_call.1} parent=1 // pred_region
      _
    $region37: #{tpu_custom_call.1} parent=1 // pred_fallthru
      _
    // Predicated region
    $region38: #{tpu_custom_call.1} parent=1 // pred_check
      _
    $region39: #{tpu_custom_call.1} parent=1 // pred_check_branch
      %95 = sbr.rel (0) target = $region41
    $region40: #{tpu_custom_call.1} parent=1 // pred_region
      %97 = vsyncadd [#allocation12], 0
      %s98 = sshll.u32 %s9, 4
      %s99 = int_to_ptr.hbm [resolvable:$true] %s98
      %s100 = sshll.u32 [#allocation11], 4
      %s101 = int_to_ptr.vmem [resolvable:$true] %s100
      %106 = dma.hbm_to_vmem [thread:$0]  %s99, 4096, %s101, [#allocation12], 256, 256, 16
    $region41: #{tpu_custom_call.1} parent=1 // pred_fallthru
      _
    // Predicated region
    $region42: #{tpu_custom_call.1} parent=1 // pred_check
      _
    $region43: #{tpu_custom_call.1} parent=1 // pred_check_branch
      %108 = sbr.rel (0) target = $region45
    $region44: #{tpu_custom_call.1} parent=1 // pred_region
      _
    $region45: #{tpu_custom_call.1} parent=1 // pred_fallthru
      _
    // Predicated region
    $region46: #{tpu_custom_call.1} parent=1 // pred_check
      _
    $region47: #{tpu_custom_call.1} parent=1 // pred_check_branch
      %110 = sbr.rel (0) target = $region49
    $region48: #{tpu_custom_call.1} parent=1 // pred_region
      _
    $region49: #{tpu_custom_call.1} parent=1 // pred_fallthru
      _
    // Predicated region
    $region50: #{tpu_custom_call.1} parent=1 // pred_check
      _
    $region51: #{tpu_custom_call.1} parent=1 // pred_check_branch
      %112 = sbr.rel (0) target = $region53
    $region52: #{tpu_custom_call.1} parent=1 // pred_region
      %114 = vsyncadd [#allocation12], 0
      %s115 = sshll.u32 %s12, 4
      %s116 = int_to_ptr.hbm [resolvable:$true] %s115
      %s117 = sshll.u32 [#allocation13], 4
      %s118 = int_to_ptr.vmem [resolvable:$true] %s117
      %123 = dma.hbm_to_vmem [thread:$0]  %s116, 2048, %s118, [#allocation12], 128, 128, 8
    $region53: #{tpu_custom_call.1} parent=1 // pred_fallthru
      _
    // Predicated region
    $region54: #{tpu_custom_call.1} parent=1 // pred_check
      _
    $region55: #{tpu_custom_call.1} parent=1 // pred_check_branch
      %125 = sbr.rel (0) target = $region57
    $region56: #{tpu_custom_call.1} parent=1 // pred_region
      _
    $region57: #{tpu_custom_call.1} parent=1 // pred_fallthru
      _
    // Predicated region
    $region58: #{tpu_custom_call.1} parent=1 // pred_check
      _
    $region59: #{tpu_custom_call.1} parent=1 // pred_check_branch
      %127 = sbr.rel (0) target = $region61
    $region60: #{tpu_custom_call.1} parent=1 // pred_region
      %129 = vsyncadd [#allocation15], 0
      %s131 = sshll.u32 %s14, 4
      %s132 = int_to_ptr.hbm [resolvable:$true] %s131
      %s133 = sshll.u32 [#allocation14], 4
      %s134 = int_to_ptr.vmem [resolvable:$true] %s133
      %136 = dma.hbm_to_vmem [thread:$0]  %s132, 32, %s134, [#allocation15]
    $region61: #{tpu_custom_call.1} parent=1 // pred_fallthru
      _
    // Predicated region
    $region62: #{tpu_custom_call.1} parent=1 // pred_check
      _
    $region63: #{tpu_custom_call.1} parent=1 // pred_check_branch
      %138 = sbr.rel (0) target = $region65
    $region64: #{tpu_custom_call.1} parent=1 // pred_region
      _
    $region65: #{tpu_custom_call.1} parent=1 // pred_fallthru
      _
    // Predicated region
    $region66: #{tpu_custom_call.1} parent=1 // pred_check
      _
    $region67: #{tpu_custom_call.1} parent=1 // pred_check_branch
      %140 = sbr.rel (0) target = $region69
    $region68: #{tpu_custom_call.1} parent=1 // pred_region
      %142 = dma.done [#allocation3], 32
    $region69: #{tpu_custom_call.1} parent=1 // pred_fallthru
      _
    // Predicated region
    $region70: #{tpu_custom_call.1} parent=1 // pred_check
      _
    $region71: #{tpu_custom_call.1} parent=1 // pred_check_branch
      %144 = sbr.rel (0) target = $region73
    $region72: #{tpu_custom_call.1} parent=1 // pred_region
      %146 = dma.done [#allocation6], 16
    $region73: #{tpu_custom_call.1} parent=1 // pred_fallthru
      _
    // Predicated region
    $region74: #{tpu_custom_call.1} parent=1 // pred_check
      _
    $region75: #{tpu_custom_call.1} parent=1 // pred_check_branch
      %148 = sbr.rel (0) target = $region77
    $region76: #{tpu_custom_call.1} parent=1 // pred_region
      %150 = dma.done [#allocation6], 16
    $region77: #{tpu_custom_call.1} parent=1 // pred_fallthru
      _
    // Predicated region
    $region78: #{tpu_custom_call.1} parent=1 // pred_check
      _
    $region79: #{tpu_custom_call.1} parent=1 // pred_check_branch
      %152 = sbr.rel (0) target = $region81
    $region80: #{tpu_custom_call.1} parent=1 // pred_region
      %154 = dma.done [#allocation9], 256
    $region81: #{tpu_custom_call.1} parent=1 // pred_fallthru
      _
    // Predicated region
    $region82: #{tpu_custom_call.1} parent=1 // pred_check
      _
    $region83: #{tpu_custom_call.1} parent=1 // pred_check_branch
      %156 = sbr.rel (0) target = $region85
    $region84: #{tpu_custom_call.1} parent=1 // pred_region
      %158 = dma.done [#allocation9], 40960
    $region85: #{tpu_custom_call.1} parent=1 // pred_fallthru
      _
    // Predicated region
    $region86: #{tpu_custom_call.1} parent=1 // pred_check
      _
    $region87: #{tpu_custom_call.1} parent=1 // pred_check_branch
      %160 = sbr.rel (0) target = $region89
    $region88: #{tpu_custom_call.1} parent=1 // pred_region
      %162 = dma.done [#allocation12], 4096
    $region89: #{tpu_custom_call.1} parent=1 // pred_fallthru
      _
    // Predicated region
    $region90: #{tpu_custom_call.1} parent=1 // pred_check
      _
    $region91: #{tpu_custom_call.1} parent=1 // pred_check_branch
      %164 = sbr.rel (0) target = $region93
    $region92: #{tpu_custom_call.1} parent=1 // pred_region
      %166 = dma.done [#allocation12], 2048
    $region93: #{tpu_custom_call.1} parent=1 // pred_fallthru
      _
    // Predicated region
    $region94: #{tpu_custom_call.1} parent=1 // pred_check
      _
    $region95: #{tpu_custom_call.1} parent=1 // pred_check_branch
      %168 = sbr.rel (0) target = $region97
    $region96: #{tpu_custom_call.1} parent=1 // pred_region
      %170 = dma.done [#allocation15], 32
    $region97: #{tpu_custom_call.1} parent=1 // pred_fallthru
      _
    %v171 = vld [vmem:[%s5] sm:$0xff]
    %v172 = vld [vmem:[%s5 + $0x8] sm:$0xff]
    %v173 = vld [vmem:[%s5 + $0x10] sm:$0xff]
    %v174 = vld [vmem:[%s5 + $0x18] sm:$0xff]
    %v175 = vld [vmem:[%s5 + $0x20] sm:$0xff]
    %v176 = vld [vmem:[%s5 + $0x28] sm:$0xff]
    %v177 = vld [vmem:[%s5 + $0x30] sm:$0xff]
    %v178 = vld [vmem:[%s5 + $0x38] sm:$0xff]
    %v179 = vld [vmem:[%s5 + $0x40] sm:$0xff]
    %v180 = vld [vmem:[%s5 + $0x48] sm:$0xff]
    %v181 = vld [vmem:[%s5 + $0x50] sm:$0xff]
    %v182 = vld [vmem:[%s5 + $0x58] sm:$0xff]
    %v183 = vld [vmem:[%s5 + $0x60] sm:$0xff]
    %v184 = vld [vmem:[%s5 + $0x68] sm:$0xff]
    %v185 = vld [vmem:[%s5 + $0x70] sm:$0xff]
    %v186 = vld [vmem:[%s5 + $0x78] sm:$0xff]
    %v187 = vld [vmem:[%s5 + $0x80] sm:$0xff]
    %v188 = vld [vmem:[%s5 + $0x88] sm:$0xff]
    %v189 = vld [vmem:[%s5 + $0x90] sm:$0xff]
    %v190 = vld [vmem:[%s5 + $0x98] sm:$0xff]
    %v191 = vld [vmem:[%s5 + $0xa0] sm:$0xff]
    %v192 = vld [vmem:[%s5 + $0xa8] sm:$0xff]
    %v193 = vld [vmem:[%s5 + $0xb0] sm:$0xff]
    %v194 = vld [vmem:[%s5 + $0xb8] sm:$0xff]
    %v195 = vld [vmem:[%s5 + $0xc0] sm:$0xff]
    %v196 = vld [vmem:[%s5 + $0xc8] sm:$0xff]
    %v197 = vld [vmem:[%s5 + $0xd0] sm:$0xff]
    %v198 = vld [vmem:[%s5 + $0xd8] sm:$0xff]
    %v199 = vld [vmem:[%s5 + $0xe0] sm:$0xff]
    %v200 = vld [vmem:[%s5 + $0xe8] sm:$0xff]
    %v201 = vld [vmem:[%s5 + $0xf0] sm:$0xff]
    %v202 = vld [vmem:[%s5 + $0xf8] sm:$0xff]
    %v203 = vld [vmem:[#allocation2] sm:$0x3]
    %v204 = vld [vmem:[%s6] sm:$0xff]
    %v205 = vld [vmem:[%s6 + $0x8] sm:$0xff]
    %v206 = vld [vmem:[%s6 + $0x10] sm:$0xff]
    %v207 = vld [vmem:[%s6 + $0x18] sm:$0xff]
    %v208 = vld [vmem:[%s6 + $0x20] sm:$0xff]
    %v209 = vld [vmem:[%s6 + $0x28] sm:$0xff]
    %v210 = vld [vmem:[%s6 + $0x30] sm:$0xff]
    %v211 = vld [vmem:[%s6 + $0x38] sm:$0xff]
    %v212 = vld [vmem:[%s6 + $0x40] sm:$0xff]
    %v213 = vld [vmem:[%s6 + $0x48] sm:$0xff]
    %v214 = vld [vmem:[%s6 + $0x50] sm:$0xff]
    %v215 = vld [vmem:[%s6 + $0x58] sm:$0xff]
    %v216 = vld [vmem:[%s6 + $0x60] sm:$0xff]
    %v217 = vld [vmem:[%s6 + $0x68] sm:$0xff]
    %v218 = vld [vmem:[%s6 + $0x70] sm:$0xff]
    %v219 = vld [vmem:[%s6 + $0x78] sm:$0xff]
    %v220 = vld [vmem:[%s6 + $0x80] sm:$0xff]
    %v221 = vld [vmem:[%s6 + $0x88] sm:$0xff]
    %v222 = vld [vmem:[%s6 + $0x90] sm:$0xff]
    %v223 = vld [vmem:[%s6 + $0x98] sm:$0xff]
    %v224 = vld [vmem:[%s6 + $0xa0] sm:$0xff]
    %v225 = vld [vmem:[%s6 + $0xa8] sm:$0xff]
    %v226 = vld [vmem:[%s6 + $0xb0] sm:$0xff]
    %v227 = vld [vmem:[%s6 + $0xb8] sm:$0xff]
    %v228 = vld [vmem:[%s6 + $0xc0] sm:$0xff]
    %v229 = vld [vmem:[%s6 + $0xc8] sm:$0xff]
    %v230 = vld [vmem:[%s6 + $0xd0] sm:$0xff]
    %v231 = vld [vmem:[%s6 + $0xd8] sm:$0xff]
    %v232 = vld [vmem:[%s6 + $0xe0] sm:$0xff]
    %v233 = vld [vmem:[%s6 + $0xe8] sm:$0xff]
    %v234 = vld [vmem:[%s6 + $0xf0] sm:$0xff]
    %v235 = vld [vmem:[%s6 + $0xf8] sm:$0xff]
    %237 = vset.pattern.permute.xlu0 0
    %238 = vperm.xlu0 %237, %v204
    %v239 = vpop.permute.xlu0 %238
    %242 = vset.pattern.permute.xlu0 0
    %243 = vperm.xlu0 %242, %v205
    %v244 = vpop.permute.xlu0 %243
    %247 = vset.pattern.permute.xlu0 0
    %248 = vperm.xlu0 %247, %v206
    %v249 = vpop.permute.xlu0 %248
    %252 = vset.pattern.permute.xlu0 0
    %253 = vperm.xlu0 %252, %v207
    %v254 = vpop.permute.xlu0 %253
    %257 = vset.pattern.permute.xlu0 0
    %258 = vperm.xlu0 %257, %v208
    %v259 = vpop.permute.xlu0 %258
    %262 = vset.pattern.permute.xlu0 0
    %263 = vperm.xlu0 %262, %v209
    %v264 = vpop.permute.xlu0 %263
    %267 = vset.pattern.permute.xlu0 0
    %268 = vperm.xlu0 %267, %v210
    %v269 = vpop.permute.xlu0 %268
    %272 = vset.pattern.permute.xlu0 0
    %273 = vperm.xlu0 %272, %v211
    %v274 = vpop.permute.xlu0 %273
    %277 = vset.pattern.permute.xlu0 0
    %278 = vperm.xlu0 %277, %v212
    %v279 = vpop.permute.xlu0 %278
    %282 = vset.pattern.permute.xlu0 0
    %283 = vperm.xlu0 %282, %v213
    %v284 = vpop.permute.xlu0 %283
    %287 = vset.pattern.permute.xlu0 0
    %288 = vperm.xlu0 %287, %v214
    %v289 = vpop.permute.xlu0 %288
    %292 = vset.pattern.permute.xlu0 0
    %293 = vperm.xlu0 %292, %v215
    %v294 = vpop.permute.xlu0 %293
    %297 = vset.pattern.permute.xlu0 0
    %298 = vperm.xlu0 %297, %v216
    %v299 = vpop.permute.xlu0 %298
    %302 = vset.pattern.permute.xlu0 0
    %303 = vperm.xlu0 %302, %v217
    %v304 = vpop.permute.xlu0 %303
    %307 = vset.pattern.permute.xlu0 0
    %308 = vperm.xlu0 %307, %v218
    %v309 = vpop.permute.xlu0 %308
    %312 = vset.pattern.permute.xlu0 0
    %313 = vperm.xlu0 %312, %v219
    %v314 = vpop.permute.xlu0 %313
    %317 = vset.pattern.permute.xlu0 0
    %318 = vperm.xlu0 %317, %v220
    %v319 = vpop.permute.xlu0 %318
    %322 = vset.pattern.permute.xlu0 0
    %323 = vperm.xlu0 %322, %v221
    %v324 = vpop.permute.xlu0 %323
    %327 = vset.pattern.permute.xlu0 0
    %328 = vperm.xlu0 %327, %v222
    %v329 = vpop.permute.xlu0 %328
    %332 = vset.pattern.permute.xlu0 0
    %333 = vperm.xlu0 %332, %v223
    %v334 = vpop.permute.xlu0 %333
    %337 = vset.pattern.permute.xlu0 0
    %338 = vperm.xlu0 %337, %v224
    %v339 = vpop.permute.xlu0 %338
    %342 = vset.pattern.permute.xlu0 0
    %343 = vperm.xlu0 %342, %v225
    %v344 = vpop.permute.xlu0 %343
    %347 = vset.pattern.permute.xlu0 0
    %348 = vperm.xlu0 %347, %v226
    %v349 = vpop.permute.xlu0 %348
    %352 = vset.pattern.permute.xlu0 0
    %353 = vperm.xlu0 %352, %v227
    %v354 = vpop.permute.xlu0 %353
    %357 = vset.pattern.permute.xlu0 0
    %358 = vperm.xlu0 %357, %v228
    %v359 = vpop.permute.xlu0 %358
    %362 = vset.pattern.permute.xlu0 0
    %363 = vperm.xlu0 %362, %v229
    %v364 = vpop.permute.xlu0 %363
    %367 = vset.pattern.permute.xlu0 0
    %368 = vperm.xlu0 %367, %v230
    %v369 = vpop.permute.xlu0 %368
    %372 = vset.pattern.permute.xlu0 0
    %373 = vperm.xlu0 %372, %v231
    %v374 = vpop.permute.xlu0 %373
    %377 = vset.pattern.permute.xlu0 0
    %378 = vperm.xlu0 %377, %v232
    %v379 = vpop.permute.xlu0 %378
    %382 = vset.pattern.permute.xlu0 0
    %383 = vperm.xlu0 %382, %v233
    %v384 = vpop.permute.xlu0 %383
    %387 = vset.pattern.permute.xlu0 0
    %388 = vperm.xlu0 %387, %v234
    %v389 = vpop.permute.xlu0 %388
    %392 = vset.pattern.permute.xlu0 0
    %393 = vperm.xlu0 %392, %v235
    %v394 = vpop.permute.xlu0 %393
    %vm396 = vcmask 15360
    %v398 = vsel %vm396, %v171, 0
    %v401 = vsel %vm396, %v172, 0
    %v404 = vsel %vm396, %v173, 0
    %v407 = vsel %vm396, %v174, 0
    %v410 = vsel %vm396, %v175, 0
    %v413 = vsel %vm396, %v176, 0
    %v416 = vsel %vm396, %v177, 0
    %v419 = vsel %vm396, %v178, 0
    %v422 = vsel %vm396, %v179, 0
    %v425 = vsel %vm396, %v180, 0
    %v428 = vsel %vm396, %v181, 0
    %v431 = vsel %vm396, %v182, 0
    %v434 = vsel %vm396, %v183, 0
    %v437 = vsel %vm396, %v184, 0
    %v440 = vsel %vm396, %v185, 0
    %v443 = vsel %vm396, %v186, 0
    %v446 = vsel %vm396, %v187, 0
    %v449 = vsel %vm396, %v188, 0
    %v452 = vsel %vm396, %v189, 0
    %v455 = vsel %vm396, %v190, 0
    %v458 = vsel %vm396, %v191, 0
    %v461 = vsel %vm396, %v192, 0
    %v464 = vsel %vm396, %v193, 0
    %v467 = vsel %vm396, %v194, 0
    %v470 = vsel %vm396, %v195, 0
    %v473 = vsel %vm396, %v196, 0
    %v476 = vsel %vm396, %v197, 0
    %v479 = vsel %vm396, %v198, 0
    %v482 = vsel %vm396, %v199, 0
    %v485 = vsel %vm396, %v200, 0
    %v488 = vsel %vm396, %v201, 0
    %v491 = vsel %vm396, %v202, 0
    %vm493 = vcmask 1041408
    %v495 = vsel %vm493, %v203, 0
    %497 = vmatpush.msra.mxu0 0.0
    %498 = vmatpush.msra.mxu0 0.0
    %499 = vmatpush.msra.mxu0 0.0
    %500 = vmatpush.msra.mxu0 0.0
    %501 = vmatpush.msra.mxu0 0.0
    %502 = vmatpush.msra.mxu0 0.0
    %503 = vmatpush.msra.mxu0 0.0
    %504 = vmatpush.msra.mxu0 0.0
    %505 = vmatpush.msra.mxu0 0.0
    %506 = vmatpush.msra.mxu0 0.0
    %507 = vmatpush.msra.mxu0 0.0
    %508 = vmatpush.msra.mxu0 0.0
    %509 = vmatpush.msra.mxu0 0.0
    %510 = vmatpush.msra.mxu0 0.0
    %511 = vmatpush.msra.mxu0 0.0
    %512 = vmatpush.msra.mxu0 %v495
    %513 = vmatmul.f32.gmra.mxu0 %v398
    %v514 = vpop.f32.mrf.mxu0
    %v515 = vadd.f32 %v239, %v514
    %516 = vmatmul.f32.gmra.mxu0 %v401
    %v517 = vpop.f32.mrf.mxu0
    %v518 = vadd.f32 %v244, %v517
    %519 = vmatmul.f32.gmra.mxu0 %v404
    %v520 = vpop.f32.mrf.mxu0
    %v521 = vadd.f32 %v249, %v520
    %522 = vmatmul.f32.gmra.mxu0 %v407
    %v523 = vpop.f32.mrf.mxu0
    %v524 = vadd.f32 %v254, %v523
    %525 = vmatmul.f32.gmra.mxu0 %v410
    %v526 = vpop.f32.mrf.mxu0
    %v527 = vadd.f32 %v259, %v526
    %528 = vmatmul.f32.gmra.mxu0 %v413
    %v529 = vpop.f32.mrf.mxu0
    %v530 = vadd.f32 %v264, %v529
    %531 = vmatmul.f32.gmra.mxu0 %v416
    %v532 = vpop.f32.mrf.mxu0
    %v533 = vadd.f32 %v269, %v532
    %534 = vmatmul.f32.gmra.mxu0 %v419
    %v535 = vpop.f32.mrf.mxu0
    %v536 = vadd.f32 %v274, %v535
    %537 = vmatmul.f32.gmra.mxu0 %v422
    %v538 = vpop.f32.mrf.mxu0
    %v539 = vadd.f32 %v279, %v538
    %540 = vmatmul.f32.gmra.mxu0 %v425
    %v541 = vpop.f32.mrf.mxu0
    %v542 = vadd.f32 %v284, %v541
    %543 = vmatmul.f32.gmra.mxu0 %v428
    %v544 = vpop.f32.mrf.mxu0
    %v545 = vadd.f32 %v289, %v544
    %546 = vmatmul.f32.gmra.mxu0 %v431
    %v547 = vpop.f32.mrf.mxu0
    %v548 = vadd.f32 %v294, %v547
    %549 = vmatmul.f32.gmra.mxu0 %v434
    %v550 = vpop.f32.mrf.mxu0
    %v551 = vadd.f32 %v299, %v550
    %552 = vmatmul.f32.gmra.mxu0 %v437
    %v553 = vpop.f32.mrf.mxu0
    %v554 = vadd.f32 %v304, %v553
    %555 = vmatmul.f32.gmra.mxu0 %v440
    %v556 = vpop.f32.mrf.mxu0
    %v557 = vadd.f32 %v309, %v556
    %558 = vmatmul.f32.gmra.mxu0 %v443
    %v559 = vpop.f32.mrf.mxu0
    %v560 = vadd.f32 %v314, %v559
    %561 = vmatmul.f32.gmra.mxu0 %v446
    %v562 = vpop.f32.mrf.mxu0
    %v563 = vadd.f32 %v319, %v562
    %564 = vmatmul.f32.gmra.mxu0 %v449
    %v565 = vpop.f32.mrf.mxu0
    %v566 = vadd.f32 %v324, %v565
    %567 = vmatmul.f32.gmra.mxu0 %v452
    %v568 = vpop.f32.mrf.mxu0
    %v569 = vadd.f32 %v329, %v568
    %570 = vmatmul.f32.gmra.mxu0 %v455
    %v571 = vpop.f32.mrf.mxu0
    %v572 = vadd.f32 %v334, %v571
    %573 = vmatmul.f32.gmra.mxu0 %v458
    %v574 = vpop.f32.mrf.mxu0
    %v575 = vadd.f32 %v339, %v574
    %576 = vmatmul.f32.gmra.mxu0 %v461
    %v577 = vpop.f32.mrf.mxu0
    %v578 = vadd.f32 %v344, %v577
    %579 = vmatmul.f32.gmra.mxu0 %v464
    %v580 = vpop.f32.mrf.mxu0
    %v581 = vadd.f32 %v349, %v580
    %582 = vmatmul.f32.gmra.mxu0 %v467
    %v583 = vpop.f32.mrf.mxu0
    %v584 = vadd.f32 %v354, %v583
    %585 = vmatmul.f32.gmra.mxu0 %v470
    %v586 = vpop.f32.mrf.mxu0
    %v587 = vadd.f32 %v359, %v586
    %588 = vmatmul.f32.gmra.mxu0 %v473
    %v589 = vpop.f32.mrf.mxu0
    %v590 = vadd.f32 %v364, %v589
    %591 = vmatmul.f32.gmra.mxu0 %v476
    %v592 = vpop.f32.mrf.mxu0
    %v593 = vadd.f32 %v369, %v592
    %594 = vmatmul.f32.gmra.mxu0 %v479
    %v595 = vpop.f32.mrf.mxu0
    %v596 = vadd.f32 %v374, %v595
    %597 = vmatmul.f32.gmra.mxu0 %v482
    %v598 = vpop.f32.mrf.mxu0
    %v599 = vadd.f32 %v379, %v598
    %600 = vmatmul.f32.gmra.mxu0 %v485
    %v601 = vpop.f32.mrf.mxu0
    %v602 = vadd.f32 %v384, %v601
    %603 = vmatmul.f32.gmra.mxu0 %v488
    %v604 = vpop.f32.mrf.mxu0
    %v605 = vadd.f32 %v389, %v604
    %606 = vmatmul.f32.gmra.mxu0 %v491
    %v607 = vpop.f32.mrf.mxu0
    %v608 = vadd.f32 %v394, %v607
    %609 = vdwg.mxu0
    %v610 = vmax.f32 %v515, 0.0
    %v611 = vmax.f32 %v518, 0.0
    %v612 = vmax.f32 %v521, 0.0
    %v613 = vmax.f32 %v524, 0.0
    %v614 = vmax.f32 %v527, 0.0
    %v615 = vmax.f32 %v530, 0.0
    %v616 = vmax.f32 %v533, 0.0
    %v617 = vmax.f32 %v536, 0.0
    %v618 = vmax.f32 %v539, 0.0
    %v619 = vmax.f32 %v542, 0.0
    %v620 = vmax.f32 %v545, 0.0
    %v621 = vmax.f32 %v548, 0.0
    %v622 = vmax.f32 %v551, 0.0
    %v623 = vmax.f32 %v554, 0.0
    %v624 = vmax.f32 %v557, 0.0
    %v625 = vmax.f32 %v560, 0.0
    %v626 = vmax.f32 %v563, 0.0
    %v627 = vmax.f32 %v566, 0.0
    %v628 = vmax.f32 %v569, 0.0
    %v629 = vmax.f32 %v572, 0.0
    %v630 = vmax.f32 %v575, 0.0
    %v631 = vmax.f32 %v578, 0.0
    %v632 = vmax.f32 %v581, 0.0
    %v633 = vmax.f32 %v584, 0.0
    %v634 = vmax.f32 %v587, 0.0
    %v635 = vmax.f32 %v590, 0.0
    %v636 = vmax.f32 %v593, 0.0
    %v637 = vmax.f32 %v596, 0.0
    %v638 = vmax.f32 %v599, 0.0
    %v639 = vmax.f32 %v602, 0.0
    %v640 = vmax.f32 %v605, 0.0
    %v641 = vmax.f32 %v608, 0.0
    %v642 = vld [vmem:[#allocation10] sm:$0xff]
    %v643 = vld [vmem:[#allocation10 + $0x8] sm:$0xff]
    %v644 = vld [vmem:[#allocation10 + $0x10] sm:$0xff]
    %v645 = vld [vmem:[#allocation10 + $0x18] sm:$0xff]
    %v646 = vld [vmem:[#allocation10 + $0x20] sm:$0xff]
    %v647 = vld [vmem:[#allocation10 + $0x28] sm:$0xff]
    %v648 = vld [vmem:[#allocation10 + $0x30] sm:$0xff]
    %v649 = vld [vmem:[#allocation10 + $0x38] sm:$0xff]
    %v650 = vld [vmem:[#allocation10 + $0x40] sm:$0xff]
    %v651 = vld [vmem:[#allocation10 + $0x48] sm:$0xff]
    %v652 = vld [vmem:[#allocation10 + $0x50] sm:$0xff]
    %v653 = vld [vmem:[#allocation10 + $0x58] sm:$0xff]
    %v654 = vld [vmem:[#allocation10 + $0x60] sm:$0xff]
    %v655 = vld [vmem:[#allocation10 + $0x68] sm:$0xff]
    %v656 = vld [vmem:[#allocation10 + $0x70] sm:$0xff]
    %v657 = vld [vmem:[#allocation10 + $0x78] sm:$0xff]
    %v658 = vld [vmem:[#allocation10 + $0x80] sm:$0xff]
    %v659 = vld [vmem:[#allocation10 + $0x88] sm:$0xff]
    %v660 = vld [vmem:[#allocation10 + $0x90] sm:$0xff]
    %v661 = vld [vmem:[#allocation10 + $0x98] sm:$0xff]
    %v662 = vld [vmem:[#allocation10 + $0xa0] sm:$0xff]
    %v663 = vld [vmem:[#allocation10 + $0xa8] sm:$0xff]
    %v664 = vld [vmem:[#allocation10 + $0xb0] sm:$0xff]
    %v665 = vld [vmem:[#allocation10 + $0xb8] sm:$0xff]
    %v666 = vld [vmem:[#allocation10 + $0xc0] sm:$0xff]
    %v667 = vld [vmem:[#allocation10 + $0xc8] sm:$0xff]
    %v668 = vld [vmem:[#allocation10 + $0xd0] sm:$0xff]
    %v669 = vld [vmem:[#allocation10 + $0xd8] sm:$0xff]
    %v670 = vld [vmem:[#allocation10 + $0xe0] sm:$0xff]
    %v671 = vld [vmem:[#allocation10 + $0xe8] sm:$0xff]
    %v672 = vld [vmem:[#allocation10 + $0xf0] sm:$0xff]
    %v673 = vld [vmem:[#allocation10 + $0xf8] sm:$0xff]
    %v674 = vld [vmem:[#allocation10 + $0x100] sm:$0xff]
    %v675 = vld [vmem:[#allocation10 + $0x108] sm:$0xff]
    %v676 = vld [vmem:[#allocation10 + $0x110] sm:$0xff]
    %v677 = vld [vmem:[#allocation10 + $0x118] sm:$0xff]
    %v678 = vld [vmem:[#allocation10 + $0x120] sm:$0xff]
    %v679 = vld [vmem:[#allocation10 + $0x128] sm:$0xff]
    %v680 = vld [vmem:[#allocation10 + $0x130] sm:$0xff]
    %v681 = vld [vmem:[#allocation10 + $0x138] sm:$0xff]
    %v682 = vld [vmem:[#allocation10 + $0x140] sm:$0xff]
    %v683 = vld [vmem:[#allocation10 + $0x148] sm:$0xff]
    %v684 = vld [vmem:[#allocation10 + $0x150] sm:$0xff]
    %v685 = vld [vmem:[#allocation10 + $0x158] sm:$0xff]
    %v686 = vld [vmem:[#allocation10 + $0x160] sm:$0xff]
    %v687 = vld [vmem:[#allocation10 + $0x168] sm:$0xff]
    %v688 = vld [vmem:[#allocation10 + $0x170] sm:$0xff]
    %v689 = vld [vmem:[#allocation10 + $0x178] sm:$0xff]
    %v690 = vld [vmem:[#allocation10 + $0x180] sm:$0xff]
    %v691 = vld [vmem:[#allocation10 + $0x188] sm:$0xff]
    %v692 = vld [vmem:[#allocation10 + $0x190] sm:$0xff]
    %v693 = vld [vmem:[#allocation10 + $0x198] sm:$0xff]
    %v694 = vld [vmem:[#allocation10 + $0x1a0] sm:$0xff]
    %v695 = vld [vmem:[#allocation10 + $0x1a8] sm:$0xff]
    %v696 = vld [vmem:[#allocation10 + $0x1b0] sm:$0xff]
    %v697 = vld [vmem:[#allocation10 + $0x1b8] sm:$0xff]
    %v698 = vld [vmem:[#allocation10 + $0x1c0] sm:$0xff]
    %v699 = vld [vmem:[#allocation10 + $0x1c8] sm:$0xff]
    %v700 = vld [vmem:[#allocation10 + $0x1d0] sm:$0xff]
    %v701 = vld [vmem:[#allocation10 + $0x1d8] sm:$0xff]
    %v702 = vld [vmem:[#allocation10 + $0x1e0] sm:$0xff]
    %v703 = vld [vmem:[#allocation10 + $0x1e8] sm:$0xff]
    %v704 = vld [vmem:[#allocation10 + $0x1f0] sm:$0xff]
    %v705 = vld [vmem:[#allocation10 + $0x1f8] sm:$0xff]
    %v706 = vld [vmem:[%s8] sm:$0xff]
    %v707 = vld [vmem:[%s8 + $0x8] sm:$0xff]
    %v708 = vld [vmem:[%s8 + $0x10] sm:$0xff]
    %v709 = vld [vmem:[%s8 + $0x18] sm:$0xff]
    %v710 = vld [vmem:[%s8 + $0x20] sm:$0xff]
    %v711 = vld [vmem:[%s8 + $0x28] sm:$0xff]
    %v712 = vld [vmem:[%s8 + $0x30] sm:$0xff]
    %v713 = vld [vmem:[%s8 + $0x38] sm:$0xff]
    %v714 = vld [vmem:[%s8 + $0x40] sm:$0xff]
    %v715 = vld [vmem:[%s8 + $0x48] sm:$0xff]
    %v716 = vld [vmem:[%s8 + $0x50] sm:$0xff]
    %v717 = vld [vmem:[%s8 + $0x58] sm:$0xff]
    %v718 = vld [vmem:[%s8 + $0x60] sm:$0xff]
    %v719 = vld [vmem:[%s8 + $0x68] sm:$0xff]
    %v720 = vld [vmem:[%s8 + $0x70] sm:$0xff]
    %v721 = vld [vmem:[%s8 + $0x78] sm:$0xff]
    %v722 = vld [vmem:[%s8 + $0x80] sm:$0xff]
    %v723 = vld [vmem:[%s8 + $0x88] sm:$0xff]
    %v724 = vld [vmem:[%s8 + $0x90] sm:$0xff]
    %v725 = vld [vmem:[%s8 + $0x98] sm:$0xff]
    %v726 = vld [vmem:[%s8 + $0xa0] sm:$0xff]
    %v727 = vld [vmem:[%s8 + $0xa8] sm:$0xff]
    %v728 = vld [vmem:[%s8 + $0xb0] sm:$0xff]
    %v729 = vld [vmem:[%s8 + $0xb8] sm:$0xff]
    %v730 = vld [vmem:[%s8 + $0xc0] sm:$0xff]
    %v731 = vld [vmem:[%s8 + $0xc8] sm:$0xff]
    %v732 = vld [vmem:[%s8 + $0xd0] sm:$0xff]
    %v733 = vld [vmem:[%s8 + $0xd8] sm:$0xff]
    %v734 = vld [vmem:[%s8 + $0xe0] sm:$0xff]
    %v735 = vld [vmem:[%s8 + $0xe8] sm:$0xff]
    %v736 = vld [vmem:[%s8 + $0xf0] sm:$0xff]
    %v737 = vld [vmem:[%s8 + $0xf8] sm:$0xff]
    %739 = vset.pattern.permute.xlu0 0
    %740 = vperm.xlu0 %739, %v706
    %v741 = vpop.permute.xlu0 %740
    %744 = vset.pattern.permute.xlu0 0
    %745 = vperm.xlu0 %744, %v707
    %v746 = vpop.permute.xlu0 %745
    %749 = vset.pattern.permute.xlu0 0
    %750 = vperm.xlu0 %749, %v708
    %v751 = vpop.permute.xlu0 %750
    %754 = vset.pattern.permute.xlu0 0
    %755 = vperm.xlu0 %754, %v709
    %v756 = vpop.permute.xlu0 %755
    %759 = vset.pattern.permute.xlu0 0
    %760 = vperm.xlu0 %759, %v710
    %v761 = vpop.permute.xlu0 %760
    %764 = vset.pattern.permute.xlu0 0
    %765 = vperm.xlu0 %764, %v711
    %v766 = vpop.permute.xlu0 %765
    %769 = vset.pattern.permute.xlu0 0
    %770 = vperm.xlu0 %769, %v712
    %v771 = vpop.permute.xlu0 %770
    %774 = vset.pattern.permute.xlu0 0
    %775 = vperm.xlu0 %774, %v713
    %v776 = vpop.permute.xlu0 %775
    %779 = vset.pattern.permute.xlu0 0
    %780 = vperm.xlu0 %779, %v714
    %v781 = vpop.permute.xlu0 %780
    %784 = vset.pattern.permute.xlu0 0
    %785 = vperm.xlu0 %784, %v715
    %v786 = vpop.permute.xlu0 %785
    %789 = vset.pattern.permute.xlu0 0
    %790 = vperm.xlu0 %789, %v716
    %v791 = vpop.permute.xlu0 %790
    %794 = vset.pattern.permute.xlu0 0
    %795 = vperm.xlu0 %794, %v717
    %v796 = vpop.permute.xlu0 %795
    %799 = vset.pattern.permute.xlu0 0
    %800 = vperm.xlu0 %799, %v718
    %v801 = vpop.permute.xlu0 %800
    %804 = vset.pattern.permute.xlu0 0
    %805 = vperm.xlu0 %804, %v719
    %v806 = vpop.permute.xlu0 %805
    %809 = vset.pattern.permute.xlu0 0
    %810 = vperm.xlu0 %809, %v720
    %v811 = vpop.permute.xlu0 %810
    %814 = vset.pattern.permute.xlu0 0
    %815 = vperm.xlu0 %814, %v721
    %v816 = vpop.permute.xlu0 %815
    %819 = vset.pattern.permute.xlu0 0
    %820 = vperm.xlu0 %819, %v722
    %v821 = vpop.permute.xlu0 %820
    %824 = vset.pattern.permute.xlu0 0
    %825 = vperm.xlu0 %824, %v723
    %v826 = vpop.permute.xlu0 %825
    %829 = vset.pattern.permute.xlu0 0
    %830 = vperm.xlu0 %829, %v724
    %v831 = vpop.permute.xlu0 %830
    %834 = vset.pattern.permute.xlu0 0
    %835 = vperm.xlu0 %834, %v725
    %v836 = vpop.permute.xlu0 %835
    %839 = vset.pattern.permute.xlu0 0
    %840 = vperm.xlu0 %839, %v726
    %v841 = vpop.permute.xlu0 %840
    %844 = vset.pattern.permute.xlu0 0
    %845 = vperm.xlu0 %844, %v727
    %v846 = vpop.permute.xlu0 %845
    %849 = vset.pattern.permute.xlu0 0
    %850 = vperm.xlu0 %849, %v728
    %v851 = vpop.permute.xlu0 %850
    %854 = vset.pattern.permute.xlu0 0
    %855 = vperm.xlu0 %854, %v729
    %v856 = vpop.permute.xlu0 %855
    %859 = vset.pattern.permute.xlu0 0
    %860 = vperm.xlu0 %859, %v730
    %v861 = vpop.permute.xlu0 %860
    %864 = vset.pattern.permute.xlu0 0
    %865 = vperm.xlu0 %864, %v731
    %v866 = vpop.permute.xlu0 %865
    %869 = vset.pattern.permute.xlu0 0
    %870 = vperm.xlu0 %869, %v732
    %v871 = vpop.permute.xlu0 %870
    %874 = vset.pattern.permute.xlu0 0
    %875 = vperm.xlu0 %874, %v733
    %v876 = vpop.permute.xlu0 %875
    %879 = vset.pattern.permute.xlu0 0
    %880 = vperm.xlu0 %879, %v734
    %v881 = vpop.permute.xlu0 %880
    %884 = vset.pattern.permute.xlu0 0
    %885 = vperm.xlu0 %884, %v735
    %v886 = vpop.permute.xlu0 %885
    %889 = vset.pattern.permute.xlu0 0
    %890 = vperm.xlu0 %889, %v736
    %v891 = vpop.permute.xlu0 %890
    %894 = vset.pattern.permute.xlu0 0
    %895 = vperm.xlu0 %894, %v737
    %v896 = vpop.permute.xlu0 %895
    %898 = vmatpush.msra.mxu0 %v625
    %899 = vmatpush.msra.mxu0 %v624
    %900 = vmatpush.msra.mxu0 %v623
    %901 = vmatpush.msra.mxu0 %v622
    %902 = vmatpush.msra.mxu0 %v621
    %903 = vmatpush.msra.mxu0 %v620
    %904 = vmatpush.msra.mxu0 %v619
    %905 = vmatpush.msra.mxu0 %v618
    %906 = vmatpush.msra.mxu0 %v617
    %907 = vmatpush.msra.mxu0 %v616
    %908 = vmatpush.msra.mxu0 %v615
    %909 = vmatpush.msra.mxu0 %v614
    %910 = vmatpush.msra.mxu0 %v613
    %911 = vmatpush.msra.mxu0 %v612
    %912 = vmatpush.msra.mxu0 %v611
    %913 = vmatpush.msra.mxu0 %v610
    %914 = vmatmul.f32.gmra.mxu0 %v642
    %v915 = vpop.f32.mrf.mxu0
    %v916 = vadd.f32 %v741, %v915
    %917 = vmatmul.f32.gmra.mxu0 %v644
    %v918 = vpop.f32.mrf.mxu0
    %v919 = vadd.f32 %v746, %v918
    %920 = vmatmul.f32.gmra.mxu0 %v646
    %v921 = vpop.f32.mrf.mxu0
    %v922 = vadd.f32 %v751, %v921
    %923 = vmatmul.f32.gmra.mxu0 %v648
    %v924 = vpop.f32.mrf.mxu0
    %v925 = vadd.f32 %v756, %v924
    %926 = vmatmul.f32.gmra.mxu0 %v650
    %v927 = vpop.f32.mrf.mxu0
    %v928 = vadd.f32 %v761, %v927
    %929 = vmatmul.f32.gmra.mxu0 %v652
    %v930 = vpop.f32.mrf.mxu0
    %v931 = vadd.f32 %v766, %v930
    %932 = vmatmul.f32.gmra.mxu0 %v654
    %v933 = vpop.f32.mrf.mxu0
    %v934 = vadd.f32 %v771, %v933
    %935 = vmatmul.f32.gmra.mxu0 %v656
    %v936 = vpop.f32.mrf.mxu0
    %v937 = vadd.f32 %v776, %v936
    %938 = vmatmul.f32.gmra.mxu0 %v658
    %v939 = vpop.f32.mrf.mxu0
    %v940 = vadd.f32 %v781, %v939
    %941 = vmatmul.f32.gmra.mxu0 %v660
    %v942 = vpop.f32.mrf.mxu0
    %v943 = vadd.f32 %v786, %v942
    %944 = vmatmul.f32.gmra.mxu0 %v662
    %v945 = vpop.f32.mrf.mxu0
    %v946 = vadd.f32 %v791, %v945
    %947 = vmatmul.f32.gmra.mxu0 %v664
    %v948 = vpop.f32.mrf.mxu0
    %v949 = vadd.f32 %v796, %v948
    %950 = vmatmul.f32.gmra.mxu0 %v666
    %v951 = vpop.f32.mrf.mxu0
    %v952 = vadd.f32 %v801, %v951
    %953 = vmatmul.f32.gmra.mxu0 %v668
    %v954 = vpop.f32.mrf.mxu0
    %v955 = vadd.f32 %v806, %v954
    %956 = vmatmul.f32.gmra.mxu0 %v670
    %v957 = vpop.f32.mrf.mxu0
    %v958 = vadd.f32 %v811, %v957
    %959 = vmatmul.f32.gmra.mxu0 %v672
    %v960 = vpop.f32.mrf.mxu0
    %v961 = vadd.f32 %v816, %v960
    %962 = vmatmul.f32.gmra.mxu0 %v674
    %v963 = vpop.f32.mrf.mxu0
    %v964 = vadd.f32 %v821, %v963
    %965 = vmatmul.f32.gmra.mxu0 %v676
    %v966 = vpop.f32.mrf.mxu0
    %v967 = vadd.f32 %v826, %v966
    %968 = vmatmul.f32.gmra.mxu0 %v678
    %v969 = vpop.f32.mrf.mxu0
    %v970 = vadd.f32 %v831, %v969
    %971 = vmatmul.f32.gmra.mxu0 %v680
    %v972 = vpop.f32.mrf.mxu0
    %v973 = vadd.f32 %v836, %v972
    %974 = vmatmul.f32.gmra.mxu0 %v682
    %v975 = vpop.f32.mrf.mxu0
    %v976 = vadd.f32 %v841, %v975
    %977 = vmatmul.f32.gmra.mxu0 %v684
    %v978 = vpop.f32.mrf.mxu0
    %v979 = vadd.f32 %v846, %v978
    %980 = vmatmul.f32.gmra.mxu0 %v686
    %v981 = vpop.f32.mrf.mxu0
    %v982 = vadd.f32 %v851, %v981
    %983 = vmatmul.f32.gmra.mxu0 %v688
    %v984 = vpop.f32.mrf.mxu0
    %v985 = vadd.f32 %v856, %v984
    %986 = vmatmul.f32.gmra.mxu0 %v690
    %v987 = vpop.f32.mrf.mxu0
    %v988 = vadd.f32 %v861, %v987
    %989 = vmatmul.f32.gmra.mxu0 %v692
    %v990 = vpop.f32.mrf.mxu0
    %v991 = vadd.f32 %v866, %v990
    %992 = vmatmul.f32.gmra.mxu0 %v694
    %v993 = vpop.f32.mrf.mxu0
    %v994 = vadd.f32 %v871, %v993
    %995 = vmatmul.f32.gmra.mxu0 %v696
    %v996 = vpop.f32.mrf.mxu0
    %v997 = vadd.f32 %v876, %v996
    %998 = vmatmul.f32.gmra.mxu0 %v698
    %v999 = vpop.f32.mrf.mxu0
    %v1000 = vadd.f32 %v881, %v999
    %1001 = vmatmul.f32.gmra.mxu0 %v700
    %v1002 = vpop.f32.mrf.mxu0
    %v1003 = vadd.f32 %v886, %v1002
    %1004 = vmatmul.f32.gmra.mxu0 %v702
    %v1005 = vpop.f32.mrf.mxu0
    %v1006 = vadd.f32 %v891, %v1005
    %1007 = vmatmul.f32.gmra.mxu0 %v704
    %v1008 = vpop.f32.mrf.mxu0
    %v1009 = vadd.f32 %v896, %v1008
    %1010 = vdwg.mxu0
    %1011 = vmatpush.msra.mxu0 %v641
    %1012 = vmatpush.msra.mxu0 %v640
    %1013 = vmatpush.msra.mxu0 %v639
    %1014 = vmatpush.msra.mxu0 %v638
    %1015 = vmatpush.msra.mxu0 %v637
    %1016 = vmatpush.msra.mxu0 %v636
    %1017 = vmatpush.msra.mxu0 %v635
    %1018 = vmatpush.msra.mxu0 %v634
    %1019 = vmatpush.msra.mxu0 %v633
    %1020 = vmatpush.msra.mxu0 %v632
    %1021 = vmatpush.msra.mxu0 %v631
    %1022 = vmatpush.msra.mxu0 %v630
    %1023 = vmatpush.msra.mxu0 %v629
    %1024 = vmatpush.msra.mxu0 %v628
    %1025 = vmatpush.msra.mxu0 %v627
    %1026 = vmatpush.msra.mxu0 %v626
    %1027 = vmatmul.f32.gmra.mxu0 %v643
    %v1028 = vpop.f32.mrf.mxu0
    %v1029 = vadd.f32 %v916, %v1028
    %1030 = vmatmul.f32.gmra.mxu0 %v645
    %v1031 = vpop.f32.mrf.mxu0
    %v1032 = vadd.f32 %v919, %v1031
    %1033 = vmatmul.f32.gmra.mxu0 %v647
    %v1034 = vpop.f32.mrf.mxu0
    %v1035 = vadd.f32 %v922, %v1034
    %1036 = vmatmul.f32.gmra.mxu0 %v649
    %v1037 = vpop.f32.mrf.mxu0
    %v1038 = vadd.f32 %v925, %v1037
    %1039 = vmatmul.f32.gmra.mxu0 %v651
    %v1040 = vpop.f32.mrf.mxu0
    %v1041 = vadd.f32 %v928, %v1040
    %1042 = vmatmul.f32.gmra.mxu0 %v653
    %v1043 = vpop.f32.mrf.mxu0
    %v1044 = vadd.f32 %v931, %v1043
    %1045 = vmatmul.f32.gmra.mxu0 %v655
    %v1046 = vpop.f32.mrf.mxu0
    %v1047 = vadd.f32 %v934, %v1046
    %1048 = vmatmul.f32.gmra.mxu0 %v657
    %v1049 = vpop.f32.mrf.mxu0
    %v1050 = vadd.f32 %v937, %v1049
    %1051 = vmatmul.f32.gmra.mxu0 %v659
    %v1052 = vpop.f32.mrf.mxu0
    %v1053 = vadd.f32 %v940, %v1052
    %1054 = vmatmul.f32.gmra.mxu0 %v661
    %v1055 = vpop.f32.mrf.mxu0
    %v1056 = vadd.f32 %v943, %v1055
    %1057 = vmatmul.f32.gmra.mxu0 %v663
    %v1058 = vpop.f32.mrf.mxu0
    %v1059 = vadd.f32 %v946, %v1058
    %1060 = vmatmul.f32.gmra.mxu0 %v665
    %v1061 = vpop.f32.mrf.mxu0
    %v1062 = vadd.f32 %v949, %v1061
    %1063 = vmatmul.f32.gmra.mxu0 %v667
    %v1064 = vpop.f32.mrf.mxu0
    %v1065 = vadd.f32 %v952, %v1064
    %1066 = vmatmul.f32.gmra.mxu0 %v669
    %v1067 = vpop.f32.mrf.mxu0
    %v1068 = vadd.f32 %v955, %v1067
    %1069 = vmatmul.f32.gmra.mxu0 %v671
    %v1070 = vpop.f32.mrf.mxu0
    %v1071 = vadd.f32 %v958, %v1070
    %1072 = vmatmul.f32.gmra.mxu0 %v673
    %v1073 = vpop.f32.mrf.mxu0
    %v1074 = vadd.f32 %v961, %v1073
    %1075 = vmatmul.f32.gmra.mxu0 %v675
    %v1076 = vpop.f32.mrf.mxu0
    %v1077 = vadd.f32 %v964, %v1076
    %1078 = vmatmul.f32.gmra.mxu0 %v677
    %v1079 = vpop.f32.mrf.mxu0
    %v1080 = vadd.f32 %v967, %v1079
    %1081 = vmatmul.f32.gmra.mxu0 %v679
    %v1082 = vpop.f32.mrf.mxu0
    %v1083 = vadd.f32 %v970, %v1082
    %1084 = vmatmul.f32.gmra.mxu0 %v681
    %v1085 = vpop.f32.mrf.mxu0
    %v1086 = vadd.f32 %v973, %v1085
    %1087 = vmatmul.f32.gmra.mxu0 %v683
    %v1088 = vpop.f32.mrf.mxu0
    %v1089 = vadd.f32 %v976, %v1088
    %1090 = vmatmul.f32.gmra.mxu0 %v685
    %v1091 = vpop.f32.mrf.mxu0
    %v1092 = vadd.f32 %v979, %v1091
    %1093 = vmatmul.f32.gmra.mxu0 %v687
    %v1094 = vpop.f32.mrf.mxu0
    %v1095 = vadd.f32 %v982, %v1094
    %1096 = vmatmul.f32.gmra.mxu0 %v689
    %v1097 = vpop.f32.mrf.mxu0
    %v1098 = vadd.f32 %v985, %v1097
    %1099 = vmatmul.f32.gmra.mxu0 %v691
    %v1100 = vpop.f32.mrf.mxu0
    %v1101 = vadd.f32 %v988, %v1100
    %1102 = vmatmul.f32.gmra.mxu0 %v693
    %v1103 = vpop.f32.mrf.mxu0
    %v1104 = vadd.f32 %v991, %v1103
    %1105 = vmatmul.f32.gmra.mxu0 %v695
    %v1106 = vpop.f32.mrf.mxu0
    %v1107 = vadd.f32 %v994, %v1106
    %1108 = vmatmul.f32.gmra.mxu0 %v697
    %v1109 = vpop.f32.mrf.mxu0
    %v1110 = vadd.f32 %v997, %v1109
    %1111 = vmatmul.f32.gmra.mxu0 %v699
    %v1112 = vpop.f32.mrf.mxu0
    %v1113 = vadd.f32 %v1000, %v1112
    %1114 = vmatmul.f32.gmra.mxu0 %v701
    %v1115 = vpop.f32.mrf.mxu0
    %v1116 = vadd.f32 %v1003, %v1115
    %1117 = vmatmul.f32.gmra.mxu0 %v703
    %v1118 = vpop.f32.mrf.mxu0
    %v1119 = vadd.f32 %v1006, %v1118
    %1120 = vmatmul.f32.gmra.mxu0 %v705
    %v1121 = vpop.f32.mrf.mxu0
    %v1122 = vadd.f32 %v1009, %v1121
    %1123 = vdwg.mxu0
    %v1124 = vmax.f32 %v1029, 0.0
    %v1125 = vmax.f32 %v1032, 0.0
    %v1126 = vmax.f32 %v1035, 0.0
    %v1127 = vmax.f32 %v1038, 0.0
    %v1128 = vmax.f32 %v1041, 0.0
    %v1129 = vmax.f32 %v1044, 0.0
    %v1130 = vmax.f32 %v1047, 0.0
    %v1131 = vmax.f32 %v1050, 0.0
    %v1132 = vmax.f32 %v1053, 0.0
    %v1133 = vmax.f32 %v1056, 0.0
    %v1134 = vmax.f32 %v1059, 0.0
    %v1135 = vmax.f32 %v1062, 0.0
    %v1136 = vmax.f32 %v1065, 0.0
    %v1137 = vmax.f32 %v1068, 0.0
    %v1138 = vmax.f32 %v1071, 0.0
    %v1139 = vmax.f32 %v1074, 0.0
    %v1140 = vmax.f32 %v1077, 0.0
    %v1141 = vmax.f32 %v1080, 0.0
    %v1142 = vmax.f32 %v1083, 0.0
    %v1143 = vmax.f32 %v1086, 0.0
    %v1144 = vmax.f32 %v1089, 0.0
    %v1145 = vmax.f32 %v1092, 0.0
    %v1146 = vmax.f32 %v1095, 0.0
    %v1147 = vmax.f32 %v1098, 0.0
    %v1148 = vmax.f32 %v1101, 0.0
    %v1149 = vmax.f32 %v1104, 0.0
    %v1150 = vmax.f32 %v1107, 0.0
    %v1151 = vmax.f32 %v1110, 0.0
    %v1152 = vmax.f32 %v1113, 0.0
    %v1153 = vmax.f32 %v1116, 0.0
    %v1154 = vmax.f32 %v1119, 0.0
    %v1155 = vmax.f32 %v1122, 0.0
    %s1156 = scalar_lea.vmem [#allocation10], 512
    %v1157 = vld [vmem:[%s1156] sm:$0xff]
    %v1158 = vld [vmem:[%s1156 + $0x8] sm:$0xff]
    %v1159 = vld [vmem:[%s1156 + $0x10] sm:$0xff]
    %v1160 = vld [vmem:[%s1156 + $0x18] sm:$0xff]
    %v1161 = vld [vmem:[%s1156 + $0x20] sm:$0xff]
    %v1162 = vld [vmem:[%s1156 + $0x28] sm:$0xff]
    %v1163 = vld [vmem:[%s1156 + $0x30] sm:$0xff]
    %v1164 = vld [vmem:[%s1156 + $0x38] sm:$0xff]
    %v1165 = vld [vmem:[%s1156 + $0x40] sm:$0xff]
    %v1166 = vld [vmem:[%s1156 + $0x48] sm:$0xff]
    %v1167 = vld [vmem:[%s1156 + $0x50] sm:$0xff]
    %v1168 = vld [vmem:[%s1156 + $0x58] sm:$0xff]
    %v1169 = vld [vmem:[%s1156 + $0x60] sm:$0xff]
    %v1170 = vld [vmem:[%s1156 + $0x68] sm:$0xff]
    %v1171 = vld [vmem:[%s1156 + $0x70] sm:$0xff]
    %v1172 = vld [vmem:[%s1156 + $0x78] sm:$0xff]
    %v1173 = vld [vmem:[%s1156 + $0x80] sm:$0xff]
    %v1174 = vld [vmem:[%s1156 + $0x88] sm:$0xff]
    %v1175 = vld [vmem:[%s1156 + $0x90] sm:$0xff]
    %v1176 = vld [vmem:[%s1156 + $0x98] sm:$0xff]
    %v1177 = vld [vmem:[%s1156 + $0xa0] sm:$0xff]
    %v1178 = vld [vmem:[%s1156 + $0xa8] sm:$0xff]
    %v1179 = vld [vmem:[%s1156 + $0xb0] sm:$0xff]
    %v1180 = vld [vmem:[%s1156 + $0xb8] sm:$0xff]
    %v1181 = vld [vmem:[%s1156 + $0xc0] sm:$0xff]
    %v1182 = vld [vmem:[%s1156 + $0xc8] sm:$0xff]
    %v1183 = vld [vmem:[%s1156 + $0xd0] sm:$0xff]
    %v1184 = vld [vmem:[%s1156 + $0xd8] sm:$0xff]
    %v1185 = vld [vmem:[%s1156 + $0xe0] sm:$0xff]
    %v1186 = vld [vmem:[%s1156 + $0xe8] sm:$0xff]
    %v1187 = vld [vmem:[%s1156 + $0xf0] sm:$0xff]
    %v1188 = vld [vmem:[%s1156 + $0xf8] sm:$0xff]
    %v1189 = vld [vmem:[%s1156 + $0x100] sm:$0xff]
    %v1190 = vld [vmem:[%s1156 + $0x108] sm:$0xff]
    %v1191 = vld [vmem:[%s1156 + $0x110] sm:$0xff]
    %v1192 = vld [vmem:[%s1156 + $0x118] sm:$0xff]
    %v1193 = vld [vmem:[%s1156 + $0x120] sm:$0xff]
    %v1194 = vld [vmem:[%s1156 + $0x128] sm:$0xff]
    %v1195 = vld [vmem:[%s1156 + $0x130] sm:$0xff]
    %v1196 = vld [vmem:[%s1156 + $0x138] sm:$0xff]
    %v1197 = vld [vmem:[%s1156 + $0x140] sm:$0xff]
    %v1198 = vld [vmem:[%s1156 + $0x148] sm:$0xff]
    %v1199 = vld [vmem:[%s1156 + $0x150] sm:$0xff]
    %v1200 = vld [vmem:[%s1156 + $0x158] sm:$0xff]
    %v1201 = vld [vmem:[%s1156 + $0x160] sm:$0xff]
    %v1202 = vld [vmem:[%s1156 + $0x168] sm:$0xff]
    %v1203 = vld [vmem:[%s1156 + $0x170] sm:$0xff]
    %v1204 = vld [vmem:[%s1156 + $0x178] sm:$0xff]
    %v1205 = vld [vmem:[%s1156 + $0x180] sm:$0xff]
    %v1206 = vld [vmem:[%s1156 + $0x188] sm:$0xff]
    %v1207 = vld [vmem:[%s1156 + $0x190] sm:$0xff]
    %v1208 = vld [vmem:[%s1156 + $0x198] sm:$0xff]
    %v1209 = vld [vmem:[%s1156 + $0x1a0] sm:$0xff]
    %v1210 = vld [vmem:[%s1156 + $0x1a8] sm:$0xff]
    %v1211 = vld [vmem:[%s1156 + $0x1b0] sm:$0xff]
    %v1212 = vld [vmem:[%s1156 + $0x1b8] sm:$0xff]
    %v1213 = vld [vmem:[%s1156 + $0x1c0] sm:$0xff]
    %v1214 = vld [vmem:[%s1156 + $0x1c8] sm:$0xff]
    %v1215 = vld [vmem:[%s1156 + $0x1d0] sm:$0xff]
    %v1216 = vld [vmem:[%s1156 + $0x1d8] sm:$0xff]
    %v1217 = vld [vmem:[%s1156 + $0x1e0] sm:$0xff]
    %v1218 = vld [vmem:[%s1156 + $0x1e8] sm:$0xff]
    %v1219 = vld [vmem:[%s1156 + $0x1f0] sm:$0xff]
    %v1220 = vld [vmem:[%s1156 + $0x1f8] sm:$0xff]
    %s1221 = scalar_lea.vmem %s8, 256
    %v1222 = vld [vmem:[%s1221] sm:$0xff]
    %v1223 = vld [vmem:[%s1221 + $0x8] sm:$0xff]
    %v1224 = vld [vmem:[%s1221 + $0x10] sm:$0xff]
    %v1225 = vld [vmem:[%s1221 + $0x18] sm:$0xff]
    %v1226 = vld [vmem:[%s1221 + $0x20] sm:$0xff]
    %v1227 = vld [vmem:[%s1221 + $0x28] sm:$0xff]
    %v1228 = vld [vmem:[%s1221 + $0x30] sm:$0xff]
    %v1229 = vld [vmem:[%s1221 + $0x38] sm:$0xff]
    %v1230 = vld [vmem:[%s1221 + $0x40] sm:$0xff]
    %v1231 = vld [vmem:[%s1221 + $0x48] sm:$0xff]
    %v1232 = vld [vmem:[%s1221 + $0x50] sm:$0xff]
    %v1233 = vld [vmem:[%s1221 + $0x58] sm:$0xff]
    %v1234 = vld [vmem:[%s1221 + $0x60] sm:$0xff]
    %v1235 = vld [vmem:[%s1221 + $0x68] sm:$0xff]
    %v1236 = vld [vmem:[%s1221 + $0x70] sm:$0xff]
    %v1237 = vld [vmem:[%s1221 + $0x78] sm:$0xff]
    %v1238 = vld [vmem:[%s1221 + $0x80] sm:$0xff]
    %v1239 = vld [vmem:[%s1221 + $0x88] sm:$0xff]
    %v1240 = vld [vmem:[%s1221 + $0x90] sm:$0xff]
    %v1241 = vld [vmem:[%s1221 + $0x98] sm:$0xff]
    %v1242 = vld [vmem:[%s1221 + $0xa0] sm:$0xff]
    %v1243 = vld [vmem:[%s1221 + $0xa8] sm:$0xff]
    %v1244 = vld [vmem:[%s1221 + $0xb0] sm:$0xff]
    %v1245 = vld [vmem:[%s1221 + $0xb8] sm:$0xff]
    %v1246 = vld [vmem:[%s1221 + $0xc0] sm:$0xff]
    %v1247 = vld [vmem:[%s1221 + $0xc8] sm:$0xff]
    %v1248 = vld [vmem:[%s1221 + $0xd0] sm:$0xff]
    %v1249 = vld [vmem:[%s1221 + $0xd8] sm:$0xff]
    %v1250 = vld [vmem:[%s1221 + $0xe0] sm:$0xff]
    %v1251 = vld [vmem:[%s1221 + $0xe8] sm:$0xff]
    %v1252 = vld [vmem:[%s1221 + $0xf0] sm:$0xff]
    %v1253 = vld [vmem:[%s1221 + $0xf8] sm:$0xff]
    %1255 = vset.pattern.permute.xlu0 0
    %1256 = vperm.xlu0 %1255, %v1222
    %v1257 = vpop.permute.xlu0 %1256
    %1260 = vset.pattern.permute.xlu0 0
    %1261 = vperm.xlu0 %1260, %v1223
    %v1262 = vpop.permute.xlu0 %1261
    %1265 = vset.pattern.permute.xlu0 0
    %1266 = vperm.xlu0 %1265, %v1224
    %v1267 = vpop.permute.xlu0 %1266
    %1270 = vset.pattern.permute.xlu0 0
    %1271 = vperm.xlu0 %1270, %v1225
    %v1272 = vpop.permute.xlu0 %1271
    %1275 = vset.pattern.permute.xlu0 0
    %1276 = vperm.xlu0 %1275, %v1226
    %v1277 = vpop.permute.xlu0 %1276
    %1280 = vset.pattern.permute.xlu0 0
    %1281 = vperm.xlu0 %1280, %v1227
    %v1282 = vpop.permute.xlu0 %1281
    %1285 = vset.pattern.permute.xlu0 0
    %1286 = vperm.xlu0 %1285, %v1228
    %v1287 = vpop.permute.xlu0 %1286
    %1290 = vset.pattern.permute.xlu0 0
    %1291 = vperm.xlu0 %1290, %v1229
    %v1292 = vpop.permute.xlu0 %1291
    %1295 = vset.pattern.permute.xlu0 0
    %1296 = vperm.xlu0 %1295, %v1230
    %v1297 = vpop.permute.xlu0 %1296
    %1300 = vset.pattern.permute.xlu0 0
    %1301 = vperm.xlu0 %1300, %v1231
    %v1302 = vpop.permute.xlu0 %1301
    %1305 = vset.pattern.permute.xlu0 0
    %1306 = vperm.xlu0 %1305, %v1232
    %v1307 = vpop.permute.xlu0 %1306
    %1310 = vset.pattern.permute.xlu0 0
    %1311 = vperm.xlu0 %1310, %v1233
    %v1312 = vpop.permute.xlu0 %1311
    %1315 = vset.pattern.permute.xlu0 0
    %1316 = vperm.xlu0 %1315, %v1234
    %v1317 = vpop.permute.xlu0 %1316
    %1320 = vset.pattern.permute.xlu0 0
    %1321 = vperm.xlu0 %1320, %v1235
    %v1322 = vpop.permute.xlu0 %1321
    %1325 = vset.pattern.permute.xlu0 0
    %1326 = vperm.xlu0 %1325, %v1236
    %v1327 = vpop.permute.xlu0 %1326
    %1330 = vset.pattern.permute.xlu0 0
    %1331 = vperm.xlu0 %1330, %v1237
    %v1332 = vpop.permute.xlu0 %1331
    %1335 = vset.pattern.permute.xlu0 0
    %1336 = vperm.xlu0 %1335, %v1238
    %v1337 = vpop.permute.xlu0 %1336
    %1340 = vset.pattern.permute.xlu0 0
    %1341 = vperm.xlu0 %1340, %v1239
    %v1342 = vpop.permute.xlu0 %1341
    %1345 = vset.pattern.permute.xlu0 0
    %1346 = vperm.xlu0 %1345, %v1240
    %v1347 = vpop.permute.xlu0 %1346
    %1350 = vset.pattern.permute.xlu0 0
    %1351 = vperm.xlu0 %1350, %v1241
    %v1352 = vpop.permute.xlu0 %1351
    %1355 = vset.pattern.permute.xlu0 0
    %1356 = vperm.xlu0 %1355, %v1242
    %v1357 = vpop.permute.xlu0 %1356
    %1360 = vset.pattern.permute.xlu0 0
    %1361 = vperm.xlu0 %1360, %v1243
    %v1362 = vpop.permute.xlu0 %1361
    %1365 = vset.pattern.permute.xlu0 0
    %1366 = vperm.xlu0 %1365, %v1244
    %v1367 = vpop.permute.xlu0 %1366
    %1370 = vset.pattern.permute.xlu0 0
    %1371 = vperm.xlu0 %1370, %v1245
    %v1372 = vpop.permute.xlu0 %1371
    %1375 = vset.pattern.permute.xlu0 0
    %1376 = vperm.xlu0 %1375, %v1246
    %v1377 = vpop.permute.xlu0 %1376
    %1380 = vset.pattern.permute.xlu0 0
    %1381 = vperm.xlu0 %1380, %v1247
    %v1382 = vpop.permute.xlu0 %1381
    %1385 = vset.pattern.permute.xlu0 0
    %1386 = vperm.xlu0 %1385, %v1248
    %v1387 = vpop.permute.xlu0 %1386
    %1390 = vset.pattern.permute.xlu0 0
    %1391 = vperm.xlu0 %1390, %v1249
    %v1392 = vpop.permute.xlu0 %1391
    %1395 = vset.pattern.permute.xlu0 0
    %1396 = vperm.xlu0 %1395, %v1250
    %v1397 = vpop.permute.xlu0 %1396
    %1400 = vset.pattern.permute.xlu0 0
    %1401 = vperm.xlu0 %1400, %v1251
    %v1402 = vpop.permute.xlu0 %1401
    %1405 = vset.pattern.permute.xlu0 0
    %1406 = vperm.xlu0 %1405, %v1252
    %v1407 = vpop.permute.xlu0 %1406
    %1410 = vset.pattern.permute.xlu0 0
    %1411 = vperm.xlu0 %1410, %v1253
    %v1412 = vpop.permute.xlu0 %1411
    %1414 = vmatpush.msra.mxu0 %v1139
    %1415 = vmatpush.msra.mxu0 %v1138
    %1416 = vmatpush.msra.mxu0 %v1137
    %1417 = vmatpush.msra.mxu0 %v1136
    %1418 = vmatpush.msra.mxu0 %v1135
    %1419 = vmatpush.msra.mxu0 %v1134
    %1420 = vmatpush.msra.mxu0 %v1133
    %1421 = vmatpush.msra.mxu0 %v1132
    %1422 = vmatpush.msra.mxu0 %v1131
    %1423 = vmatpush.msra.mxu0 %v1130
    %1424 = vmatpush.msra.mxu0 %v1129
    %1425 = vmatpush.msra.mxu0 %v1128
    %1426 = vmatpush.msra.mxu0 %v1127
    %1427 = vmatpush.msra.mxu0 %v1126
    %1428 = vmatpush.msra.mxu0 %v1125
    %1429 = vmatpush.msra.mxu0 %v1124
    %1430 = vmatmul.f32.gmra.mxu0 %v1157
    %v1431 = vpop.f32.mrf.mxu0
    %v1432 = vadd.f32 %v1257, %v1431
    %1433 = vmatmul.f32.gmra.mxu0 %v1159
    %v1434 = vpop.f32.mrf.mxu0
    %v1435 = vadd.f32 %v1262, %v1434
    %1436 = vmatmul.f32.gmra.mxu0 %v1161
    %v1437 = vpop.f32.mrf.mxu0
    %v1438 = vadd.f32 %v1267, %v1437
    %1439 = vmatmul.f32.gmra.mxu0 %v1163
    %v1440 = vpop.f32.mrf.mxu0
    %v1441 = vadd.f32 %v1272, %v1440
    %1442 = vmatmul.f32.gmra.mxu0 %v1165
    %v1443 = vpop.f32.mrf.mxu0
    %v1444 = vadd.f32 %v1277, %v1443
    %1445 = vmatmul.f32.gmra.mxu0 %v1167
    %v1446 = vpop.f32.mrf.mxu0
    %v1447 = vadd.f32 %v1282, %v1446
    %1448 = vmatmul.f32.gmra.mxu0 %v1169
    %v1449 = vpop.f32.mrf.mxu0
    %v1450 = vadd.f32 %v1287, %v1449
    %1451 = vmatmul.f32.gmra.mxu0 %v1171
    %v1452 = vpop.f32.mrf.mxu0
    %v1453 = vadd.f32 %v1292, %v1452
    %1454 = vmatmul.f32.gmra.mxu0 %v1173
    %v1455 = vpop.f32.mrf.mxu0
    %v1456 = vadd.f32 %v1297, %v1455
    %1457 = vmatmul.f32.gmra.mxu0 %v1175
    %v1458 = vpop.f32.mrf.mxu0
    %v1459 = vadd.f32 %v1302, %v1458
    %1460 = vmatmul.f32.gmra.mxu0 %v1177
    %v1461 = vpop.f32.mrf.mxu0
    %v1462 = vadd.f32 %v1307, %v1461
    %1463 = vmatmul.f32.gmra.mxu0 %v1179
    %v1464 = vpop.f32.mrf.mxu0
    %v1465 = vadd.f32 %v1312, %v1464
    %1466 = vmatmul.f32.gmra.mxu0 %v1181
    %v1467 = vpop.f32.mrf.mxu0
    %v1468 = vadd.f32 %v1317, %v1467
    %1469 = vmatmul.f32.gmra.mxu0 %v1183
    %v1470 = vpop.f32.mrf.mxu0
    %v1471 = vadd.f32 %v1322, %v1470
    %1472 = vmatmul.f32.gmra.mxu0 %v1185
    %v1473 = vpop.f32.mrf.mxu0
    %v1474 = vadd.f32 %v1327, %v1473
    %1475 = vmatmul.f32.gmra.mxu0 %v1187
    %v1476 = vpop.f32.mrf.mxu0
    %v1477 = vadd.f32 %v1332, %v1476
    %1478 = vmatmul.f32.gmra.mxu0 %v1189
    %v1479 = vpop.f32.mrf.mxu0
    %v1480 = vadd.f32 %v1337, %v1479
    %1481 = vmatmul.f32.gmra.mxu0 %v1191
    %v1482 = vpop.f32.mrf.mxu0
    %v1483 = vadd.f32 %v1342, %v1482
    %1484 = vmatmul.f32.gmra.mxu0 %v1193
    %v1485 = vpop.f32.mrf.mxu0
    %v1486 = vadd.f32 %v1347, %v1485
    %1487 = vmatmul.f32.gmra.mxu0 %v1195
    %v1488 = vpop.f32.mrf.mxu0
    %v1489 = vadd.f32 %v1352, %v1488
    %1490 = vmatmul.f32.gmra.mxu0 %v1197
    %v1491 = vpop.f32.mrf.mxu0
    %v1492 = vadd.f32 %v1357, %v1491
    %1493 = vmatmul.f32.gmra.mxu0 %v1199
    %v1494 = vpop.f32.mrf.mxu0
    %v1495 = vadd.f32 %v1362, %v1494
    %1496 = vmatmul.f32.gmra.mxu0 %v1201
    %v1497 = vpop.f32.mrf.mxu0
    %v1498 = vadd.f32 %v1367, %v1497
    %1499 = vmatmul.f32.gmra.mxu0 %v1203
    %v1500 = vpop.f32.mrf.mxu0
    %v1501 = vadd.f32 %v1372, %v1500
    %1502 = vmatmul.f32.gmra.mxu0 %v1205
    %v1503 = vpop.f32.mrf.mxu0
    %v1504 = vadd.f32 %v1377, %v1503
    %1505 = vmatmul.f32.gmra.mxu0 %v1207
    %v1506 = vpop.f32.mrf.mxu0
    %v1507 = vadd.f32 %v1382, %v1506
    %1508 = vmatmul.f32.gmra.mxu0 %v1209
    %v1509 = vpop.f32.mrf.mxu0
    %v1510 = vadd.f32 %v1387, %v1509
    %1511 = vmatmul.f32.gmra.mxu0 %v1211
    %v1512 = vpop.f32.mrf.mxu0
    %v1513 = vadd.f32 %v1392, %v1512
    %1514 = vmatmul.f32.gmra.mxu0 %v1213
    %v1515 = vpop.f32.mrf.mxu0
    %v1516 = vadd.f32 %v1397, %v1515
    %1517 = vmatmul.f32.gmra.mxu0 %v1215
    %v1518 = vpop.f32.mrf.mxu0
    %v1519 = vadd.f32 %v1402, %v1518
    %1520 = vmatmul.f32.gmra.mxu0 %v1217
    %v1521 = vpop.f32.mrf.mxu0
    %v1522 = vadd.f32 %v1407, %v1521
    %1523 = vmatmul.f32.gmra.mxu0 %v1219
    %v1524 = vpop.f32.mrf.mxu0
    %v1525 = vadd.f32 %v1412, %v1524
    %1526 = vdwg.mxu0
    %1527 = vmatpush.msra.mxu0 %v1155
    %1528 = vmatpush.msra.mxu0 %v1154
    %1529 = vmatpush.msra.mxu0 %v1153
    %1530 = vmatpush.msra.mxu0 %v1152
    %1531 = vmatpush.msra.mxu0 %v1151
    %1532 = vmatpush.msra.mxu0 %v1150
    %1533 = vmatpush.msra.mxu0 %v1149
    %1534 = vmatpush.msra.mxu0 %v1148
    %1535 = vmatpush.msra.mxu0 %v1147
    %1536 = vmatpush.msra.mxu0 %v1146
    %1537 = vmatpush.msra.mxu0 %v1145
    %1538 = vmatpush.msra.mxu0 %v1144
    %1539 = vmatpush.msra.mxu0 %v1143
    %1540 = vmatpush.msra.mxu0 %v1142
    %1541 = vmatpush.msra.mxu0 %v1141
    %1542 = vmatpush.msra.mxu0 %v1140
    %1543 = vmatmul.f32.gmra.mxu0 %v1158
    %v1544 = vpop.f32.mrf.mxu0
    %v1545 = vadd.f32 %v1432, %v1544
    %1546 = vmatmul.f32.gmra.mxu0 %v1160
    %v1547 = vpop.f32.mrf.mxu0
    %v1548 = vadd.f32 %v1435, %v1547
    %1549 = vmatmul.f32.gmra.mxu0 %v1162
    %v1550 = vpop.f32.mrf.mxu0
    %v1551 = vadd.f32 %v1438, %v1550
    %1552 = vmatmul.f32.gmra.mxu0 %v1164
    %v1553 = vpop.f32.mrf.mxu0
    %v1554 = vadd.f32 %v1441, %v1553
    %1555 = vmatmul.f32.gmra.mxu0 %v1166
    %v1556 = vpop.f32.mrf.mxu0
    %v1557 = vadd.f32 %v1444, %v1556
    %1558 = vmatmul.f32.gmra.mxu0 %v1168
    %v1559 = vpop.f32.mrf.mxu0
    %v1560 = vadd.f32 %v1447, %v1559
    %1561 = vmatmul.f32.gmra.mxu0 %v1170
    %v1562 = vpop.f32.mrf.mxu0
    %v1563 = vadd.f32 %v1450, %v1562
    %1564 = vmatmul.f32.gmra.mxu0 %v1172
    %v1565 = vpop.f32.mrf.mxu0
    %v1566 = vadd.f32 %v1453, %v1565
    %1567 = vmatmul.f32.gmra.mxu0 %v1174
    %v1568 = vpop.f32.mrf.mxu0
    %v1569 = vadd.f32 %v1456, %v1568
    %1570 = vmatmul.f32.gmra.mxu0 %v1176
    %v1571 = vpop.f32.mrf.mxu0
    %v1572 = vadd.f32 %v1459, %v1571
    %1573 = vmatmul.f32.gmra.mxu0 %v1178
    %v1574 = vpop.f32.mrf.mxu0
    %v1575 = vadd.f32 %v1462, %v1574
    %1576 = vmatmul.f32.gmra.mxu0 %v1180
    %v1577 = vpop.f32.mrf.mxu0
    %v1578 = vadd.f32 %v1465, %v1577
    %1579 = vmatmul.f32.gmra.mxu0 %v1182
    %v1580 = vpop.f32.mrf.mxu0
    %v1581 = vadd.f32 %v1468, %v1580
    %1582 = vmatmul.f32.gmra.mxu0 %v1184
    %v1583 = vpop.f32.mrf.mxu0
    %v1584 = vadd.f32 %v1471, %v1583
    %1585 = vmatmul.f32.gmra.mxu0 %v1186
    %v1586 = vpop.f32.mrf.mxu0
    %v1587 = vadd.f32 %v1474, %v1586
    %1588 = vmatmul.f32.gmra.mxu0 %v1188
    %v1589 = vpop.f32.mrf.mxu0
    %v1590 = vadd.f32 %v1477, %v1589
    %1591 = vmatmul.f32.gmra.mxu0 %v1190
    %v1592 = vpop.f32.mrf.mxu0
    %v1593 = vadd.f32 %v1480, %v1592
    %1594 = vmatmul.f32.gmra.mxu0 %v1192
    %v1595 = vpop.f32.mrf.mxu0
    %v1596 = vadd.f32 %v1483, %v1595
    %1597 = vmatmul.f32.gmra.mxu0 %v1194
    %v1598 = vpop.f32.mrf.mxu0
    %v1599 = vadd.f32 %v1486, %v1598
    %1600 = vmatmul.f32.gmra.mxu0 %v1196
    %v1601 = vpop.f32.mrf.mxu0
    %v1602 = vadd.f32 %v1489, %v1601
    %1603 = vmatmul.f32.gmra.mxu0 %v1198
    %v1604 = vpop.f32.mrf.mxu0
    %v1605 = vadd.f32 %v1492, %v1604
    %1606 = vmatmul.f32.gmra.mxu0 %v1200
    %v1607 = vpop.f32.mrf.mxu0
    %v1608 = vadd.f32 %v1495, %v1607
    %1609 = vmatmul.f32.gmra.mxu0 %v1202
    %v1610 = vpop.f32.mrf.mxu0
    %v1611 = vadd.f32 %v1498, %v1610
    %1612 = vmatmul.f32.gmra.mxu0 %v1204
    %v1613 = vpop.f32.mrf.mxu0
    %v1614 = vadd.f32 %v1501, %v1613
    %1615 = vmatmul.f32.gmra.mxu0 %v1206
    %v1616 = vpop.f32.mrf.mxu0
    %v1617 = vadd.f32 %v1504, %v1616
    %1618 = vmatmul.f32.gmra.mxu0 %v1208
    %v1619 = vpop.f32.mrf.mxu0
    %v1620 = vadd.f32 %v1507, %v1619
    %1621 = vmatmul.f32.gmra.mxu0 %v1210
    %v1622 = vpop.f32.mrf.mxu0
    %v1623 = vadd.f32 %v1510, %v1622
    %1624 = vmatmul.f32.gmra.mxu0 %v1212
    %v1625 = vpop.f32.mrf.mxu0
    %v1626 = vadd.f32 %v1513, %v1625
    %1627 = vmatmul.f32.gmra.mxu0 %v1214
    %v1628 = vpop.f32.mrf.mxu0
    %v1629 = vadd.f32 %v1516, %v1628
    %1630 = vmatmul.f32.gmra.mxu0 %v1216
    %v1631 = vpop.f32.mrf.mxu0
    %v1632 = vadd.f32 %v1519, %v1631
    %1633 = vmatmul.f32.gmra.mxu0 %v1218
    %v1634 = vpop.f32.mrf.mxu0
    %v1635 = vadd.f32 %v1522, %v1634
    %1636 = vmatmul.f32.gmra.mxu0 %v1220
    %v1637 = vpop.f32.mrf.mxu0
    %v1638 = vadd.f32 %v1525, %v1637
    %1639 = vdwg.mxu0
    %v1640 = vmax.f32 %v1545, 0.0
    %v1641 = vmax.f32 %v1548, 0.0
    %v1642 = vmax.f32 %v1551, 0.0
    %v1643 = vmax.f32 %v1554, 0.0
    %v1644 = vmax.f32 %v1557, 0.0
    %v1645 = vmax.f32 %v1560, 0.0
    %v1646 = vmax.f32 %v1563, 0.0
    %v1647 = vmax.f32 %v1566, 0.0
    %v1648 = vmax.f32 %v1569, 0.0
    %v1649 = vmax.f32 %v1572, 0.0
    %v1650 = vmax.f32 %v1575, 0.0
    %v1651 = vmax.f32 %v1578, 0.0
    %v1652 = vmax.f32 %v1581, 0.0
    %v1653 = vmax.f32 %v1584, 0.0
    %v1654 = vmax.f32 %v1587, 0.0
    %v1655 = vmax.f32 %v1590, 0.0
    %v1656 = vmax.f32 %v1593, 0.0
    %v1657 = vmax.f32 %v1596, 0.0
    %v1658 = vmax.f32 %v1599, 0.0
    %v1659 = vmax.f32 %v1602, 0.0
    %v1660 = vmax.f32 %v1605, 0.0
    %v1661 = vmax.f32 %v1608, 0.0
    %v1662 = vmax.f32 %v1611, 0.0
    %v1663 = vmax.f32 %v1614, 0.0
    %v1664 = vmax.f32 %v1617, 0.0
    %v1665 = vmax.f32 %v1620, 0.0
    %v1666 = vmax.f32 %v1623, 0.0
    %v1667 = vmax.f32 %v1626, 0.0
    %v1668 = vmax.f32 %v1629, 0.0
    %v1669 = vmax.f32 %v1632, 0.0
    %v1670 = vmax.f32 %v1635, 0.0
    %v1671 = vmax.f32 %v1638, 0.0
    %s1672 = scalar_lea.vmem [#allocation10], 1024
    %v1673 = vld [vmem:[%s1672] sm:$0xff]
    %v1674 = vld [vmem:[%s1672 + $0x8] sm:$0xff]
    %v1675 = vld [vmem:[%s1672 + $0x10] sm:$0xff]
    %v1676 = vld [vmem:[%s1672 + $0x18] sm:$0xff]
    %v1677 = vld [vmem:[%s1672 + $0x20] sm:$0xff]
    %v1678 = vld [vmem:[%s1672 + $0x28] sm:$0xff]
    %v1679 = vld [vmem:[%s1672 + $0x30] sm:$0xff]
    %v1680 = vld [vmem:[%s1672 + $0x38] sm:$0xff]
    %v1681 = vld [vmem:[%s1672 + $0x40] sm:$0xff]
    %v1682 = vld [vmem:[%s1672 + $0x48] sm:$0xff]
    %v1683 = vld [vmem:[%s1672 + $0x50] sm:$0xff]
    %v1684 = vld [vmem:[%s1672 + $0x58] sm:$0xff]
    %v1685 = vld [vmem:[%s1672 + $0x60] sm:$0xff]
    %v1686 = vld [vmem:[%s1672 + $0x68] sm:$0xff]
    %v1687 = vld [vmem:[%s1672 + $0x70] sm:$0xff]
    %v1688 = vld [vmem:[%s1672 + $0x78] sm:$0xff]
    %v1689 = vld [vmem:[%s1672 + $0x80] sm:$0xff]
    %v1690 = vld [vmem:[%s1672 + $0x88] sm:$0xff]
    %v1691 = vld [vmem:[%s1672 + $0x90] sm:$0xff]
    %v1692 = vld [vmem:[%s1672 + $0x98] sm:$0xff]
    %v1693 = vld [vmem:[%s1672 + $0xa0] sm:$0xff]
    %v1694 = vld [vmem:[%s1672 + $0xa8] sm:$0xff]
    %v1695 = vld [vmem:[%s1672 + $0xb0] sm:$0xff]
    %v1696 = vld [vmem:[%s1672 + $0xb8] sm:$0xff]
    %v1697 = vld [vmem:[%s1672 + $0xc0] sm:$0xff]
    %v1698 = vld [vmem:[%s1672 + $0xc8] sm:$0xff]
    %v1699 = vld [vmem:[%s1672 + $0xd0] sm:$0xff]
    %v1700 = vld [vmem:[%s1672 + $0xd8] sm:$0xff]
    %v1701 = vld [vmem:[%s1672 + $0xe0] sm:$0xff]
    %v1702 = vld [vmem:[%s1672 + $0xe8] sm:$0xff]
    %v1703 = vld [vmem:[%s1672 + $0xf0] sm:$0xff]
    %v1704 = vld [vmem:[%s1672 + $0xf8] sm:$0xff]
    %v1705 = vld [vmem:[%s1672 + $0x100] sm:$0xff]
    %v1706 = vld [vmem:[%s1672 + $0x108] sm:$0xff]
    %v1707 = vld [vmem:[%s1672 + $0x110] sm:$0xff]
    %v1708 = vld [vmem:[%s1672 + $0x118] sm:$0xff]
    %v1709 = vld [vmem:[%s1672 + $0x120] sm:$0xff]
    %v1710 = vld [vmem:[%s1672 + $0x128] sm:$0xff]
    %v1711 = vld [vmem:[%s1672 + $0x130] sm:$0xff]
    %v1712 = vld [vmem:[%s1672 + $0x138] sm:$0xff]
    %v1713 = vld [vmem:[%s1672 + $0x140] sm:$0xff]
    %v1714 = vld [vmem:[%s1672 + $0x148] sm:$0xff]
    %v1715 = vld [vmem:[%s1672 + $0x150] sm:$0xff]
    %v1716 = vld [vmem:[%s1672 + $0x158] sm:$0xff]
    %v1717 = vld [vmem:[%s1672 + $0x160] sm:$0xff]
    %v1718 = vld [vmem:[%s1672 + $0x168] sm:$0xff]
    %v1719 = vld [vmem:[%s1672 + $0x170] sm:$0xff]
    %v1720 = vld [vmem:[%s1672 + $0x178] sm:$0xff]
    %v1721 = vld [vmem:[%s1672 + $0x180] sm:$0xff]
    %v1722 = vld [vmem:[%s1672 + $0x188] sm:$0xff]
    %v1723 = vld [vmem:[%s1672 + $0x190] sm:$0xff]
    %v1724 = vld [vmem:[%s1672 + $0x198] sm:$0xff]
    %v1725 = vld [vmem:[%s1672 + $0x1a0] sm:$0xff]
    %v1726 = vld [vmem:[%s1672 + $0x1a8] sm:$0xff]
    %v1727 = vld [vmem:[%s1672 + $0x1b0] sm:$0xff]
    %v1728 = vld [vmem:[%s1672 + $0x1b8] sm:$0xff]
    %v1729 = vld [vmem:[%s1672 + $0x1c0] sm:$0xff]
    %v1730 = vld [vmem:[%s1672 + $0x1c8] sm:$0xff]
    %v1731 = vld [vmem:[%s1672 + $0x1d0] sm:$0xff]
    %v1732 = vld [vmem:[%s1672 + $0x1d8] sm:$0xff]
    %v1733 = vld [vmem:[%s1672 + $0x1e0] sm:$0xff]
    %v1734 = vld [vmem:[%s1672 + $0x1e8] sm:$0xff]
    %v1735 = vld [vmem:[%s1672 + $0x1f0] sm:$0xff]
    %v1736 = vld [vmem:[%s1672 + $0x1f8] sm:$0xff]
    %s1737 = scalar_lea.vmem %s8, 512
    %v1738 = vld [vmem:[%s1737] sm:$0xff]
    %v1739 = vld [vmem:[%s1737 + $0x8] sm:$0xff]
    %v1740 = vld [vmem:[%s1737 + $0x10] sm:$0xff]
    %v1741 = vld [vmem:[%s1737 + $0x18] sm:$0xff]
    %v1742 = vld [vmem:[%s1737 + $0x20] sm:$0xff]
    %v1743 = vld [vmem:[%s1737 + $0x28] sm:$0xff]
    %v1744 = vld [vmem:[%s1737 + $0x30] sm:$0xff]
    %v1745 = vld [vmem:[%s1737 + $0x38] sm:$0xff]
    %v1746 = vld [vmem:[%s1737 + $0x40] sm:$0xff]
    %v1747 = vld [vmem:[%s1737 + $0x48] sm:$0xff]
    %v1748 = vld [vmem:[%s1737 + $0x50] sm:$0xff]
    %v1749 = vld [vmem:[%s1737 + $0x58] sm:$0xff]
    %v1750 = vld [vmem:[%s1737 + $0x60] sm:$0xff]
    %v1751 = vld [vmem:[%s1737 + $0x68] sm:$0xff]
    %v1752 = vld [vmem:[%s1737 + $0x70] sm:$0xff]
    %v1753 = vld [vmem:[%s1737 + $0x78] sm:$0xff]
    %v1754 = vld [vmem:[%s1737 + $0x80] sm:$0xff]
    %v1755 = vld [vmem:[%s1737 + $0x88] sm:$0xff]
    %v1756 = vld [vmem:[%s1737 + $0x90] sm:$0xff]
    %v1757 = vld [vmem:[%s1737 + $0x98] sm:$0xff]
    %v1758 = vld [vmem:[%s1737 + $0xa0] sm:$0xff]
    %v1759 = vld [vmem:[%s1737 + $0xa8] sm:$0xff]
    %v1760 = vld [vmem:[%s1737 + $0xb0] sm:$0xff]
    %v1761 = vld [vmem:[%s1737 + $0xb8] sm:$0xff]
    %v1762 = vld [vmem:[%s1737 + $0xc0] sm:$0xff]
    %v1763 = vld [vmem:[%s1737 + $0xc8] sm:$0xff]
    %v1764 = vld [vmem:[%s1737 + $0xd0] sm:$0xff]
    %v1765 = vld [vmem:[%s1737 + $0xd8] sm:$0xff]
    %v1766 = vld [vmem:[%s1737 + $0xe0] sm:$0xff]
    %v1767 = vld [vmem:[%s1737 + $0xe8] sm:$0xff]
    %v1768 = vld [vmem:[%s1737 + $0xf0] sm:$0xff]
    %v1769 = vld [vmem:[%s1737 + $0xf8] sm:$0xff]
    %1771 = vset.pattern.permute.xlu0 0
    %1772 = vperm.xlu0 %1771, %v1738
    %v1773 = vpop.permute.xlu0 %1772
    %1776 = vset.pattern.permute.xlu0 0
    %1777 = vperm.xlu0 %1776, %v1739
    %v1778 = vpop.permute.xlu0 %1777
    %1781 = vset.pattern.permute.xlu0 0
    %1782 = vperm.xlu0 %1781, %v1740
    %v1783 = vpop.permute.xlu0 %1782
    %1786 = vset.pattern.permute.xlu0 0
    %1787 = vperm.xlu0 %1786, %v1741
    %v1788 = vpop.permute.xlu0 %1787
    %1791 = vset.pattern.permute.xlu0 0
    %1792 = vperm.xlu0 %1791, %v1742
    %v1793 = vpop.permute.xlu0 %1792
    %1796 = vset.pattern.permute.xlu0 0
    %1797 = vperm.xlu0 %1796, %v1743
    %v1798 = vpop.permute.xlu0 %1797
    %1801 = vset.pattern.permute.xlu0 0
    %1802 = vperm.xlu0 %1801, %v1744
    %v1803 = vpop.permute.xlu0 %1802
    %1806 = vset.pattern.permute.xlu0 0
    %1807 = vperm.xlu0 %1806, %v1745
    %v1808 = vpop.permute.xlu0 %1807
    %1811 = vset.pattern.permute.xlu0 0
    %1812 = vperm.xlu0 %1811, %v1746
    %v1813 = vpop.permute.xlu0 %1812
    %1816 = vset.pattern.permute.xlu0 0
    %1817 = vperm.xlu0 %1816, %v1747
    %v1818 = vpop.permute.xlu0 %1817
    %1821 = vset.pattern.permute.xlu0 0
    %1822 = vperm.xlu0 %1821, %v1748
    %v1823 = vpop.permute.xlu0 %1822
    %1826 = vset.pattern.permute.xlu0 0
    %1827 = vperm.xlu0 %1826, %v1749
    %v1828 = vpop.permute.xlu0 %1827
    %1831 = vset.pattern.permute.xlu0 0
    %1832 = vperm.xlu0 %1831, %v1750
    %v1833 = vpop.permute.xlu0 %1832
    %1836 = vset.pattern.permute.xlu0 0
    %1837 = vperm.xlu0 %1836, %v1751
    %v1838 = vpop.permute.xlu0 %1837
    %1841 = vset.pattern.permute.xlu0 0
    %1842 = vperm.xlu0 %1841, %v1752
    %v1843 = vpop.permute.xlu0 %1842
    %1846 = vset.pattern.permute.xlu0 0
    %1847 = vperm.xlu0 %1846, %v1753
    %v1848 = vpop.permute.xlu0 %1847
    %1851 = vset.pattern.permute.xlu0 0
    %1852 = vperm.xlu0 %1851, %v1754
    %v1853 = vpop.permute.xlu0 %1852
    %1856 = vset.pattern.permute.xlu0 0
    %1857 = vperm.xlu0 %1856, %v1755
    %v1858 = vpop.permute.xlu0 %1857
    %1861 = vset.pattern.permute.xlu0 0
    %1862 = vperm.xlu0 %1861, %v1756
    %v1863 = vpop.permute.xlu0 %1862
    %1866 = vset.pattern.permute.xlu0 0
    %1867 = vperm.xlu0 %1866, %v1757
    %v1868 = vpop.permute.xlu0 %1867
    %1871 = vset.pattern.permute.xlu0 0
    %1872 = vperm.xlu0 %1871, %v1758
    %v1873 = vpop.permute.xlu0 %1872
    %1876 = vset.pattern.permute.xlu0 0
    %1877 = vperm.xlu0 %1876, %v1759
    %v1878 = vpop.permute.xlu0 %1877
    %1881 = vset.pattern.permute.xlu0 0
    %1882 = vperm.xlu0 %1881, %v1760
    %v1883 = vpop.permute.xlu0 %1882
    %1886 = vset.pattern.permute.xlu0 0
    %1887 = vperm.xlu0 %1886, %v1761
    %v1888 = vpop.permute.xlu0 %1887
    %1891 = vset.pattern.permute.xlu0 0
    %1892 = vperm.xlu0 %1891, %v1762
    %v1893 = vpop.permute.xlu0 %1892
    %1896 = vset.pattern.permute.xlu0 0
    %1897 = vperm.xlu0 %1896, %v1763
    %v1898 = vpop.permute.xlu0 %1897
    %1901 = vset.pattern.permute.xlu0 0
    %1902 = vperm.xlu0 %1901, %v1764
    %v1903 = vpop.permute.xlu0 %1902
    %1906 = vset.pattern.permute.xlu0 0
    %1907 = vperm.xlu0 %1906, %v1765
    %v1908 = vpop.permute.xlu0 %1907
    %1911 = vset.pattern.permute.xlu0 0
    %1912 = vperm.xlu0 %1911, %v1766
    %v1913 = vpop.permute.xlu0 %1912
    %1916 = vset.pattern.permute.xlu0 0
    %1917 = vperm.xlu0 %1916, %v1767
    %v1918 = vpop.permute.xlu0 %1917
    %1921 = vset.pattern.permute.xlu0 0
    %1922 = vperm.xlu0 %1921, %v1768
    %v1923 = vpop.permute.xlu0 %1922
    %1926 = vset.pattern.permute.xlu0 0
    %1927 = vperm.xlu0 %1926, %v1769
    %v1928 = vpop.permute.xlu0 %1927
    %1930 = vmatpush.msra.mxu0 %v1655
    %1931 = vmatpush.msra.mxu0 %v1654
    %1932 = vmatpush.msra.mxu0 %v1653
    %1933 = vmatpush.msra.mxu0 %v1652
    %1934 = vmatpush.msra.mxu0 %v1651
    %1935 = vmatpush.msra.mxu0 %v1650
    %1936 = vmatpush.msra.mxu0 %v1649
    %1937 = vmatpush.msra.mxu0 %v1648
    %1938 = vmatpush.msra.mxu0 %v1647
    %1939 = vmatpush.msra.mxu0 %v1646
    %1940 = vmatpush.msra.mxu0 %v1645
    %1941 = vmatpush.msra.mxu0 %v1644
    %1942 = vmatpush.msra.mxu0 %v1643
    %1943 = vmatpush.msra.mxu0 %v1642
    %1944 = vmatpush.msra.mxu0 %v1641
    %1945 = vmatpush.msra.mxu0 %v1640
    %1946 = vmatmul.f32.gmra.mxu0 %v1673
    %v1947 = vpop.f32.mrf.mxu0
    %v1948 = vadd.f32 %v1773, %v1947
    %1949 = vmatmul.f32.gmra.mxu0 %v1675
    %v1950 = vpop.f32.mrf.mxu0
    %v1951 = vadd.f32 %v1778, %v1950
    %1952 = vmatmul.f32.gmra.mxu0 %v1677
    %v1953 = vpop.f32.mrf.mxu0
    %v1954 = vadd.f32 %v1783, %v1953
    %1955 = vmatmul.f32.gmra.mxu0 %v1679
    %v1956 = vpop.f32.mrf.mxu0
    %v1957 = vadd.f32 %v1788, %v1956
    %1958 = vmatmul.f32.gmra.mxu0 %v1681
    %v1959 = vpop.f32.mrf.mxu0
    %v1960 = vadd.f32 %v1793, %v1959
    %1961 = vmatmul.f32.gmra.mxu0 %v1683
    %v1962 = vpop.f32.mrf.mxu0
    %v1963 = vadd.f32 %v1798, %v1962
    %1964 = vmatmul.f32.gmra.mxu0 %v1685
    %v1965 = vpop.f32.mrf.mxu0
    %v1966 = vadd.f32 %v1803, %v1965
    %1967 = vmatmul.f32.gmra.mxu0 %v1687
    %v1968 = vpop.f32.mrf.mxu0
    %v1969 = vadd.f32 %v1808, %v1968
    %1970 = vmatmul.f32.gmra.mxu0 %v1689
    %v1971 = vpop.f32.mrf.mxu0
    %v1972 = vadd.f32 %v1813, %v1971
    %1973 = vmatmul.f32.gmra.mxu0 %v1691
    %v1974 = vpop.f32.mrf.mxu0
    %v1975 = vadd.f32 %v1818, %v1974
    %1976 = vmatmul.f32.gmra.mxu0 %v1693
    %v1977 = vpop.f32.mrf.mxu0
    %v1978 = vadd.f32 %v1823, %v1977
    %1979 = vmatmul.f32.gmra.mxu0 %v1695
    %v1980 = vpop.f32.mrf.mxu0
    %v1981 = vadd.f32 %v1828, %v1980
    %1982 = vmatmul.f32.gmra.mxu0 %v1697
    %v1983 = vpop.f32.mrf.mxu0
    %v1984 = vadd.f32 %v1833, %v1983
    %1985 = vmatmul.f32.gmra.mxu0 %v1699
    %v1986 = vpop.f32.mrf.mxu0
    %v1987 = vadd.f32 %v1838, %v1986
    %1988 = vmatmul.f32.gmra.mxu0 %v1701
    %v1989 = vpop.f32.mrf.mxu0
    %v1990 = vadd.f32 %v1843, %v1989
    %1991 = vmatmul.f32.gmra.mxu0 %v1703
    %v1992 = vpop.f32.mrf.mxu0
    %v1993 = vadd.f32 %v1848, %v1992
    %1994 = vmatmul.f32.gmra.mxu0 %v1705
    %v1995 = vpop.f32.mrf.mxu0
    %v1996 = vadd.f32 %v1853, %v1995
    %1997 = vmatmul.f32.gmra.mxu0 %v1707
    %v1998 = vpop.f32.mrf.mxu0
    %v1999 = vadd.f32 %v1858, %v1998
    %2000 = vmatmul.f32.gmra.mxu0 %v1709
    %v2001 = vpop.f32.mrf.mxu0
    %v2002 = vadd.f32 %v1863, %v2001
    %2003 = vmatmul.f32.gmra.mxu0 %v1711
    %v2004 = vpop.f32.mrf.mxu0
    %v2005 = vadd.f32 %v1868, %v2004
    %2006 = vmatmul.f32.gmra.mxu0 %v1713
    %v2007 = vpop.f32.mrf.mxu0
    %v2008 = vadd.f32 %v1873, %v2007
    %2009 = vmatmul.f32.gmra.mxu0 %v1715
    %v2010 = vpop.f32.mrf.mxu0
    %v2011 = vadd.f32 %v1878, %v2010
    %2012 = vmatmul.f32.gmra.mxu0 %v1717
    %v2013 = vpop.f32.mrf.mxu0
    %v2014 = vadd.f32 %v1883, %v2013
    %2015 = vmatmul.f32.gmra.mxu0 %v1719
    %v2016 = vpop.f32.mrf.mxu0
    %v2017 = vadd.f32 %v1888, %v2016
    %2018 = vmatmul.f32.gmra.mxu0 %v1721
    %v2019 = vpop.f32.mrf.mxu0
    %v2020 = vadd.f32 %v1893, %v2019
    %2021 = vmatmul.f32.gmra.mxu0 %v1723
    %v2022 = vpop.f32.mrf.mxu0
    %v2023 = vadd.f32 %v1898, %v2022
    %2024 = vmatmul.f32.gmra.mxu0 %v1725
    %v2025 = vpop.f32.mrf.mxu0
    %v2026 = vadd.f32 %v1903, %v2025
    %2027 = vmatmul.f32.gmra.mxu0 %v1727
    %v2028 = vpop.f32.mrf.mxu0
    %v2029 = vadd.f32 %v1908, %v2028
    %2030 = vmatmul.f32.gmra.mxu0 %v1729
    %v2031 = vpop.f32.mrf.mxu0
    %v2032 = vadd.f32 %v1913, %v2031
    %2033 = vmatmul.f32.gmra.mxu0 %v1731
    %v2034 = vpop.f32.mrf.mxu0
    %v2035 = vadd.f32 %v1918, %v2034
    %2036 = vmatmul.f32.gmra.mxu0 %v1733
    %v2037 = vpop.f32.mrf.mxu0
    %v2038 = vadd.f32 %v1923, %v2037
    %2039 = vmatmul.f32.gmra.mxu0 %v1735
    %v2040 = vpop.f32.mrf.mxu0
    %v2041 = vadd.f32 %v1928, %v2040
    %2042 = vdwg.mxu0
    %2043 = vmatpush.msra.mxu0 %v1671
    %2044 = vmatpush.msra.mxu0 %v1670
    %2045 = vmatpush.msra.mxu0 %v1669
    %2046 = vmatpush.msra.mxu0 %v1668
    %2047 = vmatpush.msra.mxu0 %v1667
    %2048 = vmatpush.msra.mxu0 %v1666
    %2049 = vmatpush.msra.mxu0 %v1665
    %2050 = vmatpush.msra.mxu0 %v1664
    %2051 = vmatpush.msra.mxu0 %v1663
    %2052 = vmatpush.msra.mxu0 %v1662
    %2053 = vmatpush.msra.mxu0 %v1661
    %2054 = vmatpush.msra.mxu0 %v1660
    %2055 = vmatpush.msra.mxu0 %v1659
    %2056 = vmatpush.msra.mxu0 %v1658
    %2057 = vmatpush.msra.mxu0 %v1657
    %2058 = vmatpush.msra.mxu0 %v1656
    %2059 = vmatmul.f32.gmra.mxu0 %v1674
    %v2060 = vpop.f32.mrf.mxu0
    %v2061 = vadd.f32 %v1948, %v2060
    %2062 = vmatmul.f32.gmra.mxu0 %v1676
    %v2063 = vpop.f32.mrf.mxu0
    %v2064 = vadd.f32 %v1951, %v2063
    %2065 = vmatmul.f32.gmra.mxu0 %v1678
    %v2066 = vpop.f32.mrf.mxu0
    %v2067 = vadd.f32 %v1954, %v2066
    %2068 = vmatmul.f32.gmra.mxu0 %v1680
    %v2069 = vpop.f32.mrf.mxu0
    %v2070 = vadd.f32 %v1957, %v2069
    %2071 = vmatmul.f32.gmra.mxu0 %v1682
    %v2072 = vpop.f32.mrf.mxu0
    %v2073 = vadd.f32 %v1960, %v2072
    %2074 = vmatmul.f32.gmra.mxu0 %v1684
    %v2075 = vpop.f32.mrf.mxu0
    %v2076 = vadd.f32 %v1963, %v2075
    %2077 = vmatmul.f32.gmra.mxu0 %v1686
    %v2078 = vpop.f32.mrf.mxu0
    %v2079 = vadd.f32 %v1966, %v2078
    %2080 = vmatmul.f32.gmra.mxu0 %v1688
    %v2081 = vpop.f32.mrf.mxu0
    %v2082 = vadd.f32 %v1969, %v2081
    %2083 = vmatmul.f32.gmra.mxu0 %v1690
    %v2084 = vpop.f32.mrf.mxu0
    %v2085 = vadd.f32 %v1972, %v2084
    %2086 = vmatmul.f32.gmra.mxu0 %v1692
    %v2087 = vpop.f32.mrf.mxu0
    %v2088 = vadd.f32 %v1975, %v2087
    %2089 = vmatmul.f32.gmra.mxu0 %v1694
    %v2090 = vpop.f32.mrf.mxu0
    %v2091 = vadd.f32 %v1978, %v2090
    %2092 = vmatmul.f32.gmra.mxu0 %v1696
    %v2093 = vpop.f32.mrf.mxu0
    %v2094 = vadd.f32 %v1981, %v2093
    %2095 = vmatmul.f32.gmra.mxu0 %v1698
    %v2096 = vpop.f32.mrf.mxu0
    %v2097 = vadd.f32 %v1984, %v2096
    %2098 = vmatmul.f32.gmra.mxu0 %v1700
    %v2099 = vpop.f32.mrf.mxu0
    %v2100 = vadd.f32 %v1987, %v2099
    %2101 = vmatmul.f32.gmra.mxu0 %v1702
    %v2102 = vpop.f32.mrf.mxu0
    %v2103 = vadd.f32 %v1990, %v2102
    %2104 = vmatmul.f32.gmra.mxu0 %v1704
    %v2105 = vpop.f32.mrf.mxu0
    %v2106 = vadd.f32 %v1993, %v2105
    %2107 = vmatmul.f32.gmra.mxu0 %v1706
    %v2108 = vpop.f32.mrf.mxu0
    %v2109 = vadd.f32 %v1996, %v2108
    %2110 = vmatmul.f32.gmra.mxu0 %v1708
    %v2111 = vpop.f32.mrf.mxu0
    %v2112 = vadd.f32 %v1999, %v2111
    %2113 = vmatmul.f32.gmra.mxu0 %v1710
    %v2114 = vpop.f32.mrf.mxu0
    %v2115 = vadd.f32 %v2002, %v2114
    %2116 = vmatmul.f32.gmra.mxu0 %v1712
    %v2117 = vpop.f32.mrf.mxu0
    %v2118 = vadd.f32 %v2005, %v2117
    %2119 = vmatmul.f32.gmra.mxu0 %v1714
    %v2120 = vpop.f32.mrf.mxu0
    %v2121 = vadd.f32 %v2008, %v2120
    %2122 = vmatmul.f32.gmra.mxu0 %v1716
    %v2123 = vpop.f32.mrf.mxu0
    %v2124 = vadd.f32 %v2011, %v2123
    %2125 = vmatmul.f32.gmra.mxu0 %v1718
    %v2126 = vpop.f32.mrf.mxu0
    %v2127 = vadd.f32 %v2014, %v2126
    %2128 = vmatmul.f32.gmra.mxu0 %v1720
    %v2129 = vpop.f32.mrf.mxu0
    %v2130 = vadd.f32 %v2017, %v2129
    %2131 = vmatmul.f32.gmra.mxu0 %v1722
    %v2132 = vpop.f32.mrf.mxu0
    %v2133 = vadd.f32 %v2020, %v2132
    %2134 = vmatmul.f32.gmra.mxu0 %v1724
    %v2135 = vpop.f32.mrf.mxu0
    %v2136 = vadd.f32 %v2023, %v2135
    %2137 = vmatmul.f32.gmra.mxu0 %v1726
    %v2138 = vpop.f32.mrf.mxu0
    %v2139 = vadd.f32 %v2026, %v2138
    %2140 = vmatmul.f32.gmra.mxu0 %v1728
    %v2141 = vpop.f32.mrf.mxu0
    %v2142 = vadd.f32 %v2029, %v2141
    %2143 = vmatmul.f32.gmra.mxu0 %v1730
    %v2144 = vpop.f32.mrf.mxu0
    %v2145 = vadd.f32 %v2032, %v2144
    %2146 = vmatmul.f32.gmra.mxu0 %v1732
    %v2147 = vpop.f32.mrf.mxu0
    %v2148 = vadd.f32 %v2035, %v2147
    %2149 = vmatmul.f32.gmra.mxu0 %v1734
    %v2150 = vpop.f32.mrf.mxu0
    %v2151 = vadd.f32 %v2038, %v2150
    %2152 = vmatmul.f32.gmra.mxu0 %v1736
    %v2153 = vpop.f32.mrf.mxu0
    %v2154 = vadd.f32 %v2041, %v2153
    %2155 = vdwg.mxu0
    %v2156 = vld [vmem:[%s3] sm:$0xff]
    %v2157 = vld [vmem:[%s3 + $0x8] sm:$0xff]
    %v2158 = vld [vmem:[%s3 + $0x10] sm:$0xff]
    %v2159 = vld [vmem:[%s3 + $0x18] sm:$0xff]
    %v2160 = vld [vmem:[%s3 + $0x20] sm:$0xff]
    %v2161 = vld [vmem:[%s3 + $0x28] sm:$0xff]
    %v2162 = vld [vmem:[%s3 + $0x30] sm:$0xff]
    %v2163 = vld [vmem:[%s3 + $0x38] sm:$0xff]
    %vm2164 = vcmask 523264
    %v2166 = vsel %vm2164, %v2061, 0
    %v2169 = vsel %vm2164, %v2064, 0
    %v2172 = vsel %vm2164, %v2067, 0
    %v2175 = vsel %vm2164, %v2070, 0
    %v2178 = vsel %vm2164, %v2073, 0
    %v2181 = vsel %vm2164, %v2076, 0
    %v2184 = vsel %vm2164, %v2079, 0
    %v2187 = vsel %vm2164, %v2082, 0
    %v2190 = vsel %vm2164, %v2085, 0
    %v2193 = vsel %vm2164, %v2088, 0
    %v2196 = vsel %vm2164, %v2091, 0
    %v2199 = vsel %vm2164, %v2094, 0
    %v2202 = vsel %vm2164, %v2097, 0
    %v2205 = vsel %vm2164, %v2100, 0
    %v2208 = vsel %vm2164, %v2103, 0
    %v2211 = vsel %vm2164, %v2106, 0
    %v2214 = vsel %vm2164, %v2109, 0
    %v2217 = vsel %vm2164, %v2112, 0
    %v2220 = vsel %vm2164, %v2115, 0
    %v2223 = vsel %vm2164, %v2118, 0
    %v2226 = vsel %vm2164, %v2121, 0
    %v2229 = vsel %vm2164, %v2124, 0
    %v2232 = vsel %vm2164, %v2127, 0
    %v2235 = vsel %vm2164, %v2130, 0
    %v2238 = vsel %vm2164, %v2133, 0
    %v2241 = vsel %vm2164, %v2136, 0
    %v2244 = vsel %vm2164, %v2139, 0
    %v2247 = vsel %vm2164, %v2142, 0
    %v2250 = vsel %vm2164, %v2145, 0
    %v2253 = vsel %vm2164, %v2148, 0
    %v2256 = vsel %vm2164, %v2151, 0
    %v2259 = vsel %vm2164, %v2154, 0
    %2261 = vmatpush.msra.mxu0 0.0
    %2262 = vmatpush.msra.mxu0 0.0
    %2263 = vmatpush.msra.mxu0 0.0
    %2264 = vmatpush.msra.mxu0 0.0
    %2265 = vmatpush.msra.mxu0 0.0
    %2266 = vmatpush.msra.mxu0 0.0
    %2267 = vmatpush.msra.mxu0 0.0
    %2268 = vmatpush.msra.mxu0 0.0
    %2269 = vmatpush.msra.mxu0 %v2163
    %2270 = vmatpush.msra.mxu0 %v2162
    %2271 = vmatpush.msra.mxu0 %v2161
    %2272 = vmatpush.msra.mxu0 %v2160
    %2273 = vmatpush.msra.mxu0 %v2159
    %2274 = vmatpush.msra.mxu0 %v2158
    %2275 = vmatpush.msra.mxu0 %v2157
    %2276 = vmatpush.msra.mxu0 %v2156
    %2277 = vmatmul.f32.gmra.mxu0 %v2166
    %v2278 = vpop.f32.mrf.mxu0
    %v2279 = vadd.f32 0.0, %v2278
    %2280 = vmatmul.f32.gmra.mxu0 %v2169
    %v2281 = vpop.f32.mrf.mxu0
    %v2282 = vadd.f32 0.0, %v2281
    %2283 = vmatmul.f32.gmra.mxu0 %v2172
    %v2284 = vpop.f32.mrf.mxu0
    %v2285 = vadd.f32 0.0, %v2284
    %2286 = vmatmul.f32.gmra.mxu0 %v2175
    %v2287 = vpop.f32.mrf.mxu0
    %v2288 = vadd.f32 0.0, %v2287
    %2289 = vmatmul.f32.gmra.mxu0 %v2178
    %v2290 = vpop.f32.mrf.mxu0
    %v2291 = vadd.f32 0.0, %v2290
    %2292 = vmatmul.f32.gmra.mxu0 %v2181
    %v2293 = vpop.f32.mrf.mxu0
    %v2294 = vadd.f32 0.0, %v2293
    %2295 = vmatmul.f32.gmra.mxu0 %v2184
    %v2296 = vpop.f32.mrf.mxu0
    %v2297 = vadd.f32 0.0, %v2296
    %2298 = vmatmul.f32.gmra.mxu0 %v2187
    %v2299 = vpop.f32.mrf.mxu0
    %v2300 = vadd.f32 0.0, %v2299
    %2301 = vmatmul.f32.gmra.mxu0 %v2190
    %v2302 = vpop.f32.mrf.mxu0
    %v2303 = vadd.f32 0.0, %v2302
    %2304 = vmatmul.f32.gmra.mxu0 %v2193
    %v2305 = vpop.f32.mrf.mxu0
    %v2306 = vadd.f32 0.0, %v2305
    %2307 = vmatmul.f32.gmra.mxu0 %v2196
    %v2308 = vpop.f32.mrf.mxu0
    %v2309 = vadd.f32 0.0, %v2308
    %2310 = vmatmul.f32.gmra.mxu0 %v2199
    %v2311 = vpop.f32.mrf.mxu0
    %v2312 = vadd.f32 0.0, %v2311
    %2313 = vmatmul.f32.gmra.mxu0 %v2202
    %v2314 = vpop.f32.mrf.mxu0
    %v2315 = vadd.f32 0.0, %v2314
    %2316 = vmatmul.f32.gmra.mxu0 %v2205
    %v2317 = vpop.f32.mrf.mxu0
    %v2318 = vadd.f32 0.0, %v2317
    %2319 = vmatmul.f32.gmra.mxu0 %v2208
    %v2320 = vpop.f32.mrf.mxu0
    %v2321 = vadd.f32 0.0, %v2320
    %2322 = vmatmul.f32.gmra.mxu0 %v2211
    %v2323 = vpop.f32.mrf.mxu0
    %v2324 = vadd.f32 0.0, %v2323
    %2325 = vmatmul.f32.gmra.mxu0 %v2214
    %v2326 = vpop.f32.mrf.mxu0
    %v2327 = vadd.f32 0.0, %v2326
    %2328 = vmatmul.f32.gmra.mxu0 %v2217
    %v2329 = vpop.f32.mrf.mxu0
    %v2330 = vadd.f32 0.0, %v2329
    %2331 = vmatmul.f32.gmra.mxu0 %v2220
    %v2332 = vpop.f32.mrf.mxu0
    %v2333 = vadd.f32 0.0, %v2332
    %2334 = vmatmul.f32.gmra.mxu0 %v2223
    %v2335 = vpop.f32.mrf.mxu0
    %v2336 = vadd.f32 0.0, %v2335
    %2337 = vmatmul.f32.gmra.mxu0 %v2226
    %v2338 = vpop.f32.mrf.mxu0
    %v2339 = vadd.f32 0.0, %v2338
    %2340 = vmatmul.f32.gmra.mxu0 %v2229
    %v2341 = vpop.f32.mrf.mxu0
    %v2342 = vadd.f32 0.0, %v2341
    %2343 = vmatmul.f32.gmra.mxu0 %v2232
    %v2344 = vpop.f32.mrf.mxu0
    %v2345 = vadd.f32 0.0, %v2344
    %2346 = vmatmul.f32.gmra.mxu0 %v2235
    %v2347 = vpop.f32.mrf.mxu0
    %v2348 = vadd.f32 0.0, %v2347
    %2349 = vmatmul.f32.gmra.mxu0 %v2238
    %v2350 = vpop.f32.mrf.mxu0
    %v2351 = vadd.f32 0.0, %v2350
    %2352 = vmatmul.f32.gmra.mxu0 %v2241
    %v2353 = vpop.f32.mrf.mxu0
    %v2354 = vadd.f32 0.0, %v2353
    %2355 = vmatmul.f32.gmra.mxu0 %v2244
    %v2356 = vpop.f32.mrf.mxu0
    %v2357 = vadd.f32 0.0, %v2356
    %2358 = vmatmul.f32.gmra.mxu0 %v2247
    %v2359 = vpop.f32.mrf.mxu0
    %v2360 = vadd.f32 0.0, %v2359
    %2361 = vmatmul.f32.gmra.mxu0 %v2250
    %v2362 = vpop.f32.mrf.mxu0
    %v2363 = vadd.f32 0.0, %v2362
    %2364 = vmatmul.f32.gmra.mxu0 %v2253
    %v2365 = vpop.f32.mrf.mxu0
    %v2366 = vadd.f32 0.0, %v2365
    %2367 = vmatmul.f32.gmra.mxu0 %v2256
    %v2368 = vpop.f32.mrf.mxu0
    %v2369 = vadd.f32 0.0, %v2368
    %2370 = vmatmul.f32.gmra.mxu0 %v2259
    %v2371 = vpop.f32.mrf.mxu0
    %v2372 = vadd.f32 0.0, %v2371
    %2373 = vdwg.mxu0
    %s2374 = scalar_lea.vmem [#allocation10], 1536
    %v2375 = vld [vmem:[%s2374] sm:$0xff]
    %v2376 = vld [vmem:[%s2374 + $0x8] sm:$0xff]
    %v2377 = vld [vmem:[%s2374 + $0x10] sm:$0xff]
    %v2378 = vld [vmem:[%s2374 + $0x18] sm:$0xff]
    %v2379 = vld [vmem:[%s2374 + $0x20] sm:$0xff]
    %v2380 = vld [vmem:[%s2374 + $0x28] sm:$0xff]
    %v2381 = vld [vmem:[%s2374 + $0x30] sm:$0xff]
    %v2382 = vld [vmem:[%s2374 + $0x38] sm:$0xff]
    %v2383 = vld [vmem:[%s2374 + $0x40] sm:$0xff]
    %v2384 = vld [vmem:[%s2374 + $0x48] sm:$0xff]
    %v2385 = vld [vmem:[%s2374 + $0x50] sm:$0xff]
    %v2386 = vld [vmem:[%s2374 + $0x58] sm:$0xff]
    %v2387 = vld [vmem:[%s2374 + $0x60] sm:$0xff]
    %v2388 = vld [vmem:[%s2374 + $0x68] sm:$0xff]
    %v2389 = vld [vmem:[%s2374 + $0x70] sm:$0xff]
    %v2390 = vld [vmem:[%s2374 + $0x78] sm:$0xff]
    %v2391 = vld [vmem:[%s2374 + $0x80] sm:$0xff]
    %v2392 = vld [vmem:[%s2374 + $0x88] sm:$0xff]
    %v2393 = vld [vmem:[%s2374 + $0x90] sm:$0xff]
    %v2394 = vld [vmem:[%s2374 + $0x98] sm:$0xff]
    %v2395 = vld [vmem:[%s2374 + $0xa0] sm:$0xff]
    %v2396 = vld [vmem:[%s2374 + $0xa8] sm:$0xff]
    %v2397 = vld [vmem:[%s2374 + $0xb0] sm:$0xff]
    %v2398 = vld [vmem:[%s2374 + $0xb8] sm:$0xff]
    %v2399 = vld [vmem:[%s2374 + $0xc0] sm:$0xff]
    %v2400 = vld [vmem:[%s2374 + $0xc8] sm:$0xff]
    %v2401 = vld [vmem:[%s2374 + $0xd0] sm:$0xff]
    %v2402 = vld [vmem:[%s2374 + $0xd8] sm:$0xff]
    %v2403 = vld [vmem:[%s2374 + $0xe0] sm:$0xff]
    %v2404 = vld [vmem:[%s2374 + $0xe8] sm:$0xff]
    %v2405 = vld [vmem:[%s2374 + $0xf0] sm:$0xff]
    %v2406 = vld [vmem:[%s2374 + $0xf8] sm:$0xff]
    %v2407 = vld [vmem:[%s2374 + $0x100] sm:$0xff]
    %v2408 = vld [vmem:[%s2374 + $0x108] sm:$0xff]
    %v2409 = vld [vmem:[%s2374 + $0x110] sm:$0xff]
    %v2410 = vld [vmem:[%s2374 + $0x118] sm:$0xff]
    %v2411 = vld [vmem:[%s2374 + $0x120] sm:$0xff]
    %v2412 = vld [vmem:[%s2374 + $0x128] sm:$0xff]
    %v2413 = vld [vmem:[%s2374 + $0x130] sm:$0xff]
    %v2414 = vld [vmem:[%s2374 + $0x138] sm:$0xff]
    %v2415 = vld [vmem:[%s2374 + $0x140] sm:$0xff]
    %v2416 = vld [vmem:[%s2374 + $0x148] sm:$0xff]
    %v2417 = vld [vmem:[%s2374 + $0x150] sm:$0xff]
    %v2418 = vld [vmem:[%s2374 + $0x158] sm:$0xff]
    %v2419 = vld [vmem:[%s2374 + $0x160] sm:$0xff]
    %v2420 = vld [vmem:[%s2374 + $0x168] sm:$0xff]
    %v2421 = vld [vmem:[%s2374 + $0x170] sm:$0xff]
    %v2422 = vld [vmem:[%s2374 + $0x178] sm:$0xff]
    %v2423 = vld [vmem:[%s2374 + $0x180] sm:$0xff]
    %v2424 = vld [vmem:[%s2374 + $0x188] sm:$0xff]
    %v2425 = vld [vmem:[%s2374 + $0x190] sm:$0xff]
    %v2426 = vld [vmem:[%s2374 + $0x198] sm:$0xff]
    %v2427 = vld [vmem:[%s2374 + $0x1a0] sm:$0xff]
    %v2428 = vld [vmem:[%s2374 + $0x1a8] sm:$0xff]
    %v2429 = vld [vmem:[%s2374 + $0x1b0] sm:$0xff]
    %v2430 = vld [vmem:[%s2374 + $0x1b8] sm:$0xff]
    %v2431 = vld [vmem:[%s2374 + $0x1c0] sm:$0xff]
    %v2432 = vld [vmem:[%s2374 + $0x1c8] sm:$0xff]
    %v2433 = vld [vmem:[%s2374 + $0x1d0] sm:$0xff]
    %v2434 = vld [vmem:[%s2374 + $0x1d8] sm:$0xff]
    %v2435 = vld [vmem:[%s2374 + $0x1e0] sm:$0xff]
    %v2436 = vld [vmem:[%s2374 + $0x1e8] sm:$0xff]
    %v2437 = vld [vmem:[%s2374 + $0x1f0] sm:$0xff]
    %v2438 = vld [vmem:[%s2374 + $0x1f8] sm:$0xff]
    %s2439 = scalar_lea.vmem %s8, 768
    %v2440 = vld [vmem:[%s2439] sm:$0xff]
    %v2441 = vld [vmem:[%s2439 + $0x8] sm:$0xff]
    %v2442 = vld [vmem:[%s2439 + $0x10] sm:$0xff]
    %v2443 = vld [vmem:[%s2439 + $0x18] sm:$0xff]
    %v2444 = vld [vmem:[%s2439 + $0x20] sm:$0xff]
    %v2445 = vld [vmem:[%s2439 + $0x28] sm:$0xff]
    %v2446 = vld [vmem:[%s2439 + $0x30] sm:$0xff]
    %v2447 = vld [vmem:[%s2439 + $0x38] sm:$0xff]
    %v2448 = vld [vmem:[%s2439 + $0x40] sm:$0xff]
    %v2449 = vld [vmem:[%s2439 + $0x48] sm:$0xff]
    %v2450 = vld [vmem:[%s2439 + $0x50] sm:$0xff]
    %v2451 = vld [vmem:[%s2439 + $0x58] sm:$0xff]
    %v2452 = vld [vmem:[%s2439 + $0x60] sm:$0xff]
    %v2453 = vld [vmem:[%s2439 + $0x68] sm:$0xff]
    %v2454 = vld [vmem:[%s2439 + $0x70] sm:$0xff]
    %v2455 = vld [vmem:[%s2439 + $0x78] sm:$0xff]
    %v2456 = vld [vmem:[%s2439 + $0x80] sm:$0xff]
    %v2457 = vld [vmem:[%s2439 + $0x88] sm:$0xff]
    %v2458 = vld [vmem:[%s2439 + $0x90] sm:$0xff]
    %v2459 = vld [vmem:[%s2439 + $0x98] sm:$0xff]
    %v2460 = vld [vmem:[%s2439 + $0xa0] sm:$0xff]
    %v2461 = vld [vmem:[%s2439 + $0xa8] sm:$0xff]
    %v2462 = vld [vmem:[%s2439 + $0xb0] sm:$0xff]
    %v2463 = vld [vmem:[%s2439 + $0xb8] sm:$0xff]
    %v2464 = vld [vmem:[%s2439 + $0xc0] sm:$0xff]
    %v2465 = vld [vmem:[%s2439 + $0xc8] sm:$0xff]
    %v2466 = vld [vmem:[%s2439 + $0xd0] sm:$0xff]
    %v2467 = vld [vmem:[%s2439 + $0xd8] sm:$0xff]
    %v2468 = vld [vmem:[%s2439 + $0xe0] sm:$0xff]
    %v2469 = vld [vmem:[%s2439 + $0xe8] sm:$0xff]
    %v2470 = vld [vmem:[%s2439 + $0xf0] sm:$0xff]
    %v2471 = vld [vmem:[%s2439 + $0xf8] sm:$0xff]
    %2473 = vset.pattern.permute.xlu0 0
    %2474 = vperm.xlu0 %2473, %v2440
    %v2475 = vpop.permute.xlu0 %2474
    %2478 = vset.pattern.permute.xlu0 0
    %2479 = vperm.xlu0 %2478, %v2441
    %v2480 = vpop.permute.xlu0 %2479
    %2483 = vset.pattern.permute.xlu0 0
    %2484 = vperm.xlu0 %2483, %v2442
    %v2485 = vpop.permute.xlu0 %2484
    %2488 = vset.pattern.permute.xlu0 0
    %2489 = vperm.xlu0 %2488, %v2443
    %v2490 = vpop.permute.xlu0 %2489
    %2493 = vset.pattern.permute.xlu0 0
    %2494 = vperm.xlu0 %2493, %v2444
    %v2495 = vpop.permute.xlu0 %2494
    %2498 = vset.pattern.permute.xlu0 0
    %2499 = vperm.xlu0 %2498, %v2445
    %v2500 = vpop.permute.xlu0 %2499
    %2503 = vset.pattern.permute.xlu0 0
    %2504 = vperm.xlu0 %2503, %v2446
    %v2505 = vpop.permute.xlu0 %2504
    %2508 = vset.pattern.permute.xlu0 0
    %2509 = vperm.xlu0 %2508, %v2447
    %v2510 = vpop.permute.xlu0 %2509
    %2513 = vset.pattern.permute.xlu0 0
    %2514 = vperm.xlu0 %2513, %v2448
    %v2515 = vpop.permute.xlu0 %2514
    %2518 = vset.pattern.permute.xlu0 0
    %2519 = vperm.xlu0 %2518, %v2449
    %v2520 = vpop.permute.xlu0 %2519
    %2523 = vset.pattern.permute.xlu0 0
    %2524 = vperm.xlu0 %2523, %v2450
    %v2525 = vpop.permute.xlu0 %2524
    %2528 = vset.pattern.permute.xlu0 0
    %2529 = vperm.xlu0 %2528, %v2451
    %v2530 = vpop.permute.xlu0 %2529
    %2533 = vset.pattern.permute.xlu0 0
    %2534 = vperm.xlu0 %2533, %v2452
    %v2535 = vpop.permute.xlu0 %2534
    %2538 = vset.pattern.permute.xlu0 0
    %2539 = vperm.xlu0 %2538, %v2453
    %v2540 = vpop.permute.xlu0 %2539
    %2543 = vset.pattern.permute.xlu0 0
    %2544 = vperm.xlu0 %2543, %v2454
    %v2545 = vpop.permute.xlu0 %2544
    %2548 = vset.pattern.permute.xlu0 0
    %2549 = vperm.xlu0 %2548, %v2455
    %v2550 = vpop.permute.xlu0 %2549
    %2553 = vset.pattern.permute.xlu0 0
    %2554 = vperm.xlu0 %2553, %v2456
    %v2555 = vpop.permute.xlu0 %2554
    %2558 = vset.pattern.permute.xlu0 0
    %2559 = vperm.xlu0 %2558, %v2457
    %v2560 = vpop.permute.xlu0 %2559
    %2563 = vset.pattern.permute.xlu0 0
    %2564 = vperm.xlu0 %2563, %v2458
    %v2565 = vpop.permute.xlu0 %2564
    %2568 = vset.pattern.permute.xlu0 0
    %2569 = vperm.xlu0 %2568, %v2459
    %v2570 = vpop.permute.xlu0 %2569
    %2573 = vset.pattern.permute.xlu0 0
    %2574 = vperm.xlu0 %2573, %v2460
    %v2575 = vpop.permute.xlu0 %2574
    %2578 = vset.pattern.permute.xlu0 0
    %2579 = vperm.xlu0 %2578, %v2461
    %v2580 = vpop.permute.xlu0 %2579
    %2583 = vset.pattern.permute.xlu0 0
    %2584 = vperm.xlu0 %2583, %v2462
    %v2585 = vpop.permute.xlu0 %2584
    %2588 = vset.pattern.permute.xlu0 0
    %2589 = vperm.xlu0 %2588, %v2463
    %v2590 = vpop.permute.xlu0 %2589
    %2593 = vset.pattern.permute.xlu0 0
    %2594 = vperm.xlu0 %2593, %v2464
    %v2595 = vpop.permute.xlu0 %2594
    %2598 = vset.pattern.permute.xlu0 0
    %2599 = vperm.xlu0 %2598, %v2465
    %v2600 = vpop.permute.xlu0 %2599
    %2603 = vset.pattern.permute.xlu0 0
    %2604 = vperm.xlu0 %2603, %v2466
    %v2605 = vpop.permute.xlu0 %2604
    %2608 = vset.pattern.permute.xlu0 0
    %2609 = vperm.xlu0 %2608, %v2467
    %v2610 = vpop.permute.xlu0 %2609
    %2613 = vset.pattern.permute.xlu0 0
    %2614 = vperm.xlu0 %2613, %v2468
    %v2615 = vpop.permute.xlu0 %2614
    %2618 = vset.pattern.permute.xlu0 0
    %2619 = vperm.xlu0 %2618, %v2469
    %v2620 = vpop.permute.xlu0 %2619
    %2623 = vset.pattern.permute.xlu0 0
    %2624 = vperm.xlu0 %2623, %v2470
    %v2625 = vpop.permute.xlu0 %2624
    %2628 = vset.pattern.permute.xlu0 0
    %2629 = vperm.xlu0 %2628, %v2471
    %v2630 = vpop.permute.xlu0 %2629
    %2632 = vmatpush.msra.mxu0 %v2324
    %2633 = vmatpush.msra.mxu0 %v2321
    %2634 = vmatpush.msra.mxu0 %v2318
    %2635 = vmatpush.msra.mxu0 %v2315
    %2636 = vmatpush.msra.mxu0 %v2312
    %2637 = vmatpush.msra.mxu0 %v2309
    %2638 = vmatpush.msra.mxu0 %v2306
    %2639 = vmatpush.msra.mxu0 %v2303
    %2640 = vmatpush.msra.mxu0 %v2300
    %2641 = vmatpush.msra.mxu0 %v2297
    %2642 = vmatpush.msra.mxu0 %v2294
    %2643 = vmatpush.msra.mxu0 %v2291
    %2644 = vmatpush.msra.mxu0 %v2288
    %2645 = vmatpush.msra.mxu0 %v2285
    %2646 = vmatpush.msra.mxu0 %v2282
    %2647 = vmatpush.msra.mxu0 %v2279
    %2648 = vmatmul.f32.gmra.mxu0 %v2375
    %v2649 = vpop.f32.mrf.mxu0
    %v2650 = vadd.f32 %v2475, %v2649
    %2651 = vmatmul.f32.gmra.mxu0 %v2377
    %v2652 = vpop.f32.mrf.mxu0
    %v2653 = vadd.f32 %v2480, %v2652
    %2654 = vmatmul.f32.gmra.mxu0 %v2379
    %v2655 = vpop.f32.mrf.mxu0
    %v2656 = vadd.f32 %v2485, %v2655
    %2657 = vmatmul.f32.gmra.mxu0 %v2381
    %v2658 = vpop.f32.mrf.mxu0
    %v2659 = vadd.f32 %v2490, %v2658
    %2660 = vmatmul.f32.gmra.mxu0 %v2383
    %v2661 = vpop.f32.mrf.mxu0
    %v2662 = vadd.f32 %v2495, %v2661
    %2663 = vmatmul.f32.gmra.mxu0 %v2385
    %v2664 = vpop.f32.mrf.mxu0
    %v2665 = vadd.f32 %v2500, %v2664
    %2666 = vmatmul.f32.gmra.mxu0 %v2387
    %v2667 = vpop.f32.mrf.mxu0
    %v2668 = vadd.f32 %v2505, %v2667
    %2669 = vmatmul.f32.gmra.mxu0 %v2389
    %v2670 = vpop.f32.mrf.mxu0
    %v2671 = vadd.f32 %v2510, %v2670
    %2672 = vmatmul.f32.gmra.mxu0 %v2391
    %v2673 = vpop.f32.mrf.mxu0
    %v2674 = vadd.f32 %v2515, %v2673
    %2675 = vmatmul.f32.gmra.mxu0 %v2393
    %v2676 = vpop.f32.mrf.mxu0
    %v2677 = vadd.f32 %v2520, %v2676
    %2678 = vmatmul.f32.gmra.mxu0 %v2395
    %v2679 = vpop.f32.mrf.mxu0
    %v2680 = vadd.f32 %v2525, %v2679
    %2681 = vmatmul.f32.gmra.mxu0 %v2397
    %v2682 = vpop.f32.mrf.mxu0
    %v2683 = vadd.f32 %v2530, %v2682
    %2684 = vmatmul.f32.gmra.mxu0 %v2399
    %v2685 = vpop.f32.mrf.mxu0
    %v2686 = vadd.f32 %v2535, %v2685
    %2687 = vmatmul.f32.gmra.mxu0 %v2401
    %v2688 = vpop.f32.mrf.mxu0
    %v2689 = vadd.f32 %v2540, %v2688
    %2690 = vmatmul.f32.gmra.mxu0 %v2403
    %v2691 = vpop.f32.mrf.mxu0
    %v2692 = vadd.f32 %v2545, %v2691
    %2693 = vmatmul.f32.gmra.mxu0 %v2405
    %v2694 = vpop.f32.mrf.mxu0
    %v2695 = vadd.f32 %v2550, %v2694
    %2696 = vmatmul.f32.gmra.mxu0 %v2407
    %v2697 = vpop.f32.mrf.mxu0
    %v2698 = vadd.f32 %v2555, %v2697
    %2699 = vmatmul.f32.gmra.mxu0 %v2409
    %v2700 = vpop.f32.mrf.mxu0
    %v2701 = vadd.f32 %v2560, %v2700
    %2702 = vmatmul.f32.gmra.mxu0 %v2411
    %v2703 = vpop.f32.mrf.mxu0
    %v2704 = vadd.f32 %v2565, %v2703
    %2705 = vmatmul.f32.gmra.mxu0 %v2413
    %v2706 = vpop.f32.mrf.mxu0
    %v2707 = vadd.f32 %v2570, %v2706
    %2708 = vmatmul.f32.gmra.mxu0 %v2415
    %v2709 = vpop.f32.mrf.mxu0
    %v2710 = vadd.f32 %v2575, %v2709
    %2711 = vmatmul.f32.gmra.mxu0 %v2417
    %v2712 = vpop.f32.mrf.mxu0
    %v2713 = vadd.f32 %v2580, %v2712
    %2714 = vmatmul.f32.gmra.mxu0 %v2419
    %v2715 = vpop.f32.mrf.mxu0
    %v2716 = vadd.f32 %v2585, %v2715
    %2717 = vmatmul.f32.gmra.mxu0 %v2421
    %v2718 = vpop.f32.mrf.mxu0
    %v2719 = vadd.f32 %v2590, %v2718
    %2720 = vmatmul.f32.gmra.mxu0 %v2423
    %v2721 = vpop.f32.mrf.mxu0
    %v2722 = vadd.f32 %v2595, %v2721
    %2723 = vmatmul.f32.gmra.mxu0 %v2425
    %v2724 = vpop.f32.mrf.mxu0
    %v2725 = vadd.f32 %v2600, %v2724
    %2726 = vmatmul.f32.gmra.mxu0 %v2427
    %v2727 = vpop.f32.mrf.mxu0
    %v2728 = vadd.f32 %v2605, %v2727
    %2729 = vmatmul.f32.gmra.mxu0 %v2429
    %v2730 = vpop.f32.mrf.mxu0
    %v2731 = vadd.f32 %v2610, %v2730
    %2732 = vmatmul.f32.gmra.mxu0 %v2431
    %v2733 = vpop.f32.mrf.mxu0
    %v2734 = vadd.f32 %v2615, %v2733
    %2735 = vmatmul.f32.gmra.mxu0 %v2433
    %v2736 = vpop.f32.mrf.mxu0
    %v2737 = vadd.f32 %v2620, %v2736
    %2738 = vmatmul.f32.gmra.mxu0 %v2435
    %v2739 = vpop.f32.mrf.mxu0
    %v2740 = vadd.f32 %v2625, %v2739
    %2741 = vmatmul.f32.gmra.mxu0 %v2437
    %v2742 = vpop.f32.mrf.mxu0
    %v2743 = vadd.f32 %v2630, %v2742
    %2744 = vdwg.mxu0
    %2745 = vmatpush.msra.mxu0 %v2372
    %2746 = vmatpush.msra.mxu0 %v2369
    %2747 = vmatpush.msra.mxu0 %v2366
    %2748 = vmatpush.msra.mxu0 %v2363
    %2749 = vmatpush.msra.mxu0 %v2360
    %2750 = vmatpush.msra.mxu0 %v2357
    %2751 = vmatpush.msra.mxu0 %v2354
    %2752 = vmatpush.msra.mxu0 %v2351
    %2753 = vmatpush.msra.mxu0 %v2348
    %2754 = vmatpush.msra.mxu0 %v2345
    %2755 = vmatpush.msra.mxu0 %v2342
    %2756 = vmatpush.msra.mxu0 %v2339
    %2757 = vmatpush.msra.mxu0 %v2336
    %2758 = vmatpush.msra.mxu0 %v2333
    %2759 = vmatpush.msra.mxu0 %v2330
    %2760 = vmatpush.msra.mxu0 %v2327
    %2761 = vmatmul.f32.gmra.mxu0 %v2376
    %v2762 = vpop.f32.mrf.mxu0
    %v2763 = vadd.f32 %v2650, %v2762
    %2764 = vmatmul.f32.gmra.mxu0 %v2378
    %v2765 = vpop.f32.mrf.mxu0
    %v2766 = vadd.f32 %v2653, %v2765
    %2767 = vmatmul.f32.gmra.mxu0 %v2380
    %v2768 = vpop.f32.mrf.mxu0
    %v2769 = vadd.f32 %v2656, %v2768
    %2770 = vmatmul.f32.gmra.mxu0 %v2382
    %v2771 = vpop.f32.mrf.mxu0
    %v2772 = vadd.f32 %v2659, %v2771
    %2773 = vmatmul.f32.gmra.mxu0 %v2384
    %v2774 = vpop.f32.mrf.mxu0
    %v2775 = vadd.f32 %v2662, %v2774
    %2776 = vmatmul.f32.gmra.mxu0 %v2386
    %v2777 = vpop.f32.mrf.mxu0
    %v2778 = vadd.f32 %v2665, %v2777
    %2779 = vmatmul.f32.gmra.mxu0 %v2388
    %v2780 = vpop.f32.mrf.mxu0
    %v2781 = vadd.f32 %v2668, %v2780
    %2782 = vmatmul.f32.gmra.mxu0 %v2390
    %v2783 = vpop.f32.mrf.mxu0
    %v2784 = vadd.f32 %v2671, %v2783
    %2785 = vmatmul.f32.gmra.mxu0 %v2392
    %v2786 = vpop.f32.mrf.mxu0
    %v2787 = vadd.f32 %v2674, %v2786
    %2788 = vmatmul.f32.gmra.mxu0 %v2394
    %v2789 = vpop.f32.mrf.mxu0
    %v2790 = vadd.f32 %v2677, %v2789
    %2791 = vmatmul.f32.gmra.mxu0 %v2396
    %v2792 = vpop.f32.mrf.mxu0
    %v2793 = vadd.f32 %v2680, %v2792
    %2794 = vmatmul.f32.gmra.mxu0 %v2398
    %v2795 = vpop.f32.mrf.mxu0
    %v2796 = vadd.f32 %v2683, %v2795
    %2797 = vmatmul.f32.gmra.mxu0 %v2400
    %v2798 = vpop.f32.mrf.mxu0
    %v2799 = vadd.f32 %v2686, %v2798
    %2800 = vmatmul.f32.gmra.mxu0 %v2402
    %v2801 = vpop.f32.mrf.mxu0
    %v2802 = vadd.f32 %v2689, %v2801
    %2803 = vmatmul.f32.gmra.mxu0 %v2404
    %v2804 = vpop.f32.mrf.mxu0
    %v2805 = vadd.f32 %v2692, %v2804
    %2806 = vmatmul.f32.gmra.mxu0 %v2406
    %v2807 = vpop.f32.mrf.mxu0
    %v2808 = vadd.f32 %v2695, %v2807
    %2809 = vmatmul.f32.gmra.mxu0 %v2408
    %v2810 = vpop.f32.mrf.mxu0
    %v2811 = vadd.f32 %v2698, %v2810
    %2812 = vmatmul.f32.gmra.mxu0 %v2410
    %v2813 = vpop.f32.mrf.mxu0
    %v2814 = vadd.f32 %v2701, %v2813
    %2815 = vmatmul.f32.gmra.mxu0 %v2412
    %v2816 = vpop.f32.mrf.mxu0
    %v2817 = vadd.f32 %v2704, %v2816
    %2818 = vmatmul.f32.gmra.mxu0 %v2414
    %v2819 = vpop.f32.mrf.mxu0
    %v2820 = vadd.f32 %v2707, %v2819
    %2821 = vmatmul.f32.gmra.mxu0 %v2416
    %v2822 = vpop.f32.mrf.mxu0
    %v2823 = vadd.f32 %v2710, %v2822
    %2824 = vmatmul.f32.gmra.mxu0 %v2418
    %v2825 = vpop.f32.mrf.mxu0
    %v2826 = vadd.f32 %v2713, %v2825
    %2827 = vmatmul.f32.gmra.mxu0 %v2420
    %v2828 = vpop.f32.mrf.mxu0
    %v2829 = vadd.f32 %v2716, %v2828
    %2830 = vmatmul.f32.gmra.mxu0 %v2422
    %v2831 = vpop.f32.mrf.mxu0
    %v2832 = vadd.f32 %v2719, %v2831
    %2833 = vmatmul.f32.gmra.mxu0 %v2424
    %v2834 = vpop.f32.mrf.mxu0
    %v2835 = vadd.f32 %v2722, %v2834
    %2836 = vmatmul.f32.gmra.mxu0 %v2426
    %v2837 = vpop.f32.mrf.mxu0
    %v2838 = vadd.f32 %v2725, %v2837
    %2839 = vmatmul.f32.gmra.mxu0 %v2428
    %v2840 = vpop.f32.mrf.mxu0
    %v2841 = vadd.f32 %v2728, %v2840
    %2842 = vmatmul.f32.gmra.mxu0 %v2430
    %v2843 = vpop.f32.mrf.mxu0
    %v2844 = vadd.f32 %v2731, %v2843
    %2845 = vmatmul.f32.gmra.mxu0 %v2432
    %v2846 = vpop.f32.mrf.mxu0
    %v2847 = vadd.f32 %v2734, %v2846
    %2848 = vmatmul.f32.gmra.mxu0 %v2434
    %v2849 = vpop.f32.mrf.mxu0
    %v2850 = vadd.f32 %v2737, %v2849
    %2851 = vmatmul.f32.gmra.mxu0 %v2436
    %v2852 = vpop.f32.mrf.mxu0
    %v2853 = vadd.f32 %v2740, %v2852
    %2854 = vmatmul.f32.gmra.mxu0 %v2438
    %v2855 = vpop.f32.mrf.mxu0
    %v2856 = vadd.f32 %v2743, %v2855
    %2857 = vdwg.mxu0
    %v2858 = vmax.f32 %v2763, 0.0
    %v2859 = vmax.f32 %v2766, 0.0
    %v2860 = vmax.f32 %v2769, 0.0
    %v2861 = vmax.f32 %v2772, 0.0
    %v2862 = vmax.f32 %v2775, 0.0
    %v2863 = vmax.f32 %v2778, 0.0
    %v2864 = vmax.f32 %v2781, 0.0
    %v2865 = vmax.f32 %v2784, 0.0
    %v2866 = vmax.f32 %v2787, 0.0
    %v2867 = vmax.f32 %v2790, 0.0
    %v2868 = vmax.f32 %v2793, 0.0
    %v2869 = vmax.f32 %v2796, 0.0
    %v2870 = vmax.f32 %v2799, 0.0
    %v2871 = vmax.f32 %v2802, 0.0
    %v2872 = vmax.f32 %v2805, 0.0
    %v2873 = vmax.f32 %v2808, 0.0
    %v2874 = vmax.f32 %v2811, 0.0
    %v2875 = vmax.f32 %v2814, 0.0
    %v2876 = vmax.f32 %v2817, 0.0
    %v2877 = vmax.f32 %v2820, 0.0
    %v2878 = vmax.f32 %v2823, 0.0
    %v2879 = vmax.f32 %v2826, 0.0
    %v2880 = vmax.f32 %v2829, 0.0
    %v2881 = vmax.f32 %v2832, 0.0
    %v2882 = vmax.f32 %v2835, 0.0
    %v2883 = vmax.f32 %v2838, 0.0
    %v2884 = vmax.f32 %v2841, 0.0
    %v2885 = vmax.f32 %v2844, 0.0
    %v2886 = vmax.f32 %v2847, 0.0
    %v2887 = vmax.f32 %v2850, 0.0
    %v2888 = vmax.f32 %v2853, 0.0
    %v2889 = vmax.f32 %v2856, 0.0
    %s2890 = scalar_lea.vmem [#allocation10], 2048
    %v2891 = vld [vmem:[%s2890] sm:$0xff]
    %v2892 = vld [vmem:[%s2890 + $0x8] sm:$0xff]
    %v2893 = vld [vmem:[%s2890 + $0x10] sm:$0xff]
    %v2894 = vld [vmem:[%s2890 + $0x18] sm:$0xff]
    %v2895 = vld [vmem:[%s2890 + $0x20] sm:$0xff]
    %v2896 = vld [vmem:[%s2890 + $0x28] sm:$0xff]
    %v2897 = vld [vmem:[%s2890 + $0x30] sm:$0xff]
    %v2898 = vld [vmem:[%s2890 + $0x38] sm:$0xff]
    %v2899 = vld [vmem:[%s2890 + $0x40] sm:$0xff]
    %v2900 = vld [vmem:[%s2890 + $0x48] sm:$0xff]
    %v2901 = vld [vmem:[%s2890 + $0x50] sm:$0xff]
    %v2902 = vld [vmem:[%s2890 + $0x58] sm:$0xff]
    %v2903 = vld [vmem:[%s2890 + $0x60] sm:$0xff]
    %v2904 = vld [vmem:[%s2890 + $0x68] sm:$0xff]
    %v2905 = vld [vmem:[%s2890 + $0x70] sm:$0xff]
    %v2906 = vld [vmem:[%s2890 + $0x78] sm:$0xff]
    %v2907 = vld [vmem:[%s2890 + $0x80] sm:$0xff]
    %v2908 = vld [vmem:[%s2890 + $0x88] sm:$0xff]
    %v2909 = vld [vmem:[%s2890 + $0x90] sm:$0xff]
    %v2910 = vld [vmem:[%s2890 + $0x98] sm:$0xff]
    %v2911 = vld [vmem:[%s2890 + $0xa0] sm:$0xff]
    %v2912 = vld [vmem:[%s2890 + $0xa8] sm:$0xff]
    %v2913 = vld [vmem:[%s2890 + $0xb0] sm:$0xff]
    %v2914 = vld [vmem:[%s2890 + $0xb8] sm:$0xff]
    %v2915 = vld [vmem:[%s2890 + $0xc0] sm:$0xff]
    %v2916 = vld [vmem:[%s2890 + $0xc8] sm:$0xff]
    %v2917 = vld [vmem:[%s2890 + $0xd0] sm:$0xff]
    %v2918 = vld [vmem:[%s2890 + $0xd8] sm:$0xff]
    %v2919 = vld [vmem:[%s2890 + $0xe0] sm:$0xff]
    %v2920 = vld [vmem:[%s2890 + $0xe8] sm:$0xff]
    %v2921 = vld [vmem:[%s2890 + $0xf0] sm:$0xff]
    %v2922 = vld [vmem:[%s2890 + $0xf8] sm:$0xff]
    %v2923 = vld [vmem:[%s2890 + $0x100] sm:$0xff]
    %v2924 = vld [vmem:[%s2890 + $0x108] sm:$0xff]
    %v2925 = vld [vmem:[%s2890 + $0x110] sm:$0xff]
    %v2926 = vld [vmem:[%s2890 + $0x118] sm:$0xff]
    %v2927 = vld [vmem:[%s2890 + $0x120] sm:$0xff]
    %v2928 = vld [vmem:[%s2890 + $0x128] sm:$0xff]
    %v2929 = vld [vmem:[%s2890 + $0x130] sm:$0xff]
    %v2930 = vld [vmem:[%s2890 + $0x138] sm:$0xff]
    %v2931 = vld [vmem:[%s2890 + $0x140] sm:$0xff]
    %v2932 = vld [vmem:[%s2890 + $0x148] sm:$0xff]
    %v2933 = vld [vmem:[%s2890 + $0x150] sm:$0xff]
    %v2934 = vld [vmem:[%s2890 + $0x158] sm:$0xff]
    %v2935 = vld [vmem:[%s2890 + $0x160] sm:$0xff]
    %v2936 = vld [vmem:[%s2890 + $0x168] sm:$0xff]
    %v2937 = vld [vmem:[%s2890 + $0x170] sm:$0xff]
    %v2938 = vld [vmem:[%s2890 + $0x178] sm:$0xff]
    %v2939 = vld [vmem:[%s2890 + $0x180] sm:$0xff]
    %v2940 = vld [vmem:[%s2890 + $0x188] sm:$0xff]
    %v2941 = vld [vmem:[%s2890 + $0x190] sm:$0xff]
    %v2942 = vld [vmem:[%s2890 + $0x198] sm:$0xff]
    %v2943 = vld [vmem:[%s2890 + $0x1a0] sm:$0xff]
    %v2944 = vld [vmem:[%s2890 + $0x1a8] sm:$0xff]
    %v2945 = vld [vmem:[%s2890 + $0x1b0] sm:$0xff]
    %v2946 = vld [vmem:[%s2890 + $0x1b8] sm:$0xff]
    %v2947 = vld [vmem:[%s2890 + $0x1c0] sm:$0xff]
    %v2948 = vld [vmem:[%s2890 + $0x1c8] sm:$0xff]
    %v2949 = vld [vmem:[%s2890 + $0x1d0] sm:$0xff]
    %v2950 = vld [vmem:[%s2890 + $0x1d8] sm:$0xff]
    %v2951 = vld [vmem:[%s2890 + $0x1e0] sm:$0xff]
    %v2952 = vld [vmem:[%s2890 + $0x1e8] sm:$0xff]
    %v2953 = vld [vmem:[%s2890 + $0x1f0] sm:$0xff]
    %v2954 = vld [vmem:[%s2890 + $0x1f8] sm:$0xff]
    %s2955 = scalar_lea.vmem %s8, 1024
    %v2956 = vld [vmem:[%s2955] sm:$0xff]
    %v2957 = vld [vmem:[%s2955 + $0x8] sm:$0xff]
    %v2958 = vld [vmem:[%s2955 + $0x10] sm:$0xff]
    %v2959 = vld [vmem:[%s2955 + $0x18] sm:$0xff]
    %v2960 = vld [vmem:[%s2955 + $0x20] sm:$0xff]
    %v2961 = vld [vmem:[%s2955 + $0x28] sm:$0xff]
    %v2962 = vld [vmem:[%s2955 + $0x30] sm:$0xff]
    %v2963 = vld [vmem:[%s2955 + $0x38] sm:$0xff]
    %v2964 = vld [vmem:[%s2955 + $0x40] sm:$0xff]
    %v2965 = vld [vmem:[%s2955 + $0x48] sm:$0xff]
    %v2966 = vld [vmem:[%s2955 + $0x50] sm:$0xff]
    %v2967 = vld [vmem:[%s2955 + $0x58] sm:$0xff]
    %v2968 = vld [vmem:[%s2955 + $0x60] sm:$0xff]
    %v2969 = vld [vmem:[%s2955 + $0x68] sm:$0xff]
    %v2970 = vld [vmem:[%s2955 + $0x70] sm:$0xff]
    %v2971 = vld [vmem:[%s2955 + $0x78] sm:$0xff]
    %v2972 = vld [vmem:[%s2955 + $0x80] sm:$0xff]
    %v2973 = vld [vmem:[%s2955 + $0x88] sm:$0xff]
    %v2974 = vld [vmem:[%s2955 + $0x90] sm:$0xff]
    %v2975 = vld [vmem:[%s2955 + $0x98] sm:$0xff]
    %v2976 = vld [vmem:[%s2955 + $0xa0] sm:$0xff]
    %v2977 = vld [vmem:[%s2955 + $0xa8] sm:$0xff]
    %v2978 = vld [vmem:[%s2955 + $0xb0] sm:$0xff]
    %v2979 = vld [vmem:[%s2955 + $0xb8] sm:$0xff]
    %v2980 = vld [vmem:[%s2955 + $0xc0] sm:$0xff]
    %v2981 = vld [vmem:[%s2955 + $0xc8] sm:$0xff]
    %v2982 = vld [vmem:[%s2955 + $0xd0] sm:$0xff]
    %v2983 = vld [vmem:[%s2955 + $0xd8] sm:$0xff]
    %v2984 = vld [vmem:[%s2955 + $0xe0] sm:$0xff]
    %v2985 = vld [vmem:[%s2955 + $0xe8] sm:$0xff]
    %v2986 = vld [vmem:[%s2955 + $0xf0] sm:$0xff]
    %v2987 = vld [vmem:[%s2955 + $0xf8] sm:$0xff]
    %2989 = vset.pattern.permute.xlu0 0
    %2990 = vperm.xlu0 %2989, %v2956
    %v2991 = vpop.permute.xlu0 %2990
    %2994 = vset.pattern.permute.xlu0 0
    %2995 = vperm.xlu0 %2994, %v2957
    %v2996 = vpop.permute.xlu0 %2995
    %2999 = vset.pattern.permute.xlu0 0
    %3000 = vperm.xlu0 %2999, %v2958
    %v3001 = vpop.permute.xlu0 %3000
    %3004 = vset.pattern.permute.xlu0 0
    %3005 = vperm.xlu0 %3004, %v2959
    %v3006 = vpop.permute.xlu0 %3005
    %3009 = vset.pattern.permute.xlu0 0
    %3010 = vperm.xlu0 %3009, %v2960
    %v3011 = vpop.permute.xlu0 %3010
    %3014 = vset.pattern.permute.xlu0 0
    %3015 = vperm.xlu0 %3014, %v2961
    %v3016 = vpop.permute.xlu0 %3015
    %3019 = vset.pattern.permute.xlu0 0
    %3020 = vperm.xlu0 %3019, %v2962
    %v3021 = vpop.permute.xlu0 %3020
    %3024 = vset.pattern.permute.xlu0 0
    %3025 = vperm.xlu0 %3024, %v2963
    %v3026 = vpop.permute.xlu0 %3025
    %3029 = vset.pattern.permute.xlu0 0
    %3030 = vperm.xlu0 %3029, %v2964
    %v3031 = vpop.permute.xlu0 %3030
    %3034 = vset.pattern.permute.xlu0 0
    %3035 = vperm.xlu0 %3034, %v2965
    %v3036 = vpop.permute.xlu0 %3035
    %3039 = vset.pattern.permute.xlu0 0
    %3040 = vperm.xlu0 %3039, %v2966
    %v3041 = vpop.permute.xlu0 %3040
    %3044 = vset.pattern.permute.xlu0 0
    %3045 = vperm.xlu0 %3044, %v2967
    %v3046 = vpop.permute.xlu0 %3045
    %3049 = vset.pattern.permute.xlu0 0
    %3050 = vperm.xlu0 %3049, %v2968
    %v3051 = vpop.permute.xlu0 %3050
    %3054 = vset.pattern.permute.xlu0 0
    %3055 = vperm.xlu0 %3054, %v2969
    %v3056 = vpop.permute.xlu0 %3055
    %3059 = vset.pattern.permute.xlu0 0
    %3060 = vperm.xlu0 %3059, %v2970
    %v3061 = vpop.permute.xlu0 %3060
    %3064 = vset.pattern.permute.xlu0 0
    %3065 = vperm.xlu0 %3064, %v2971
    %v3066 = vpop.permute.xlu0 %3065
    %3069 = vset.pattern.permute.xlu0 0
    %3070 = vperm.xlu0 %3069, %v2972
    %v3071 = vpop.permute.xlu0 %3070
    %3074 = vset.pattern.permute.xlu0 0
    %3075 = vperm.xlu0 %3074, %v2973
    %v3076 = vpop.permute.xlu0 %3075
    %3079 = vset.pattern.permute.xlu0 0
    %3080 = vperm.xlu0 %3079, %v2974
    %v3081 = vpop.permute.xlu0 %3080
    %3084 = vset.pattern.permute.xlu0 0
    %3085 = vperm.xlu0 %3084, %v2975
    %v3086 = vpop.permute.xlu0 %3085
    %3089 = vset.pattern.permute.xlu0 0
    %3090 = vperm.xlu0 %3089, %v2976
    %v3091 = vpop.permute.xlu0 %3090
    %3094 = vset.pattern.permute.xlu0 0
    %3095 = vperm.xlu0 %3094, %v2977
    %v3096 = vpop.permute.xlu0 %3095
    %3099 = vset.pattern.permute.xlu0 0
    %3100 = vperm.xlu0 %3099, %v2978
    %v3101 = vpop.permute.xlu0 %3100
    %3104 = vset.pattern.permute.xlu0 0
    %3105 = vperm.xlu0 %3104, %v2979
    %v3106 = vpop.permute.xlu0 %3105
    %3109 = vset.pattern.permute.xlu0 0
    %3110 = vperm.xlu0 %3109, %v2980
    %v3111 = vpop.permute.xlu0 %3110
    %3114 = vset.pattern.permute.xlu0 0
    %3115 = vperm.xlu0 %3114, %v2981
    %v3116 = vpop.permute.xlu0 %3115
    %3119 = vset.pattern.permute.xlu0 0
    %3120 = vperm.xlu0 %3119, %v2982
    %v3121 = vpop.permute.xlu0 %3120
    %3124 = vset.pattern.permute.xlu0 0
    %3125 = vperm.xlu0 %3124, %v2983
    %v3126 = vpop.permute.xlu0 %3125
    %3129 = vset.pattern.permute.xlu0 0
    %3130 = vperm.xlu0 %3129, %v2984
    %v3131 = vpop.permute.xlu0 %3130
    %3134 = vset.pattern.permute.xlu0 0
    %3135 = vperm.xlu0 %3134, %v2985
    %v3136 = vpop.permute.xlu0 %3135
    %3139 = vset.pattern.permute.xlu0 0
    %3140 = vperm.xlu0 %3139, %v2986
    %v3141 = vpop.permute.xlu0 %3140
    %3144 = vset.pattern.permute.xlu0 0
    %3145 = vperm.xlu0 %3144, %v2987
    %v3146 = vpop.permute.xlu0 %3145
    %3148 = vmatpush.msra.mxu0 %v2873
    %3149 = vmatpush.msra.mxu0 %v2872
    %3150 = vmatpush.msra.mxu0 %v2871
    %3151 = vmatpush.msra.mxu0 %v2870
    %3152 = vmatpush.msra.mxu0 %v2869
    %3153 = vmatpush.msra.mxu0 %v2868
    %3154 = vmatpush.msra.mxu0 %v2867
    %3155 = vmatpush.msra.mxu0 %v2866
    %3156 = vmatpush.msra.mxu0 %v2865
    %3157 = vmatpush.msra.mxu0 %v2864
    %3158 = vmatpush.msra.mxu0 %v2863
    %3159 = vmatpush.msra.mxu0 %v2862
    %3160 = vmatpush.msra.mxu0 %v2861
    %3161 = vmatpush.msra.mxu0 %v2860
    %3162 = vmatpush.msra.mxu0 %v2859
    %3163 = vmatpush.msra.mxu0 %v2858
    %3164 = vmatmul.f32.gmra.mxu0 %v2891
    %v3165 = vpop.f32.mrf.mxu0
    %v3166 = vadd.f32 %v2991, %v3165
    %3167 = vmatmul.f32.gmra.mxu0 %v2893
    %v3168 = vpop.f32.mrf.mxu0
    %v3169 = vadd.f32 %v2996, %v3168
    %3170 = vmatmul.f32.gmra.mxu0 %v2895
    %v3171 = vpop.f32.mrf.mxu0
    %v3172 = vadd.f32 %v3001, %v3171
    %3173 = vmatmul.f32.gmra.mxu0 %v2897
    %v3174 = vpop.f32.mrf.mxu0
    %v3175 = vadd.f32 %v3006, %v3174
    %3176 = vmatmul.f32.gmra.mxu0 %v2899
    %v3177 = vpop.f32.mrf.mxu0
    %v3178 = vadd.f32 %v3011, %v3177
    %3179 = vmatmul.f32.gmra.mxu0 %v2901
    %v3180 = vpop.f32.mrf.mxu0
    %v3181 = vadd.f32 %v3016, %v3180
    %3182 = vmatmul.f32.gmra.mxu0 %v2903
    %v3183 = vpop.f32.mrf.mxu0
    %v3184 = vadd.f32 %v3021, %v3183
    %3185 = vmatmul.f32.gmra.mxu0 %v2905
    %v3186 = vpop.f32.mrf.mxu0
    %v3187 = vadd.f32 %v3026, %v3186
    %3188 = vmatmul.f32.gmra.mxu0 %v2907
    %v3189 = vpop.f32.mrf.mxu0
    %v3190 = vadd.f32 %v3031, %v3189
    %3191 = vmatmul.f32.gmra.mxu0 %v2909
    %v3192 = vpop.f32.mrf.mxu0
    %v3193 = vadd.f32 %v3036, %v3192
    %3194 = vmatmul.f32.gmra.mxu0 %v2911
    %v3195 = vpop.f32.mrf.mxu0
    %v3196 = vadd.f32 %v3041, %v3195
    %3197 = vmatmul.f32.gmra.mxu0 %v2913
    %v3198 = vpop.f32.mrf.mxu0
    %v3199 = vadd.f32 %v3046, %v3198
    %3200 = vmatmul.f32.gmra.mxu0 %v2915
    %v3201 = vpop.f32.mrf.mxu0
    %v3202 = vadd.f32 %v3051, %v3201
    %3203 = vmatmul.f32.gmra.mxu0 %v2917
    %v3204 = vpop.f32.mrf.mxu0
    %v3205 = vadd.f32 %v3056, %v3204
    %3206 = vmatmul.f32.gmra.mxu0 %v2919
    %v3207 = vpop.f32.mrf.mxu0
    %v3208 = vadd.f32 %v3061, %v3207
    %3209 = vmatmul.f32.gmra.mxu0 %v2921
    %v3210 = vpop.f32.mrf.mxu0
    %v3211 = vadd.f32 %v3066, %v3210
    %3212 = vmatmul.f32.gmra.mxu0 %v2923
    %v3213 = vpop.f32.mrf.mxu0
    %v3214 = vadd.f32 %v3071, %v3213
    %3215 = vmatmul.f32.gmra.mxu0 %v2925
    %v3216 = vpop.f32.mrf.mxu0
    %v3217 = vadd.f32 %v3076, %v3216
    %3218 = vmatmul.f32.gmra.mxu0 %v2927
    %v3219 = vpop.f32.mrf.mxu0
    %v3220 = vadd.f32 %v3081, %v3219
    %3221 = vmatmul.f32.gmra.mxu0 %v2929
    %v3222 = vpop.f32.mrf.mxu0
    %v3223 = vadd.f32 %v3086, %v3222
    %3224 = vmatmul.f32.gmra.mxu0 %v2931
    %v3225 = vpop.f32.mrf.mxu0
    %v3226 = vadd.f32 %v3091, %v3225
    %3227 = vmatmul.f32.gmra.mxu0 %v2933
    %v3228 = vpop.f32.mrf.mxu0
    %v3229 = vadd.f32 %v3096, %v3228
    %3230 = vmatmul.f32.gmra.mxu0 %v2935
    %v3231 = vpop.f32.mrf.mxu0
    %v3232 = vadd.f32 %v3101, %v3231
    %3233 = vmatmul.f32.gmra.mxu0 %v2937
    %v3234 = vpop.f32.mrf.mxu0
    %v3235 = vadd.f32 %v3106, %v3234
    %3236 = vmatmul.f32.gmra.mxu0 %v2939
    %v3237 = vpop.f32.mrf.mxu0
    %v3238 = vadd.f32 %v3111, %v3237
    %3239 = vmatmul.f32.gmra.mxu0 %v2941
    %v3240 = vpop.f32.mrf.mxu0
    %v3241 = vadd.f32 %v3116, %v3240
    %3242 = vmatmul.f32.gmra.mxu0 %v2943
    %v3243 = vpop.f32.mrf.mxu0
    %v3244 = vadd.f32 %v3121, %v3243
    %3245 = vmatmul.f32.gmra.mxu0 %v2945
    %v3246 = vpop.f32.mrf.mxu0
    %v3247 = vadd.f32 %v3126, %v3246
    %3248 = vmatmul.f32.gmra.mxu0 %v2947
    %v3249 = vpop.f32.mrf.mxu0
    %v3250 = vadd.f32 %v3131, %v3249
    %3251 = vmatmul.f32.gmra.mxu0 %v2949
    %v3252 = vpop.f32.mrf.mxu0
    %v3253 = vadd.f32 %v3136, %v3252
    %3254 = vmatmul.f32.gmra.mxu0 %v2951
    %v3255 = vpop.f32.mrf.mxu0
    %v3256 = vadd.f32 %v3141, %v3255
    %3257 = vmatmul.f32.gmra.mxu0 %v2953
    %v3258 = vpop.f32.mrf.mxu0
    %v3259 = vadd.f32 %v3146, %v3258
    %3260 = vdwg.mxu0
    %3261 = vmatpush.msra.mxu0 %v2889
    %3262 = vmatpush.msra.mxu0 %v2888
    %3263 = vmatpush.msra.mxu0 %v2887
    %3264 = vmatpush.msra.mxu0 %v2886
    %3265 = vmatpush.msra.mxu0 %v2885
    %3266 = vmatpush.msra.mxu0 %v2884
    %3267 = vmatpush.msra.mxu0 %v2883
    %3268 = vmatpush.msra.mxu0 %v2882
    %3269 = vmatpush.msra.mxu0 %v2881
    %3270 = vmatpush.msra.mxu0 %v2880
    %3271 = vmatpush.msra.mxu0 %v2879
    %3272 = vmatpush.msra.mxu0 %v2878
    %3273 = vmatpush.msra.mxu0 %v2877
    %3274 = vmatpush.msra.mxu0 %v2876
    %3275 = vmatpush.msra.mxu0 %v2875
    %3276 = vmatpush.msra.mxu0 %v2874
    %3277 = vmatmul.f32.gmra.mxu0 %v2892
    %v3278 = vpop.f32.mrf.mxu0
    %v3279 = vadd.f32 %v3166, %v3278
    %3280 = vmatmul.f32.gmra.mxu0 %v2894
    %v3281 = vpop.f32.mrf.mxu0
    %v3282 = vadd.f32 %v3169, %v3281
    %3283 = vmatmul.f32.gmra.mxu0 %v2896
    %v3284 = vpop.f32.mrf.mxu0
    %v3285 = vadd.f32 %v3172, %v3284
    %3286 = vmatmul.f32.gmra.mxu0 %v2898
    %v3287 = vpop.f32.mrf.mxu0
    %v3288 = vadd.f32 %v3175, %v3287
    %3289 = vmatmul.f32.gmra.mxu0 %v2900
    %v3290 = vpop.f32.mrf.mxu0
    %v3291 = vadd.f32 %v3178, %v3290
    %3292 = vmatmul.f32.gmra.mxu0 %v2902
    %v3293 = vpop.f32.mrf.mxu0
    %v3294 = vadd.f32 %v3181, %v3293
    %3295 = vmatmul.f32.gmra.mxu0 %v2904
    %v3296 = vpop.f32.mrf.mxu0
    %v3297 = vadd.f32 %v3184, %v3296
    %3298 = vmatmul.f32.gmra.mxu0 %v2906
    %v3299 = vpop.f32.mrf.mxu0
    %v3300 = vadd.f32 %v3187, %v3299
    %3301 = vmatmul.f32.gmra.mxu0 %v2908
    %v3302 = vpop.f32.mrf.mxu0
    %v3303 = vadd.f32 %v3190, %v3302
    %3304 = vmatmul.f32.gmra.mxu0 %v2910
    %v3305 = vpop.f32.mrf.mxu0
    %v3306 = vadd.f32 %v3193, %v3305
    %3307 = vmatmul.f32.gmra.mxu0 %v2912
    %v3308 = vpop.f32.mrf.mxu0
    %v3309 = vadd.f32 %v3196, %v3308
    %3310 = vmatmul.f32.gmra.mxu0 %v2914
    %v3311 = vpop.f32.mrf.mxu0
    %v3312 = vadd.f32 %v3199, %v3311
    %3313 = vmatmul.f32.gmra.mxu0 %v2916
    %v3314 = vpop.f32.mrf.mxu0
    %v3315 = vadd.f32 %v3202, %v3314
    %3316 = vmatmul.f32.gmra.mxu0 %v2918
    %v3317 = vpop.f32.mrf.mxu0
    %v3318 = vadd.f32 %v3205, %v3317
    %3319 = vmatmul.f32.gmra.mxu0 %v2920
    %v3320 = vpop.f32.mrf.mxu0
    %v3321 = vadd.f32 %v3208, %v3320
    %3322 = vmatmul.f32.gmra.mxu0 %v2922
    %v3323 = vpop.f32.mrf.mxu0
    %v3324 = vadd.f32 %v3211, %v3323
    %3325 = vmatmul.f32.gmra.mxu0 %v2924
    %v3326 = vpop.f32.mrf.mxu0
    %v3327 = vadd.f32 %v3214, %v3326
    %3328 = vmatmul.f32.gmra.mxu0 %v2926
    %v3329 = vpop.f32.mrf.mxu0
    %v3330 = vadd.f32 %v3217, %v3329
    %3331 = vmatmul.f32.gmra.mxu0 %v2928
    %v3332 = vpop.f32.mrf.mxu0
    %v3333 = vadd.f32 %v3220, %v3332
    %3334 = vmatmul.f32.gmra.mxu0 %v2930
    %v3335 = vpop.f32.mrf.mxu0
    %v3336 = vadd.f32 %v3223, %v3335
    %3337 = vmatmul.f32.gmra.mxu0 %v2932
    %v3338 = vpop.f32.mrf.mxu0
    %v3339 = vadd.f32 %v3226, %v3338
    %3340 = vmatmul.f32.gmra.mxu0 %v2934
    %v3341 = vpop.f32.mrf.mxu0
    %v3342 = vadd.f32 %v3229, %v3341
    %3343 = vmatmul.f32.gmra.mxu0 %v2936
    %v3344 = vpop.f32.mrf.mxu0
    %v3345 = vadd.f32 %v3232, %v3344
    %3346 = vmatmul.f32.gmra.mxu0 %v2938
    %v3347 = vpop.f32.mrf.mxu0
    %v3348 = vadd.f32 %v3235, %v3347
    %3349 = vmatmul.f32.gmra.mxu0 %v2940
    %v3350 = vpop.f32.mrf.mxu0
    %v3351 = vadd.f32 %v3238, %v3350
    %3352 = vmatmul.f32.gmra.mxu0 %v2942
    %v3353 = vpop.f32.mrf.mxu0
    %v3354 = vadd.f32 %v3241, %v3353
    %3355 = vmatmul.f32.gmra.mxu0 %v2944
    %v3356 = vpop.f32.mrf.mxu0
    %v3357 = vadd.f32 %v3244, %v3356
    %3358 = vmatmul.f32.gmra.mxu0 %v2946
    %v3359 = vpop.f32.mrf.mxu0
    %v3360 = vadd.f32 %v3247, %v3359
    %3361 = vmatmul.f32.gmra.mxu0 %v2948
    %v3362 = vpop.f32.mrf.mxu0
    %v3363 = vadd.f32 %v3250, %v3362
    %3364 = vmatmul.f32.gmra.mxu0 %v2950
    %v3365 = vpop.f32.mrf.mxu0
    %v3366 = vadd.f32 %v3253, %v3365
    %3367 = vmatmul.f32.gmra.mxu0 %v2952
    %v3368 = vpop.f32.mrf.mxu0
    %v3369 = vadd.f32 %v3256, %v3368
    %3370 = vmatmul.f32.gmra.mxu0 %v2954
    %v3371 = vpop.f32.mrf.mxu0
    %v3372 = vadd.f32 %v3259, %v3371
    %3373 = vdwg.mxu0
    %v3374 = vld [vmem:[#allocation11] sm:$0xff]
    %v3375 = vld [vmem:[#allocation11 + $0x8] sm:$0xff]
    %v3376 = vld [vmem:[#allocation11 + $0x10] sm:$0xff]
    %v3377 = vld [vmem:[#allocation11 + $0x18] sm:$0xff]
    %v3378 = vld [vmem:[#allocation11 + $0x20] sm:$0xff]
    %v3379 = vld [vmem:[#allocation11 + $0x28] sm:$0xff]
    %v3380 = vld [vmem:[#allocation11 + $0x30] sm:$0xff]
    %v3381 = vld [vmem:[#allocation11 + $0x38] sm:$0xff]
    %v3382 = vld [vmem:[#allocation11 + $0x40] sm:$0xff]
    %v3383 = vld [vmem:[#allocation11 + $0x48] sm:$0xff]
    %v3384 = vld [vmem:[#allocation11 + $0x50] sm:$0xff]
    %v3385 = vld [vmem:[#allocation11 + $0x58] sm:$0xff]
    %v3386 = vld [vmem:[#allocation11 + $0x60] sm:$0xff]
    %v3387 = vld [vmem:[#allocation11 + $0x68] sm:$0xff]
    %v3388 = vld [vmem:[#allocation11 + $0x70] sm:$0xff]
    %v3389 = vld [vmem:[#allocation11 + $0x78] sm:$0xff]
    %v3390 = vld [vmem:[#allocation11 + $0x80] sm:$0xff]
    %v3391 = vld [vmem:[#allocation11 + $0x88] sm:$0xff]
    %v3392 = vld [vmem:[#allocation11 + $0x90] sm:$0xff]
    %v3393 = vld [vmem:[#allocation11 + $0x98] sm:$0xff]
    %v3394 = vld [vmem:[#allocation11 + $0xa0] sm:$0xff]
    %v3395 = vld [vmem:[#allocation11 + $0xa8] sm:$0xff]
    %v3396 = vld [vmem:[#allocation11 + $0xb0] sm:$0xff]
    %v3397 = vld [vmem:[#allocation11 + $0xb8] sm:$0xff]
    %v3398 = vld [vmem:[#allocation11 + $0xc0] sm:$0xff]
    %v3399 = vld [vmem:[#allocation11 + $0xc8] sm:$0xff]
    %v3400 = vld [vmem:[#allocation11 + $0xd0] sm:$0xff]
    %v3401 = vld [vmem:[#allocation11 + $0xd8] sm:$0xff]
    %v3402 = vld [vmem:[#allocation11 + $0xe0] sm:$0xff]
    %v3403 = vld [vmem:[#allocation11 + $0xe8] sm:$0xff]
    %v3404 = vld [vmem:[#allocation11 + $0xf0] sm:$0xff]
    %v3405 = vld [vmem:[#allocation11 + $0xf8] sm:$0xff]
    %3406 = vmatpush.msra.mxu0 %v3324
    %3407 = vmatpush.msra.mxu0 %v3321
    %3408 = vmatpush.msra.mxu0 %v3318
    %3409 = vmatpush.msra.mxu0 %v3315
    %3410 = vmatpush.msra.mxu0 %v3312
    %3411 = vmatpush.msra.mxu0 %v3309
    %3412 = vmatpush.msra.mxu0 %v3306
    %3413 = vmatpush.msra.mxu0 %v3303
    %3414 = vmatpush.msra.mxu0 %v3300
    %3415 = vmatpush.msra.mxu0 %v3297
    %3416 = vmatpush.msra.mxu0 %v3294
    %3417 = vmatpush.msra.mxu0 %v3291
    %3418 = vmatpush.msra.mxu0 %v3288
    %3419 = vmatpush.msra.mxu0 %v3285
    %3420 = vmatpush.msra.mxu0 %v3282
    %3421 = vmatpush.msra.mxu0 %v3279
    %3422 = vmatmul.f32.gmra.mxu0 %v3374
    %v3423 = vpop.f32.mrf.mxu0
    %v3424 = vadd.f32 0.0, %v3423
    %3425 = vmatmul.f32.gmra.mxu0 %v3376
    %v3426 = vpop.f32.mrf.mxu0
    %v3427 = vadd.f32 0.0, %v3426
    %3428 = vmatmul.f32.gmra.mxu0 %v3378
    %v3429 = vpop.f32.mrf.mxu0
    %v3430 = vadd.f32 0.0, %v3429
    %3431 = vmatmul.f32.gmra.mxu0 %v3380
    %v3432 = vpop.f32.mrf.mxu0
    %v3433 = vadd.f32 0.0, %v3432
    %3434 = vmatmul.f32.gmra.mxu0 %v3382
    %v3435 = vpop.f32.mrf.mxu0
    %v3436 = vadd.f32 0.0, %v3435
    %3437 = vmatmul.f32.gmra.mxu0 %v3384
    %v3438 = vpop.f32.mrf.mxu0
    %v3439 = vadd.f32 0.0, %v3438
    %3440 = vmatmul.f32.gmra.mxu0 %v3386
    %v3441 = vpop.f32.mrf.mxu0
    %v3442 = vadd.f32 0.0, %v3441
    %3443 = vmatmul.f32.gmra.mxu0 %v3388
    %v3444 = vpop.f32.mrf.mxu0
    %v3445 = vadd.f32 0.0, %v3444
    %3446 = vmatmul.f32.gmra.mxu0 %v3390
    %v3447 = vpop.f32.mrf.mxu0
    %v3448 = vadd.f32 0.0, %v3447
    %3449 = vmatmul.f32.gmra.mxu0 %v3392
    %v3450 = vpop.f32.mrf.mxu0
    %v3451 = vadd.f32 0.0, %v3450
    %3452 = vmatmul.f32.gmra.mxu0 %v3394
    %v3453 = vpop.f32.mrf.mxu0
    %v3454 = vadd.f32 0.0, %v3453
    %3455 = vmatmul.f32.gmra.mxu0 %v3396
    %v3456 = vpop.f32.mrf.mxu0
    %v3457 = vadd.f32 0.0, %v3456
    %3458 = vmatmul.f32.gmra.mxu0 %v3398
    %v3459 = vpop.f32.mrf.mxu0
    %v3460 = vadd.f32 0.0, %v3459
    %3461 = vmatmul.f32.gmra.mxu0 %v3400
    %v3462 = vpop.f32.mrf.mxu0
    %v3463 = vadd.f32 0.0, %v3462
    %3464 = vmatmul.f32.gmra.mxu0 %v3402
    %v3465 = vpop.f32.mrf.mxu0
    %v3466 = vadd.f32 0.0, %v3465
    %3467 = vmatmul.f32.gmra.mxu0 %v3404
    %v3468 = vpop.f32.mrf.mxu0
    %v3469 = vadd.f32 0.0, %v3468
    %3470 = vdwg.mxu0
    %3471 = vmatpush.msra.mxu0 %v3372
    %3472 = vmatpush.msra.mxu0 %v3369
    %3473 = vmatpush.msra.mxu0 %v3366
    %3474 = vmatpush.msra.mxu0 %v3363
    %3475 = vmatpush.msra.mxu0 %v3360
    %3476 = vmatpush.msra.mxu0 %v3357
    %3477 = vmatpush.msra.mxu0 %v3354
    %3478 = vmatpush.msra.mxu0 %v3351
    %3479 = vmatpush.msra.mxu0 %v3348
    %3480 = vmatpush.msra.mxu0 %v3345
    %3481 = vmatpush.msra.mxu0 %v3342
    %3482 = vmatpush.msra.mxu0 %v3339
    %3483 = vmatpush.msra.mxu0 %v3336
    %3484 = vmatpush.msra.mxu0 %v3333
    %3485 = vmatpush.msra.mxu0 %v3330
    %3486 = vmatpush.msra.mxu0 %v3327
    %3487 = vmatmul.f32.gmra.mxu0 %v3375
    %v3488 = vpop.f32.mrf.mxu0
    %v3489 = vadd.f32 %v3424, %v3488
    %3490 = vmatmul.f32.gmra.mxu0 %v3377
    %v3491 = vpop.f32.mrf.mxu0
    %v3492 = vadd.f32 %v3427, %v3491
    %3493 = vmatmul.f32.gmra.mxu0 %v3379
    %v3494 = vpop.f32.mrf.mxu0
    %v3495 = vadd.f32 %v3430, %v3494
    %3496 = vmatmul.f32.gmra.mxu0 %v3381
    %v3497 = vpop.f32.mrf.mxu0
    %v3498 = vadd.f32 %v3433, %v3497
    %3499 = vmatmul.f32.gmra.mxu0 %v3383
    %v3500 = vpop.f32.mrf.mxu0
    %v3501 = vadd.f32 %v3436, %v3500
    %3502 = vmatmul.f32.gmra.mxu0 %v3385
    %v3503 = vpop.f32.mrf.mxu0
    %v3504 = vadd.f32 %v3439, %v3503
    %3505 = vmatmul.f32.gmra.mxu0 %v3387
    %v3506 = vpop.f32.mrf.mxu0
    %v3507 = vadd.f32 %v3442, %v3506
    %3508 = vmatmul.f32.gmra.mxu0 %v3389
    %v3509 = vpop.f32.mrf.mxu0
    %v3510 = vadd.f32 %v3445, %v3509
    %3511 = vmatmul.f32.gmra.mxu0 %v3391
    %v3512 = vpop.f32.mrf.mxu0
    %v3513 = vadd.f32 %v3448, %v3512
    %3514 = vmatmul.f32.gmra.mxu0 %v3393
    %v3515 = vpop.f32.mrf.mxu0
    %v3516 = vadd.f32 %v3451, %v3515
    %3517 = vmatmul.f32.gmra.mxu0 %v3395
    %v3518 = vpop.f32.mrf.mxu0
    %v3519 = vadd.f32 %v3454, %v3518
    %3520 = vmatmul.f32.gmra.mxu0 %v3397
    %v3521 = vpop.f32.mrf.mxu0
    %v3522 = vadd.f32 %v3457, %v3521
    %3523 = vmatmul.f32.gmra.mxu0 %v3399
    %v3524 = vpop.f32.mrf.mxu0
    %v3525 = vadd.f32 %v3460, %v3524
    %3526 = vmatmul.f32.gmra.mxu0 %v3401
    %v3527 = vpop.f32.mrf.mxu0
    %v3528 = vadd.f32 %v3463, %v3527
    %3529 = vmatmul.f32.gmra.mxu0 %v3403
    %v3530 = vpop.f32.mrf.mxu0
    %v3531 = vadd.f32 %v3466, %v3530
    %3532 = vmatmul.f32.gmra.mxu0 %v3405
    %v3533 = vpop.f32.mrf.mxu0
    %v3534 = vadd.f32 %v3469, %v3533
    %3535 = vdwg.mxu0
    %v3536 = vld [vmem:[#allocation8] sm:$0xff]
    %v3537 = vld [vmem:[#allocation8 + $0x8] sm:$0xff]
    %v3538 = vld [vmem:[#allocation5] sm:$0x1]
    %v3539 = vld [vmem:[%s10] sm:$0xff]
    %v3540 = vld [vmem:[%s10 + $0x8] sm:$0xff]
    %v3541 = vld [vmem:[%s10 + $0x10] sm:$0xff]
    %v3542 = vld [vmem:[%s10 + $0x18] sm:$0xff]
    %v3543 = vld [vmem:[%s10 + $0x20] sm:$0xff]
    %v3544 = vld [vmem:[%s10 + $0x28] sm:$0xff]
    %v3545 = vld [vmem:[%s10 + $0x30] sm:$0xff]
    %v3546 = vld [vmem:[%s10 + $0x38] sm:$0xff]
    %v3547 = vld [vmem:[%s10 + $0x40] sm:$0xff]
    %v3548 = vld [vmem:[%s10 + $0x48] sm:$0xff]
    %v3549 = vld [vmem:[%s10 + $0x50] sm:$0xff]
    %v3550 = vld [vmem:[%s10 + $0x58] sm:$0xff]
    %v3551 = vld [vmem:[%s10 + $0x60] sm:$0xff]
    %v3552 = vld [vmem:[%s10 + $0x68] sm:$0xff]
    %v3553 = vld [vmem:[%s10 + $0x70] sm:$0xff]
    %v3554 = vld [vmem:[%s10 + $0x78] sm:$0xff]
    %3556 = vset.pattern.permute.xlu0 0
    %3557 = vperm.xlu0 %3556, %v3539
    %v3558 = vpop.permute.xlu0 %3557
    %3561 = vset.pattern.permute.xlu0 0
    %3562 = vperm.xlu0 %3561, %v3540
    %v3563 = vpop.permute.xlu0 %3562
    %3566 = vset.pattern.permute.xlu0 0
    %3567 = vperm.xlu0 %3566, %v3541
    %v3568 = vpop.permute.xlu0 %3567
    %3571 = vset.pattern.permute.xlu0 0
    %3572 = vperm.xlu0 %3571, %v3542
    %v3573 = vpop.permute.xlu0 %3572
    %3576 = vset.pattern.permute.xlu0 0
    %3577 = vperm.xlu0 %3576, %v3543
    %v3578 = vpop.permute.xlu0 %3577
    %3581 = vset.pattern.permute.xlu0 0
    %3582 = vperm.xlu0 %3581, %v3544
    %v3583 = vpop.permute.xlu0 %3582
    %3586 = vset.pattern.permute.xlu0 0
    %3587 = vperm.xlu0 %3586, %v3545
    %v3588 = vpop.permute.xlu0 %3587
    %3591 = vset.pattern.permute.xlu0 0
    %3592 = vperm.xlu0 %3591, %v3546
    %v3593 = vpop.permute.xlu0 %3592
    %3596 = vset.pattern.permute.xlu0 0
    %3597 = vperm.xlu0 %3596, %v3547
    %v3598 = vpop.permute.xlu0 %3597
    %3601 = vset.pattern.permute.xlu0 0
    %3602 = vperm.xlu0 %3601, %v3548
    %v3603 = vpop.permute.xlu0 %3602
    %3606 = vset.pattern.permute.xlu0 0
    %3607 = vperm.xlu0 %3606, %v3549
    %v3608 = vpop.permute.xlu0 %3607
    %3611 = vset.pattern.permute.xlu0 0
    %3612 = vperm.xlu0 %3611, %v3550
    %v3613 = vpop.permute.xlu0 %3612
    %3616 = vset.pattern.permute.xlu0 0
    %3617 = vperm.xlu0 %3616, %v3551
    %v3618 = vpop.permute.xlu0 %3617
    %3621 = vset.pattern.permute.xlu0 0
    %3622 = vperm.xlu0 %3621, %v3552
    %v3623 = vpop.permute.xlu0 %3622
    %3626 = vset.pattern.permute.xlu0 0
    %3627 = vperm.xlu0 %3626, %v3553
    %v3628 = vpop.permute.xlu0 %3627
    %3631 = vset.pattern.permute.xlu0 0
    %3632 = vperm.xlu0 %3631, %v3554
    %v3633 = vpop.permute.xlu0 %3632
    %v3636 = vperm.slane %v3538, 0
    %v3638 = vmul.f32 %v3558, %v3636
    %v3639 = vmul.f32 %v3563, %v3636
    %v3640 = vmul.f32 %v3568, %v3636
    %v3641 = vmul.f32 %v3573, %v3636
    %v3642 = vmul.f32 %v3578, %v3636
    %v3643 = vmul.f32 %v3583, %v3636
    %v3644 = vmul.f32 %v3588, %v3636
    %v3645 = vmul.f32 %v3593, %v3636
    %v3646 = vmul.f32 %v3598, %v3636
    %v3647 = vmul.f32 %v3603, %v3636
    %v3648 = vmul.f32 %v3608, %v3636
    %v3649 = vmul.f32 %v3613, %v3636
    %v3650 = vmul.f32 %v3618, %v3636
    %v3651 = vmul.f32 %v3623, %v3636
    %v3652 = vmul.f32 %v3628, %v3636
    %v3653 = vmul.f32 %v3633, %v3636
    %vm3654 = vcmask 130048
    %v3656 = vsel %vm3654, %v3489, 0
    %v3659 = vsel %vm3654, %v3492, 0
    %v3662 = vsel %vm3654, %v3495, 0
    %v3665 = vsel %vm3654, %v3498, 0
    %v3668 = vsel %vm3654, %v3501, 0
    %v3671 = vsel %vm3654, %v3504, 0
    %v3674 = vsel %vm3654, %v3507, 0
    %v3677 = vsel %vm3654, %v3510, 0
    %v3680 = vsel %vm3654, %v3513, 0
    %v3683 = vsel %vm3654, %v3516, 0
    %v3686 = vsel %vm3654, %v3519, 0
    %v3689 = vsel %vm3654, %v3522, 0
    %v3692 = vsel %vm3654, %v3525, 0
    %v3695 = vsel %vm3654, %v3528, 0
    %v3698 = vsel %vm3654, %v3531, 0
    %v3701 = vsel %vm3654, %v3534, 0
    %3703 = vmatpush.msra.mxu0 0.0
    %3704 = vmatpush.msra.mxu0 0.0
    %3705 = vmatpush.msra.mxu0 0.0
    %3706 = vmatpush.msra.mxu0 0.0
    %3707 = vmatpush.msra.mxu0 0.0
    %3708 = vmatpush.msra.mxu0 0.0
    %3709 = vmatpush.msra.mxu0 0.0
    %3710 = vmatpush.msra.mxu0 0.0
    %3711 = vmatpush.msra.mxu0 0.0
    %3712 = vmatpush.msra.mxu0 0.0
    %3713 = vmatpush.msra.mxu0 0.0
    %3714 = vmatpush.msra.mxu0 0.0
    %3715 = vmatpush.msra.mxu0 0.0
    %3716 = vmatpush.msra.mxu0 0.0
    %3717 = vmatpush.msra.mxu0 %v3537
    %3718 = vmatpush.msra.mxu0 %v3536
    %3719 = vmatmul.f32.gmra.mxu0 %v3656
    %v3720 = vpop.f32.mrf.mxu0
    %v3721 = vadd.f32 %v3638, %v3720
    %3722 = vmatmul.f32.gmra.mxu0 %v3659
    %v3723 = vpop.f32.mrf.mxu0
    %v3724 = vadd.f32 %v3639, %v3723
    %3725 = vmatmul.f32.gmra.mxu0 %v3662
    %v3726 = vpop.f32.mrf.mxu0
    %v3727 = vadd.f32 %v3640, %v3726
    %3728 = vmatmul.f32.gmra.mxu0 %v3665
    %v3729 = vpop.f32.mrf.mxu0
    %v3730 = vadd.f32 %v3641, %v3729
    %3731 = vmatmul.f32.gmra.mxu0 %v3668
    %v3732 = vpop.f32.mrf.mxu0
    %v3733 = vadd.f32 %v3642, %v3732
    %3734 = vmatmul.f32.gmra.mxu0 %v3671
    %v3735 = vpop.f32.mrf.mxu0
    %v3736 = vadd.f32 %v3643, %v3735
    %3737 = vmatmul.f32.gmra.mxu0 %v3674
    %v3738 = vpop.f32.mrf.mxu0
    %v3739 = vadd.f32 %v3644, %v3738
    %3740 = vmatmul.f32.gmra.mxu0 %v3677
    %v3741 = vpop.f32.mrf.mxu0
    %v3742 = vadd.f32 %v3645, %v3741
    %3743 = vmatmul.f32.gmra.mxu0 %v3680
    %v3744 = vpop.f32.mrf.mxu0
    %v3745 = vadd.f32 %v3646, %v3744
    %3746 = vmatmul.f32.gmra.mxu0 %v3683
    %v3747 = vpop.f32.mrf.mxu0
    %v3748 = vadd.f32 %v3647, %v3747
    %3749 = vmatmul.f32.gmra.mxu0 %v3686
    %v3750 = vpop.f32.mrf.mxu0
    %v3751 = vadd.f32 %v3648, %v3750
    %3752 = vmatmul.f32.gmra.mxu0 %v3689
    %v3753 = vpop.f32.mrf.mxu0
    %v3754 = vadd.f32 %v3649, %v3753
    %3755 = vmatmul.f32.gmra.mxu0 %v3692
    %v3756 = vpop.f32.mrf.mxu0
    %v3757 = vadd.f32 %v3650, %v3756
    %3758 = vmatmul.f32.gmra.mxu0 %v3695
    %v3759 = vpop.f32.mrf.mxu0
    %v3760 = vadd.f32 %v3651, %v3759
    %3761 = vmatmul.f32.gmra.mxu0 %v3698
    %v3762 = vpop.f32.mrf.mxu0
    %v3763 = vadd.f32 %v3652, %v3762
    %3764 = vmatmul.f32.gmra.mxu0 %v3701
    %v3765 = vpop.f32.mrf.mxu0
    %v3766 = vadd.f32 %v3653, %v3765
    %3767 = vdwg.mxu0
    %v3768 = vld [vmem:[%s11] sm:$0xff]
    %v3769 = vld [vmem:[%s11 + $0x8] sm:$0xff]
    %v3770 = vld [vmem:[%s11 + $0x10] sm:$0xff]
    %v3771 = vld [vmem:[%s11 + $0x18] sm:$0xff]
    %v3772 = vld [vmem:[%s11 + $0x20] sm:$0xff]
    %v3773 = vld [vmem:[%s11 + $0x28] sm:$0xff]
    %v3774 = vld [vmem:[%s11 + $0x30] sm:$0xff]
    %v3775 = vld [vmem:[%s11 + $0x38] sm:$0xff]
    %v3776 = vld [vmem:[%s11 + $0x40] sm:$0xff]
    %v3777 = vld [vmem:[%s11 + $0x48] sm:$0xff]
    %v3778 = vld [vmem:[%s11 + $0x50] sm:$0xff]
    %v3779 = vld [vmem:[%s11 + $0x58] sm:$0xff]
    %v3780 = vld [vmem:[%s11 + $0x60] sm:$0xff]
    %v3781 = vld [vmem:[%s11 + $0x68] sm:$0xff]
    %v3782 = vld [vmem:[%s11 + $0x70] sm:$0xff]
    %v3783 = vld [vmem:[%s11 + $0x78] sm:$0xff]
    %3785 = vset.pattern.permute.xlu0 0
    %3786 = vperm.xlu0 %3785, %v3768
    %v3787 = vpop.permute.xlu0 %3786
    %3790 = vset.pattern.permute.xlu0 0
    %3791 = vperm.xlu0 %3790, %v3769
    %v3792 = vpop.permute.xlu0 %3791
    %3795 = vset.pattern.permute.xlu0 0
    %3796 = vperm.xlu0 %3795, %v3770
    %v3797 = vpop.permute.xlu0 %3796
    %3800 = vset.pattern.permute.xlu0 0
    %3801 = vperm.xlu0 %3800, %v3771
    %v3802 = vpop.permute.xlu0 %3801
    %3805 = vset.pattern.permute.xlu0 0
    %3806 = vperm.xlu0 %3805, %v3772
    %v3807 = vpop.permute.xlu0 %3806
    %3810 = vset.pattern.permute.xlu0 0
    %3811 = vperm.xlu0 %3810, %v3773
    %v3812 = vpop.permute.xlu0 %3811
    %3815 = vset.pattern.permute.xlu0 0
    %3816 = vperm.xlu0 %3815, %v3774
    %v3817 = vpop.permute.xlu0 %3816
    %3820 = vset.pattern.permute.xlu0 0
    %3821 = vperm.xlu0 %3820, %v3775
    %v3822 = vpop.permute.xlu0 %3821
    %3825 = vset.pattern.permute.xlu0 0
    %3826 = vperm.xlu0 %3825, %v3776
    %v3827 = vpop.permute.xlu0 %3826
    %3830 = vset.pattern.permute.xlu0 0
    %3831 = vperm.xlu0 %3830, %v3777
    %v3832 = vpop.permute.xlu0 %3831
    %3835 = vset.pattern.permute.xlu0 0
    %3836 = vperm.xlu0 %3835, %v3778
    %v3837 = vpop.permute.xlu0 %3836
    %3840 = vset.pattern.permute.xlu0 0
    %3841 = vperm.xlu0 %3840, %v3779
    %v3842 = vpop.permute.xlu0 %3841
    %3845 = vset.pattern.permute.xlu0 0
    %3846 = vperm.xlu0 %3845, %v3780
    %v3847 = vpop.permute.xlu0 %3846
    %3850 = vset.pattern.permute.xlu0 0
    %3851 = vperm.xlu0 %3850, %v3781
    %v3852 = vpop.permute.xlu0 %3851
    %3855 = vset.pattern.permute.xlu0 0
    %3856 = vperm.xlu0 %3855, %v3782
    %v3857 = vpop.permute.xlu0 %3856
    %3860 = vset.pattern.permute.xlu0 0
    %3861 = vperm.xlu0 %3860, %v3783
    %v3862 = vpop.permute.xlu0 %3861
    %v3864 = vadd.f32 %v3721, %v3787
    %v3865 = vadd.f32 %v3724, %v3792
    %v3866 = vadd.f32 %v3727, %v3797
    %v3867 = vadd.f32 %v3730, %v3802
    %v3868 = vadd.f32 %v3733, %v3807
    %v3869 = vadd.f32 %v3736, %v3812
    %v3870 = vadd.f32 %v3739, %v3817
    %v3871 = vadd.f32 %v3742, %v3822
    %v3872 = vadd.f32 %v3745, %v3827
    %v3873 = vadd.f32 %v3748, %v3832
    %v3874 = vadd.f32 %v3751, %v3837
    %v3875 = vadd.f32 %v3754, %v3842
    %v3876 = vadd.f32 %v3757, %v3847
    %v3877 = vadd.f32 %v3760, %v3852
    %v3878 = vadd.f32 %v3763, %v3857
    %v3879 = vadd.f32 %v3766, %v3862
    %v3880 = vmax.f32 %v3864, 0.0
    %v3881 = vmax.f32 %v3865, 0.0
    %v3882 = vmax.f32 %v3866, 0.0
    %v3883 = vmax.f32 %v3867, 0.0
    %v3884 = vmax.f32 %v3868, 0.0
    %v3885 = vmax.f32 %v3869, 0.0
    %v3886 = vmax.f32 %v3870, 0.0
    %v3887 = vmax.f32 %v3871, 0.0
    %v3888 = vmax.f32 %v3872, 0.0
    %v3889 = vmax.f32 %v3873, 0.0
    %v3890 = vmax.f32 %v3874, 0.0
    %v3891 = vmax.f32 %v3875, 0.0
    %v3892 = vmax.f32 %v3876, 0.0
    %v3893 = vmax.f32 %v3877, 0.0
    %v3894 = vmax.f32 %v3878, 0.0
    %v3895 = vmax.f32 %v3879, 0.0
    %v3896 = vld [vmem:[#allocation13] sm:$0xff]
    %v3897 = vld [vmem:[#allocation13 + $0x8] sm:$0xff]
    %v3898 = vld [vmem:[#allocation13 + $0x10] sm:$0xff]
    %v3899 = vld [vmem:[#allocation13 + $0x18] sm:$0xff]
    %v3900 = vld [vmem:[#allocation13 + $0x20] sm:$0xff]
    %v3901 = vld [vmem:[#allocation13 + $0x28] sm:$0xff]
    %v3902 = vld [vmem:[#allocation13 + $0x30] sm:$0xff]
    %v3903 = vld [vmem:[#allocation13 + $0x38] sm:$0xff]
    %v3904 = vld [vmem:[#allocation13 + $0x40] sm:$0xff]
    %v3905 = vld [vmem:[#allocation13 + $0x48] sm:$0xff]
    %v3906 = vld [vmem:[#allocation13 + $0x50] sm:$0xff]
    %v3907 = vld [vmem:[#allocation13 + $0x58] sm:$0xff]
    %v3908 = vld [vmem:[#allocation13 + $0x60] sm:$0xff]
    %v3909 = vld [vmem:[#allocation13 + $0x68] sm:$0xff]
    %v3910 = vld [vmem:[#allocation13 + $0x70] sm:$0xff]
    %v3911 = vld [vmem:[#allocation13 + $0x78] sm:$0xff]
    %v3912 = vld [vmem:[%s13] sm:$0xff]
    %v3913 = vld [vmem:[%s13 + $0x8] sm:$0xff]
    %v3914 = vld [vmem:[%s13 + $0x10] sm:$0xff]
    %v3915 = vld [vmem:[%s13 + $0x18] sm:$0xff]
    %v3916 = vld [vmem:[%s13 + $0x20] sm:$0xff]
    %v3917 = vld [vmem:[%s13 + $0x28] sm:$0xff]
    %v3918 = vld [vmem:[%s13 + $0x30] sm:$0xff]
    %v3919 = vld [vmem:[%s13 + $0x38] sm:$0xff]
    %v3920 = vld [vmem:[%s13 + $0x40] sm:$0xff]
    %v3921 = vld [vmem:[%s13 + $0x48] sm:$0xff]
    %v3922 = vld [vmem:[%s13 + $0x50] sm:$0xff]
    %v3923 = vld [vmem:[%s13 + $0x58] sm:$0xff]
    %v3924 = vld [vmem:[%s13 + $0x60] sm:$0xff]
    %v3925 = vld [vmem:[%s13 + $0x68] sm:$0xff]
    %v3926 = vld [vmem:[%s13 + $0x70] sm:$0xff]
    %v3927 = vld [vmem:[%s13 + $0x78] sm:$0xff]
    %3929 = vset.pattern.permute.xlu0 0
    %3930 = vperm.xlu0 %3929, %v3912
    %v3931 = vpop.permute.xlu0 %3930
    %3934 = vset.pattern.permute.xlu0 0
    %3935 = vperm.xlu0 %3934, %v3913
    %v3936 = vpop.permute.xlu0 %3935
    %3939 = vset.pattern.permute.xlu0 0
    %3940 = vperm.xlu0 %3939, %v3914
    %v3941 = vpop.permute.xlu0 %3940
    %3944 = vset.pattern.permute.xlu0 0
    %3945 = vperm.xlu0 %3944, %v3915
    %v3946 = vpop.permute.xlu0 %3945
    %3949 = vset.pattern.permute.xlu0 0
    %3950 = vperm.xlu0 %3949, %v3916
    %v3951 = vpop.permute.xlu0 %3950
    %3954 = vset.pattern.permute.xlu0 0
    %3955 = vperm.xlu0 %3954, %v3917
    %v3956 = vpop.permute.xlu0 %3955
    %3959 = vset.pattern.permute.xlu0 0
    %3960 = vperm.xlu0 %3959, %v3918
    %v3961 = vpop.permute.xlu0 %3960
    %3964 = vset.pattern.permute.xlu0 0
    %3965 = vperm.xlu0 %3964, %v3919
    %v3966 = vpop.permute.xlu0 %3965
    %3969 = vset.pattern.permute.xlu0 0
    %3970 = vperm.xlu0 %3969, %v3920
    %v3971 = vpop.permute.xlu0 %3970
    %3974 = vset.pattern.permute.xlu0 0
    %3975 = vperm.xlu0 %3974, %v3921
    %v3976 = vpop.permute.xlu0 %3975
    %3979 = vset.pattern.permute.xlu0 0
    %3980 = vperm.xlu0 %3979, %v3922
    %v3981 = vpop.permute.xlu0 %3980
    %3984 = vset.pattern.permute.xlu0 0
    %3985 = vperm.xlu0 %3984, %v3923
    %v3986 = vpop.permute.xlu0 %3985
    %3989 = vset.pattern.permute.xlu0 0
    %3990 = vperm.xlu0 %3989, %v3924
    %v3991 = vpop.permute.xlu0 %3990
    %3994 = vset.pattern.permute.xlu0 0
    %3995 = vperm.xlu0 %3994, %v3925
    %v3996 = vpop.permute.xlu0 %3995
    %3999 = vset.pattern.permute.xlu0 0
    %4000 = vperm.xlu0 %3999, %v3926
    %v4001 = vpop.permute.xlu0 %4000
    %4004 = vset.pattern.permute.xlu0 0
    %4005 = vperm.xlu0 %4004, %v3927
    %v4006 = vpop.permute.xlu0 %4005
    %4008 = vmatpush.msra.mxu0 %v3895
    %4009 = vmatpush.msra.mxu0 %v3894
    %4010 = vmatpush.msra.mxu0 %v3893
    %4011 = vmatpush.msra.mxu0 %v3892
    %4012 = vmatpush.msra.mxu0 %v3891
    %4013 = vmatpush.msra.mxu0 %v3890
    %4014 = vmatpush.msra.mxu0 %v3889
    %4015 = vmatpush.msra.mxu0 %v3888
    %4016 = vmatpush.msra.mxu0 %v3887
    %4017 = vmatpush.msra.mxu0 %v3886
    %4018 = vmatpush.msra.mxu0 %v3885
    %4019 = vmatpush.msra.mxu0 %v3884
    %4020 = vmatpush.msra.mxu0 %v3883
    %4021 = vmatpush.msra.mxu0 %v3882
    %4022 = vmatpush.msra.mxu0 %v3881
    %4023 = vmatpush.msra.mxu0 %v3880
    %4024 = vmatmul.f32.gmra.mxu0 %v3896
    %v4025 = vpop.f32.mrf.mxu0
    %v4026 = vadd.f32 %v3931, %v4025
    %4027 = vmatmul.f32.gmra.mxu0 %v3897
    %v4028 = vpop.f32.mrf.mxu0
    %v4029 = vadd.f32 %v3936, %v4028
    %4030 = vmatmul.f32.gmra.mxu0 %v3898
    %v4031 = vpop.f32.mrf.mxu0
    %v4032 = vadd.f32 %v3941, %v4031
    %4033 = vmatmul.f32.gmra.mxu0 %v3899
    %v4034 = vpop.f32.mrf.mxu0
    %v4035 = vadd.f32 %v3946, %v4034
    %4036 = vmatmul.f32.gmra.mxu0 %v3900
    %v4037 = vpop.f32.mrf.mxu0
    %v4038 = vadd.f32 %v3951, %v4037
    %4039 = vmatmul.f32.gmra.mxu0 %v3901
    %v4040 = vpop.f32.mrf.mxu0
    %v4041 = vadd.f32 %v3956, %v4040
    %4042 = vmatmul.f32.gmra.mxu0 %v3902
    %v4043 = vpop.f32.mrf.mxu0
    %v4044 = vadd.f32 %v3961, %v4043
    %4045 = vmatmul.f32.gmra.mxu0 %v3903
    %v4046 = vpop.f32.mrf.mxu0
    %v4047 = vadd.f32 %v3966, %v4046
    %4048 = vmatmul.f32.gmra.mxu0 %v3904
    %v4049 = vpop.f32.mrf.mxu0
    %v4050 = vadd.f32 %v3971, %v4049
    %4051 = vmatmul.f32.gmra.mxu0 %v3905
    %v4052 = vpop.f32.mrf.mxu0
    %v4053 = vadd.f32 %v3976, %v4052
    %4054 = vmatmul.f32.gmra.mxu0 %v3906
    %v4055 = vpop.f32.mrf.mxu0
    %v4056 = vadd.f32 %v3981, %v4055
    %4057 = vmatmul.f32.gmra.mxu0 %v3907
    %v4058 = vpop.f32.mrf.mxu0
    %v4059 = vadd.f32 %v3986, %v4058
    %4060 = vmatmul.f32.gmra.mxu0 %v3908
    %v4061 = vpop.f32.mrf.mxu0
    %v4062 = vadd.f32 %v3991, %v4061
    %4063 = vmatmul.f32.gmra.mxu0 %v3909
    %v4064 = vpop.f32.mrf.mxu0
    %v4065 = vadd.f32 %v3996, %v4064
    %4066 = vmatmul.f32.gmra.mxu0 %v3910
    %v4067 = vpop.f32.mrf.mxu0
    %v4068 = vadd.f32 %v4001, %v4067
    %4069 = vmatmul.f32.gmra.mxu0 %v3911
    %v4070 = vpop.f32.mrf.mxu0
    %v4071 = vadd.f32 %v4006, %v4070
    %4072 = vdwg.mxu0
    %v4073 = vmax.f32 %v4026, 0.0
    %v4074 = vmax.f32 %v4029, 0.0
    %v4075 = vmax.f32 %v4032, 0.0
    %v4076 = vmax.f32 %v4035, 0.0
    %v4077 = vmax.f32 %v4038, 0.0
    %v4078 = vmax.f32 %v4041, 0.0
    %v4079 = vmax.f32 %v4044, 0.0
    %v4080 = vmax.f32 %v4047, 0.0
    %v4081 = vmax.f32 %v4050, 0.0
    %v4082 = vmax.f32 %v4053, 0.0
    %v4083 = vmax.f32 %v4056, 0.0
    %v4084 = vmax.f32 %v4059, 0.0
    %v4085 = vmax.f32 %v4062, 0.0
    %v4086 = vmax.f32 %v4065, 0.0
    %v4087 = vmax.f32 %v4068, 0.0
    %v4088 = vmax.f32 %v4071, 0.0
    %v4089 = vld [vmem:[#allocation14] sm:$0x3]
    %v4090 = vld [vmem:[%s15] sm:$0x3]
    %4092 = vset.pattern.permute.xlu0 0
    %4093 = vperm.xlu0 %4092, %v4090
    %v4094 = vpop.permute.xlu0 %4093
    %4096 = vmatpush.msra.mxu0 %v4088
    %4097 = vmatpush.msra.mxu0 %v4087
    %4098 = vmatpush.msra.mxu0 %v4086
    %4099 = vmatpush.msra.mxu0 %v4085
    %4100 = vmatpush.msra.mxu0 %v4084
    %4101 = vmatpush.msra.mxu0 %v4083
    %4102 = vmatpush.msra.mxu0 %v4082
    %4103 = vmatpush.msra.mxu0 %v4081
    %4104 = vmatpush.msra.mxu0 %v4080
    %4105 = vmatpush.msra.mxu0 %v4079
    %4106 = vmatpush.msra.mxu0 %v4078
    %4107 = vmatpush.msra.mxu0 %v4077
    %4108 = vmatpush.msra.mxu0 %v4076
    %4109 = vmatpush.msra.mxu0 %v4075
    %4110 = vmatpush.msra.mxu0 %v4074
    %4111 = vmatpush.msra.mxu0 %v4073
    %4112 = vmatmul.f32.gmra.mxu0 %v4089
    %v4113 = vpop.f32.mrf.mxu0
    %v4114 = vadd.f32 %v4094, %v4113
    %4115 = vdwg.mxu0
    %v4116 = vmax.f32 %v4114, 0.0
    %vm4117 = vcmp.ne.f32.partialorder %v4114, %v4114
    %v4118 = vadd.f32 %v4114, 0.0
    %v4119 = vand.u32 2147483647, %v4114
    %v4120 = vsub.f32 0.0, %v4119
    %v4121 = vmul.f32 %v4120, 1.442695
    %v4122 = vpow.pop %v4121
    %v4123 = vadd.f32 %v4122, 1.0
    %v4124 = vlog2.pop %v4123
    %v4125 = vmul.f32 %v4124, 0.6931472
    %v4126 = vmul.f32 -0.5, %v4122
    %v4127 = vadd.f32 %v4126, 1.0
    %v4128 = vmul.f32 %v4127, %v4122
    %v4129 = vand.u32 2147483647, %v4122
    %vm4130 = vcmp.lt.f32.partialorder %v4129, 0.0004427343
    %v4131 = vsel %vm4130, %v4128, %v4125
    %v4132 = vadd.f32 %v4116, %v4131
    %v4133 = vsel %vm4117, %v4118, %v4132
    %v4134 = vmul.f32 %v4133, 0.9
    %v4135 = vadd.f32 %v4134, 0.1
    %v4136 = vrcp.pop %v4135
    %v4137 = vmul.f32 %v4135, %v4136
    %v4138 = vsub.f32 1.0, %v4137
    %v4139 = vmul.f32 %v4136, %v4138
    %v4140 = vadd.f32 %v4136, %v4139
    %vm4141 = vweird.f32 %v4135
    %vm4142 = vweird.f32 %v4136
    %vm4143 = vmor %vm4141, %vm4142
    %v4144 = vsel %vm4143, %v4136, %v4140
    %v4145 = vand.u32 2147483647, %v4135
    %vm4146 = vcmp.eq.f32.partialorder %v4145, 8.507059e+37
    %v4147 = vand.u32 %v4135, 2147483648
    %v4148 = vor.u32 1.1754944e-38, %v4147
    %v4149 = vsel %vm4146, %v4148, %v4144
    %v4150 = vld [vmem:[#allocation7] sm:$0x1]
    %v4151 = vsub.f32 %v4150, %v4114
    %4153 = vst [vmem:[#allocation1] sm:$0xff] %v4149
    %s4154 = scalar_lea.vmem [#allocation1], 1
    %v4155 = vld [vmem:[%s4154] ss:$9 sm:$0xff]
    %v4157 = vmul.f32 %v4151, %v4155
    %v4158 = vlog2.pop %v4135
    %v4159 = vmul.f32 %v4158, 0.6931472
    %v4160 = vsub.f32 -0.9189385, %v4159
    %v4161 = vmul.f32 %v4157, 0.5
    %v4162 = vmul.f32 %v4161, %v4157
    %v4164 = vperm.slane %v4162, 0
    %v4166 = vsub.f32 %v4160, %v4164
    %v4167 = vadd.f32 %v4166, 0.0
    %4168 = vst [vmem:[#allocation16 - $0x1] sm:$0x2] %v4167
    // Predicated region
    $region98: #{tpu_custom_call.1} parent=1 // pred_check
      _
    $region99: #{tpu_custom_call.1} parent=1 // pred_check_branch
      %4170 = sbr.rel (0) target = $region101
    $region100: #{tpu_custom_call.1} parent=1 // pred_region
      %4172 = vsyncadd [#allocation4], 0
      %s4174 = sshll.u32 [#allocation16], 4
      %s4175 = int_to_ptr.vmem [resolvable:$true] %s4174
      %s4176 = sshll.u32 %s16, 4
      %s4177 = int_to_ptr.hbm [resolvable:$true] %s4176
      %4179 = dma.vmem_to_hbm [thread:$0]  %s4175, 16, %s4177, [#allocation4]
    $region101: #{tpu_custom_call.1} parent=1 // pred_fallthru
      _
    // Predicated region
    $region102: #{tpu_custom_call.1} parent=1 // pred_check
      _
    $region103: #{tpu_custom_call.1} parent=1 // pred_check_branch
      %4181 = sbr.rel (0) target = $region105
    $region104: #{tpu_custom_call.1} parent=1 // pred_region
      %4183 = dma.done [#allocation4], 16
    $region105: #{tpu_custom_call.1} parent=1 // pred_fallthru
      _
    %4184 = vsyncpa [#allocation3], 1
    %4185 = vsyncpa [#allocation6], 1
    %4186 = vsyncpa [#allocation9], 1
    %4187 = vsyncpa [#allocation12], 1
    %4188 = vsyncpa [#allocation15], 1
    %4189 = vsyncpa [#allocation4], 1

</llo_original>
